<compile_context>
chip_gen: v7x
topology: tpu7x:2x2x1
jax: 0.10.0
libtpu: 0.0.40
codegen_flags: <defaults>
</compile_context>

<pallas_src>
import functools

import jax
import jax.numpy as jnp
from jax.experimental import pallas as pl
from jax.experimental.pallas import tpu as pltpu

EPS = 1e-5          # nn.BatchNorm2d default eps (training-mode batch stats)
EXPANSION = 4

# Safe across v5e/v6e (128 MiB VMEM) and v7x (64 MiB physical).
_VMEM_LIMIT = 48 * 1024 * 1024
# Rows per M-tile.  256 keeps the demo multi-tile (exercises the cross-tile
# BN reduction); bump towards 512-1024 for production ResNet101 shapes.
_TM_TARGET = 256


def _pick_tile(m, target=_TM_TARGET):
    """Largest power-of-two divisor of m that is <= target (>=8), else m."""
    t = target
    while t >= 8:
        if m % t == 0:
            return t
        t //= 2
    return m


def _compiler_params():
    return pltpu.CompilerParams(
        dimension_semantics=("parallel",),
        vmem_limit_bytes=_VMEM_LIMIT,
    )


# ----------------------------------------------------------------------------
# Kernel 1: fused 1x1 convolution(s) (pure channel matmul, bf16 -> f32 acc)
#           + per-tile BN partial statistics.  n_ops=2 fuses conv3 with the
#           1x1 projection shortcut so both share one grid / one launch.
# ----------------------------------------------------------------------------
def _conv1x1_stats_kernel(n_ops):
    def kernel(*refs):
        ins, outs = refs[:2 * n_ops], refs[2 * n_ops:]
        for i in range(n_ops):
            x_ref, w_ref = ins[2 * i], ins[2 * i + 1]
            o_ref, s_ref = outs[2 * i], outs[2 * i + 1]
            acc = jnp.dot(x_ref[...], w_ref[...],
                          preferred_element_type=jnp.float32)
            o_ref[...] = acc
            # per-tile partial sums for the (global, two-pass) batch-norm
            s_ref[0, 0:1, :] = jnp.sum(acc, axis=0, keepdims=True)
            s_ref[0, 1:2, :] = jnp.sum(acc * acc, axis=0, keepdims=True)
    return kernel


def conv1x1_stats(pairs, tm):
    """pairs: [(x (M, Cin) bf16, w (Cin, Cout) bf16), ...] sharing the same M.

    Returns (acc_0, stats_0, acc_1, stats_1, ...): acc_i is the f32 conv
    output (M, Cout_i); stats_i is (M // tm, 2, Cout_i) per-tile [sum, sumsq].
    """
    M = pairs[0][0].shape[0]
    nm = M // tm
    args, in_specs, out_shapes, out_specs = [], [], [], []
    flops, bytes_accessed = 0, 0
    for x, w in pairs:
        cin, cout = w.shape
        args += [x, w]
        in_specs += [
            pl.BlockSpec((tm, cin), lambda m: (m, 0)),
            pl.BlockSpec((cin, cout), lambda m: (0, 0)),
        ]
        out_shapes += [
            jax.ShapeDtypeStruct((M, cout), jnp.float32),
            jax.ShapeDtypeStruct((nm, 2, cout), jnp.float32),
        ]
        out_specs += [
            pl.BlockSpec((tm, cout), lambda m: (m, 0)),
            pl.BlockSpec((1, 2, cout), lambda m: (m, 0, 0)),
        ]
        flops += 2 * M * cin * cout
        bytes_accessed += (x.size * x.dtype.itemsize + w.size * w.dtype.itemsize
                           + 4 * M * cout + 4 * nm * 2 * cout)
    return pl.pallas_call(
        _conv1x1_stats_kernel(len(pairs)),
        out_shape=tuple(out_shapes),
        grid=(nm,),
        in_specs=in_specs,
        out_specs=tuple(out_specs),
        compiler_params=_compiler_params(),
        cost_estimate=pl.CostEstimate(
            flops=flops, transcendentals=0, bytes_accessed=bytes_accessed),
    )(*args)


# ----------------------------------------------------------------------------
# Kernel 2: 3x3 convolution.  The wrapper folds the 3 W-taps into the channel
# axis (no 9x im2col); inside the kernel the 3 H-taps are static row slices of
# the per-image resident block, each a single MXU matmul, summed in f32.
# BN partial statistics are emitted per image.
# ----------------------------------------------------------------------------
def _conv3x3_stats_kernel(ho, wo, stride):
    def kernel(x_ref, w_ref, o_ref, s_ref):
        # x_ref: (1, Hk, Wo, 3*Cin) bf16 ; w_ref: (3, 3*Cin, Cout) bf16
        # o_ref: (1, Ho*Wo, Cout) f32   ; s_ref: (1, 2, Cout) f32
        acc = None
        for ky in range(3):
            if stride == 1:
                win = x_ref[0, ky:ky + ho, :, :]
            else:
                win = x_ref[0, pl.ds(ky, ho, stride=stride), :, :]
            x2d = win.reshape(ho * wo, win.shape[-1])
            part = jnp.dot(x2d, w_ref[ky], preferred_element_type=jnp.float32)
            acc = part if acc is None else acc + part
        o_ref[0] = acc
        s_ref[0, 0:1, :] = jnp.sum(acc, axis=0, keepdims=True)
        s_ref[0, 1:2, :] = jnp.sum(acc * acc, axis=0, keepdims=True)
    return kernel


def conv3x3_stats(xw, w3taps, ho, wo, stride):
    """xw: (N, Hk, Wo, 3*Cin) bf16, w3taps: (3, 3*Cin, Cout) bf16."""
    n, hk, _, c3 = xw.shape
    cout = w3taps.shape[2]
    mimg = ho * wo
    flops = 2 * n * mimg * c3 * cout * 3
    bytes_accessed = (xw.size * 2 + w3taps.size * 2
                      + 4 * n * mimg * cout + 4 * n * 2 * cout)
    return pl.pallas_call(
        _conv3x3_stats_kernel(ho, wo, stride),
        out_shape=(jax.ShapeDtypeStruct((n, mimg, cout), jnp.float32),
                   jax.ShapeDtypeStruct((n, 2, cout), jnp.float32)),
        grid=(n,),
        in_specs=[
            pl.BlockSpec((1, hk, wo, c3), lambda i: (i, 0, 0, 0)),
            pl.BlockSpec((3, c3, cout), lambda i: (0, 0, 0)),
        ],
        out_specs=(
            pl.BlockSpec((1, mimg, cout), lambda i: (i, 0, 0)),
            pl.BlockSpec((1, 2, cout), lambda i: (i, 0, 0)),
        ),
        compiler_params=_compiler_params(),
        cost_estimate=pl.CostEstimate(
            flops=flops, transcendentals=0, bytes_accessed=bytes_accessed),
    )(xw, w3taps)


# ----------------------------------------------------------------------------
# Kernel 3: BatchNorm apply  y = x*scale + shift  [+ residual (raw or BN'd)]
#           [+ ReLU], M-tiled element-wise pass (f32 math, selectable out dtype)
# ----------------------------------------------------------------------------
def _bn_apply_kernel(relu, res_mode):
    def kernel(*refs):
        if res_mode == "bn":
            a_ref, sa_ref, ba_ref, r_ref, sr_ref, br_ref, o_ref = refs
        elif res_mode == "raw":
            a_ref, sa_ref, ba_ref, r_ref, o_ref = refs
        else:
            a_ref, sa_ref, ba_ref, o_ref = refs
        y = a_ref[...] * sa_ref[...] + ba_ref[...]
        if res_mode == "bn":
            y = y + (r_ref[...] * sr_ref[...] + br_ref[...])
        elif res_mode == "raw":
            y = y + r_ref[...]
        if relu:
            y = jnp.maximum(y, 0.0)
        o_ref[...] = y.astype(o_ref.dtype)
    return kernel


def bn_apply(acc, scale, shift, *, residual=None, res_scale=None,
             res_shift=None, relu, out_dtype, tm):
    M, c = acc.shape
    nm = M // tm
    args = [acc, scale.reshape(1, c).astype(jnp.float32),
            shift.reshape(1, c).astype(jnp.float32)]
    in_specs = [
        pl.BlockSpec((tm, c), lambda m: (m, 0)),
        pl.BlockSpec((1, c), lambda m: (0, 0)),
        pl.BlockSpec((1, c), lambda m: (0, 0)),
    ]
    res_mode = None
    if residual is not None:
        args.append(residual.astype(jnp.float32))   # residual add stays f32
        in_specs.append(pl.BlockSpec((tm, c), lambda m: (m, 0)))
        if res_scale is not None:
            res_mode = "bn"
            args += [res_scale.reshape(1, c).astype(jnp.float32),
                     res_shift.reshape(1, c).astype(jnp.float32)]
            in_specs += [pl.BlockSpec((1, c), lambda m: (0, 0)),
                         pl.BlockSpec((1, c), lambda m: (0, 0))]
        else:
            res_mode = "raw"
    bytes_accessed = (sum(a.size * a.dtype.itemsize for a in args)
                      + M * c * jnp.dtype(out_dtype).itemsize)
    return pl.pallas_call(
        _bn_apply_kernel(relu, res_mode),
        out_shape=jax.ShapeDtypeStruct((M, c), out_dtype),
        grid=(nm,),
        in_specs=in_specs,
        out_specs=pl.BlockSpec((tm, c), lambda m: (m, 0)),
        compiler_params=_compiler_params(),
        cost_estimate=pl.CostEstimate(
            flops=3 * M * c, transcendentals=0, bytes_accessed=bytes_accessed),
    )(*args)


def _bn_scale_shift(stats, m_total, gamma, beta):
    """stats: (num_tiles, 2, C) per-tile [sum, sumsq] -> global (scale, shift)."""
    s = jnp.sum(stats.astype(jnp.float32), axis=0)            # (2, C)
    mean = s[0] / m_total
    var = jnp.maximum(s[1] / m_total - mean * mean, 0.0)       # biased (training)
    scale = gamma * jax.lax.rsqrt(var + EPS)
    shift = beta - mean * scale
    return scale, shift


def _build_conv2_input(y, stride):
    """y: (N, H, W, P) bf16 -> (N, Hk, Wo, 3P): pad by 1, keep only the Hk
    rows the strided 3x3 conv touches, and fold the 3 W-taps into channels
    (kx-major).  ~3x the activation instead of the 9x full im2col."""
    n, h, w, p = y.shape
    ho = (h - 1) // stride + 1
    wo = (w - 1) // stride + 1
    hk = (ho - 1) * stride + 3
    xp = jnp.pad(y, ((0, 0), (1, 1), (1, 1), (0, 0)))[:, :hk]
    cols = [xp[:, :, kx:kx + (wo - 1) * stride + 1:stride, :] for kx in range(3)]
    return jnp.concatenate(cols, axis=-1)


# ----------------------------------------------------------------------------
# Bottleneck forward
# ----------------------------------------------------------------------------
def bottleneck_forward(x_nchw, params, stride=1):
    n, cin, h, w = x_nchw.shape
    planes = params["w1"].shape[1]
    out_planes = EXPANSION * planes
    ho = (h - 1) // stride + 1
    wo = (w - 1) // stride + 1
    m1, mo = n * h * w, n * ho * wo
    tm1, tmo = _pick_tile(m1), _pick_tile(mo)

    x_nhwc = jnp.transpose(x_nchw, (0, 2, 3, 1)).astype(jnp.float32)
    x_bf16 = x_nhwc.astype(jnp.bfloat16)

    # ---- conv1 (1x1) -> BN1 (two-pass) -> ReLU, bf16 activation out -------
    acc1, st1 = conv1x1_stats(
        [(x_bf16.reshape(m1, cin), params["w1"].astype(jnp.bfloat16))], tm=tm1)
    s1, b1 = _bn_scale_shift(st1, m1, params["g1"], params["b1"])
    out1 = bn_apply(acc1, s1, b1, relu=True, out_dtype=jnp.bfloat16, tm=tm1)

    # ---- conv2 (3x3, stride, pad=1) -> BN2 -> ReLU -------------------------
    xw = _build_conv2_input(out1.reshape(n, h, w, planes), stride)
    w2k = params["w2"].reshape(3, 3 * planes, planes).astype(jnp.bfloat16)
    acc2, st2 = conv3x3_stats(xw, w2k, ho, wo, stride)
    s2, b2 = _bn_scale_shift(st2, mo, params["g2"], params["b2"])
    out2 = bn_apply(acc2.reshape(mo, planes), s2, b2,
                    relu=True, out_dtype=jnp.bfloat16, tm=tmo)

    # ---- conv3 (1x1) [+ fused 1x1 projection shortcut] + BN + add + ReLU ---
    # TODO(synk): fold the stride-2 shortcut subsample into the kernel's
    # index_map instead of slicing in plain JAX.
    x_sub = x_nhwc if stride == 1 else x_nhwc[:, ::stride, ::stride, :]
    x_sub = x_sub.reshape(mo, cin)
    w3 = params["w3"].astype(jnp.bfloat16)

    if stride != 1 or cin != out_planes:
        acc3, st3, accsc, stsc = conv1x1_stats(
            [(out2, w3),
             (x_sub.astype(jnp.bfloat16), params["wsc"].astype(jnp.bfloat16))],
            tm=tmo)
        s3, b3 = _bn_scale_shift(st3, mo, params["g3"], params["b3"])
        ssc, bsc = _bn_scale_shift(stsc, mo, params["gsc"], params["bsc"])
        out = bn_apply(acc3, s3, b3, residual=accsc, res_scale=ssc,
                       res_shift=bsc, relu=True, out_dtype=jnp.float32, tm=tmo)
    else:
        acc3, st3 = conv1x1_stats([(out2, w3)], tm=tmo)
        s3, b3 = _bn_scale_shift(st3, mo, params["g3"], params["b3"])
        out = bn_apply(acc3, s3, b3, residual=x_sub, relu=True,
                       out_dtype=jnp.float32, tm=tmo)

    return jnp.transpose(out.reshape(n, ho, wo, out_planes), (0, 3, 1, 2))


# ----------------------------------------------------------------------------
# Deterministic parameter init (synthetic; shapes follow the nn.Module block)
# ----------------------------------------------------------------------------
def init_params(key, in_planes, planes):
    out_planes = EXPANSION * planes
    ks = jax.random.split(key, 12)
    n = jax.random.normal
    return {
        "w1": n(ks[0], (in_planes, planes), jnp.float32) * 0.3,
        "g1": 1.0 + 0.1 * n(ks[1], (planes,), jnp.float32),
        "b1": 0.1 * n(ks[2], (planes,), jnp.float32),
        "w2": n(ks[3], (9, planes, planes), jnp.float32) * 0.2,   # tap = ky*3+kx
        "g2": 1.0 + 0.1 * n(ks[4], (planes,), jnp.float32),
        "b2": 0.1 * n(ks[5], (planes,), jnp.float32),
        "w3": n(ks[6], (planes, out_planes), jnp.float32) * 0.3,
        "g3": 1.0 + 0.1 * n(ks[7], (out_planes,), jnp.float32),
        "b3": 0.1 * n(ks[8], (out_planes,), jnp.float32),
        "wsc": n(ks[9], (in_planes, out_planes), jnp.float32) * 0.3,
        "gsc": 1.0 + 0.1 * n(ks[10], (out_planes,), jnp.float32),
        "bsc": 0.1 * n(ks[11], (out_planes,), jnp.float32),
    }


# ----------------------------------------------------------------------------
# Pure-JAX f32 reference (mirrors the PyTorch bottleneck forward, training BN)
# ----------------------------------------------------------------------------
def reference_forward(x, params, stride=1):
    def conv(x, w_oihw, stride=1, pad=0):
        return jax.lax.conv_general_dilated(
            x, w_oihw, (stride, stride), [(pad, pad), (pad, pad)],
            dimension_numbers=("NCHW", "OIHW", "NCHW"))

    def bn(x, g, b):
        mean = jnp.mean(x, axis=(0, 2, 3), keepdims=True)
        var = jnp.mean(jnp.square(x - mean), axis=(0, 2, 3), keepdims=True)
        return (x - mean) * jax.lax.rsqrt(var + EPS) * g.reshape(1, -1, 1, 1) \
            + b.reshape(1, -1, 1, 1)

    planes = params["w1"].shape[1]
    out_planes = EXPANSION * planes
    w1 = params["w1"].T.reshape(planes, -1, 1, 1)
    w2 = params["w2"].reshape(3, 3, planes, planes).transpose(3, 2, 0, 1)
    w3 = params["w3"].T.reshape(out_planes, planes, 1, 1)

    out = jax.nn.relu(bn(conv(x, w1), params["g1"], params["b1"]))
    out = jax.nn.relu(bn(conv(out, w2, stride=stride, pad=1),
                         params["g2"], params["b2"]))
    out = bn(conv(out, w3), params["g3"], params["b3"])
    if stride != 1 or x.shape[1] != out_planes:
        wsc = params["wsc"].T.reshape(out_planes, -1, 1, 1)
        sc = bn(conv(x, wsc, stride=stride), params["gsc"], params["bsc"])
    else:
        sc = x
    return jax.nn.relu(out + sc)


if __name__ == "__main__":
    key = jax.random.PRNGKey(0)
    kx, kp = jax.random.split(key)

    N, in_planes, planes, H, W, stride = 2, 4, 4, 16, 16, 1
    x = jax.random.normal(kx, (N, in_planes, H, W), jnp.float32)
    params = init_params(kp, in_planes, planes)

    fwd = jax.jit(functools.partial(bottleneck_forward, stride=stride))
    out = jax.block_until_ready(fwd(x, params))

    ref = reference_forward(x, params, stride=stride)
    assert out.shape == (N, EXPANSION * planes, H // stride, W // stride), out.shape
    # bf16 MXU operands vs an all-f32 reference: expected max-abs error at
    # these shapes is ~3e-2; 1e-1 gives deterministic headroom while still
    # catching any structural (tap / BN-stat / residual) mistake.
    err = float(jnp.max(jnp.abs(out - ref)))
    assert err < 1e-1, f"max abs err {err}"

    print("KERNEL_OK")
</pallas_src>

<mosaic_0001>
module attributes {stable_mosaic.version = 11 : i64} {
  func.func @kernel(%arg0: i32, %arg1: memref<256x4xbf16, #tpu.memory_space<vmem>>, %arg2: memref<4x4xbf16, #tpu.memory_space<vmem>>, %arg3: memref<256x4xf32, #tpu.memory_space<vmem>>, %arg4: memref<1x2x4xf32, #tpu.memory_space<vmem>>) attributes {dimension_semantics = [#tpu.dimension_semantics<parallel>], iteration_bounds = array<i64: 2>, scalar_prefetch = 0 : i64, scratch_operands = 0 : i64, tpu.core_type = #tpu.core_type<tc>, window_params = [{transform_indices = @transform_0, window_bounds = array<i64: 256, 4>}, {pipeline_mode = #tpu.pipeline_mode<synchronous>, transform_indices = @transform_1, window_bounds = array<i64: 4, 4>}, {transform_indices = @transform_2, window_bounds = array<i64: 256, 4>}, {transform_indices = @transform_3, window_bounds = array<i64: 1, 2, 4>}]} {
    %c0 = arith.constant 0 : index
    %c0_0 = arith.constant 0 : index
    %0 = vector.load %arg1[%c0, %c0_0] : memref<256x4xbf16, #tpu.memory_space<vmem>>, vector<256x4xbf16>
    %c0_1 = arith.constant 0 : index
    %c0_2 = arith.constant 0 : index
    %1 = vector.load %arg2[%c0_1, %c0_2] : memref<4x4xbf16, #tpu.memory_space<vmem>>, vector<4x4xbf16>
    %cst = arith.constant dense<0.000000e+00> : vector<256x4xf32>
    %2 = tpu.matmul %0, %1, %cst {dimension_numbers = #tpu.dot_dimension_numbers<[1], [0], [0], [1], [0, 0, 1, 1], [], []>} : vector<256x4xbf16>, vector<4x4xbf16>, vector<256x4xf32> -> vector<256x4xf32>
    %c0_3 = arith.constant 0 : index
    %c0_4 = arith.constant 0 : index
    %3 = vector.load %arg3[%c0_3, %c0_4] : memref<256x4xf32, #tpu.memory_space<vmem>>, vector<256x4xf32>
    tpu.vector_store %arg3[%c0_3, %c0_4], %2 {strides = array<i32>} : memref<256x4xf32, #tpu.memory_space<vmem>>, vector<256x4xf32>,
    %cst_5 = arith.constant dense<0.000000e+00> : vector<4xf32>
    %4 = vector.multi_reduction <add>, %2, %cst_5 [0] : vector<256x4xf32> to vector<4xf32>
    %5 = vector.shape_cast %4 : vector<4xf32> to vector<1x4xf32>
    %c0_6 = arith.constant 0 : index
    %c0_7 = arith.constant 0 : index
    %c0_8 = arith.constant 0 : index
    %6 = vector.load %arg4[%c0_6, %c0_7, %c0_8] : memref<1x2x4xf32, #tpu.memory_space<vmem>>, vector<1x1x4xf32>
    %7 = vector.shape_cast %6 : vector<1x1x4xf32> to vector<1x4xf32>
    %8 = vector.shape_cast %5 : vector<1x4xf32> to vector<1x1x4xf32>
    tpu.vector_store %arg4[%c0_6, %c0_7, %c0_8], %8 {strides = array<i32>} : memref<1x2x4xf32, #tpu.memory_space<vmem>>, vector<1x1x4xf32>,
    %9 = arith.mulf %2, %2 : vector<256x4xf32>
    %cst_9 = arith.constant dense<0.000000e+00> : vector<4xf32>
    %10 = vector.multi_reduction <add>, %9, %cst_9 [0] : vector<256x4xf32> to vector<4xf32>
    %11 = vector.shape_cast %10 : vector<4xf32> to vector<1x4xf32>
    %c0_10 = arith.constant 0 : index
    %c1 = arith.constant 1 : index
    %c0_11 = arith.constant 0 : index
    %12 = vector.load %arg4[%c0_10, %c1, %c0_11] : memref<1x2x4xf32, #tpu.memory_space<vmem>>, vector<1x1x4xf32>
    %13 = vector.shape_cast %12 : vector<1x1x4xf32> to vector<1x4xf32>
    %14 = vector.shape_cast %11 : vector<1x4xf32> to vector<1x1x4xf32>
    tpu.vector_store %arg4[%c0_10, %c1, %c0_11], %14 {strides = array<i32>} : memref<1x2x4xf32, #tpu.memory_space<vmem>>, vector<1x1x4xf32>,
    return
  }
  func.func @transform_0(%arg0: i32) -> (i32, i32) {
    %c0_i32 = arith.constant 0 : i32
    %c0_i32_0 = arith.constant 0 : i32
    return %arg0, %c0_i32 : i32, i32
  }
  func.func @transform_1(%arg0: i32) -> (i32, i32) {
    %c0_i32 = arith.constant 0 : i32
    %c0_i32_0 = arith.constant 0 : i32
    %c0_i32_1 = arith.constant 0 : i32
    return %c0_i32, %c0_i32_0 : i32, i32
  }
  func.func @transform_2(%arg0: i32) -> (i32, i32) {
    %c0_i32 = arith.constant 0 : i32
    %c0_i32_0 = arith.constant 0 : i32
    return %arg0, %c0_i32 : i32, i32
  }
  func.func @transform_3(%arg0: i32) -> (i32, i32, i32) {
    %c0_i32 = arith.constant 0 : i32
    %c0_i32_0 = arith.constant 0 : i32
    %c0_i32_1 = arith.constant 0 : i32
    return %arg0, %c0_i32, %c0_i32_0 : i32, i32, i32
  }
}

module attributes {stable_mosaic.version = 11 : i64} {
  func.func @kernel(%arg0: i32, %arg1: memref<256x4xf32, #tpu.memory_space<vmem>>, %arg2: memref<1x4xf32, #tpu.memory_space<vmem>>, %arg3: memref<1x4xf32, #tpu.memory_space<vmem>>, %arg4: memref<256x4xbf16, #tpu.memory_space<vmem>>) attributes {dimension_semantics = [#tpu.dimension_semantics<parallel>], iteration_bounds = array<i64: 2>, scalar_prefetch = 0 : i64, scratch_operands = 0 : i64, tpu.core_type = #tpu.core_type<tc>, window_params = [{transform_indices = @transform_0, window_bounds = array<i64: 256, 4>}, {pipeline_mode = #tpu.pipeline_mode<synchronous>, transform_indices = @transform_1, window_bounds = array<i64: 1, 4>}, {pipeline_mode = #tpu.pipeline_mode<synchronous>, transform_indices = @transform_2, window_bounds = array<i64: 1, 4>}, {transform_indices = @transform_3, window_bounds = array<i64: 256, 4>}]} {
    %c0 = arith.constant 0 : index
    %c0_0 = arith.constant 0 : index
    %0 = vector.load %arg1[%c0, %c0_0] : memref<256x4xf32, #tpu.memory_space<vmem>>, vector<256x4xf32>
    %c0_1 = arith.constant 0 : index
    %c0_2 = arith.constant 0 : index
    %1 = vector.load %arg2[%c0_1, %c0_2] : memref<1x4xf32, #tpu.memory_space<vmem>>, vector<1x4xf32>
    %2 = vector.broadcast %1 : vector<1x4xf32> to vector<256x4xf32>
    %3 = arith.mulf %0, %2 : vector<256x4xf32>
    %c0_3 = arith.constant 0 : index
    %c0_4 = arith.constant 0 : index
    %4 = vector.load %arg3[%c0_3, %c0_4] : memref<1x4xf32, #tpu.memory_space<vmem>>, vector<1x4xf32>
    %5 = vector.broadcast %4 : vector<1x4xf32> to vector<256x4xf32>
    %6 = arith.addf %3, %5 : vector<256x4xf32>
    %cst = arith.constant 0.000000e+00 : f32
    %7 = vector.broadcast %cst : f32 to vector<256x4xf32>
    %8 = arith.maximumf %6, %7 : vector<256x4xf32>
    %9 = arith.truncf %8 : vector<256x4xf32> to vector<256x4xbf16>
    %c0_5 = arith.constant 0 : index
    %c0_6 = arith.constant 0 : index
    %10 = vector.load %arg4[%c0_5, %c0_6] : memref<256x4xbf16, #tpu.memory_space<vmem>>, vector<256x4xbf16>
    tpu.vector_store %arg4[%c0_5, %c0_6], %9 {strides = array<i32>} : memref<256x4xbf16, #tpu.memory_space<vmem>>, vector<256x4xbf16>,
    return
  }
  func.func @transform_0(%arg0: i32) -> (i32, i32) {
    %c0_i32 = arith.constant 0 : i32
    %c0_i32_0 = arith.constant 0 : i32
    return %arg0, %c0_i32 : i32, i32
  }
  func.func @transform_1(%arg0: i32) -> (i32, i32) {
    %c0_i32 = arith.constant 0 : i32
    %c0_i32_0 = arith.constant 0 : i32
    %c0_i32_1 = arith.constant 0 : i32
    return %c0_i32, %c0_i32_0 : i32, i32
  }
  func.func @transform_2(%arg0: i32) -> (i32, i32) {
    %c0_i32 = arith.constant 0 : i32
    %c0_i32_0 = arith.constant 0 : i32
    %c0_i32_1 = arith.constant 0 : i32
    return %c0_i32, %c0_i32_0 : i32, i32
  }
  func.func @transform_3(%arg0: i32) -> (i32, i32) {
    %c0_i32 = arith.constant 0 : i32
    %c0_i32_0 = arith.constant 0 : i32
    return %arg0, %c0_i32 : i32, i32
  }
}

module attributes {stable_mosaic.version = 11 : i64} {
  func.func @kernel(%arg0: i32, %arg1: memref<1x18x16x12xbf16, #tpu.memory_space<vmem>>, %arg2: memref<3x12x4xbf16, #tpu.memory_space<vmem>>, %arg3: memref<1x256x4xf32, #tpu.memory_space<vmem>>, %arg4: memref<1x2x4xf32, #tpu.memory_space<vmem>>) attributes {dimension_semantics = [#tpu.dimension_semantics<parallel>], iteration_bounds = array<i64: 2>, scalar_prefetch = 0 : i64, scratch_operands = 0 : i64, tpu.core_type = #tpu.core_type<tc>, window_params = [{transform_indices = @transform_0, window_bounds = array<i64: 1, 18, 16, 12>}, {pipeline_mode = #tpu.pipeline_mode<synchronous>, transform_indices = @transform_1, window_bounds = array<i64: 3, 12, 4>}, {transform_indices = @transform_2, window_bounds = array<i64: 1, 256, 4>}, {transform_indices = @transform_3, window_bounds = array<i64: 1, 2, 4>}]} {
    %c0 = arith.constant 0 : index
    %c0_0 = arith.constant 0 : index
    %c0_1 = arith.constant 0 : index
    %c0_2 = arith.constant 0 : index
    %0 = vector.load %arg1[%c0, %c0_0, %c0_1, %c0_2] : memref<1x18x16x12xbf16, #tpu.memory_space<vmem>>, vector<1x16x16x12xbf16>
    %1 = vector.shape_cast %0 : vector<1x16x16x12xbf16> to vector<16x16x12xbf16>
    %2 = vector.shape_cast %1 : vector<16x16x12xbf16> to vector<256x12xbf16>
    %c0_3 = arith.constant 0 : index
    %c0_4 = arith.constant 0 : index
    %c0_5 = arith.constant 0 : index
    %3 = vector.load %arg2[%c0_3, %c0_4, %c0_5] : memref<3x12x4xbf16, #tpu.memory_space<vmem>>, vector<1x12x4xbf16>
    %4 = vector.shape_cast %3 : vector<1x12x4xbf16> to vector<12x4xbf16>
    %cst = arith.constant dense<0.000000e+00> : vector<256x4xf32>
    %5 = tpu.matmul %2, %4, %cst {dimension_numbers = #tpu.dot_dimension_numbers<[1], [0], [0], [1], [0, 0, 1, 1], [], []>} : vector<256x12xbf16>, vector<12x4xbf16>, vector<256x4xf32> -> vector<256x4xf32>
    %c0_6 = arith.constant 0 : index
    %c1 = arith.constant 1 : index
    %c0_7 = arith.constant 0 : index
    %c0_8 = arith.constant 0 : index
    %6 = vector.load %arg1[%c0_6, %c1, %c0_7, %c0_8] : memref<1x18x16x12xbf16, #tpu.memory_space<vmem>>, vector<1x16x16x12xbf16>
    %7 = vector.shape_cast %6 : vector<1x16x16x12xbf16> to vector<16x16x12xbf16>
    %8 = vector.shape_cast %7 : vector<16x16x12xbf16> to vector<256x12xbf16>
    %c1_9 = arith.constant 1 : index
    %c0_10 = arith.constant 0 : index
    %c0_11 = arith.constant 0 : index
    %9 = vector.load %arg2[%c1_9, %c0_10, %c0_11] : memref<3x12x4xbf16, #tpu.memory_space<vmem>>, vector<1x12x4xbf16>
    %10 = vector.shape_cast %9 : vector<1x12x4xbf16> to vector<12x4xbf16>
    %cst_12 = arith.constant dense<0.000000e+00> : vector<256x4xf32>
    %11 = tpu.matmul %8, %10, %cst_12 {dimension_numbers = #tpu.dot_dimension_numbers<[1], [0], [0], [1], [0, 0, 1, 1], [], []>} : vector<256x12xbf16>, vector<12x4xbf16>, vector<256x4xf32> -> vector<256x4xf32>
    %12 = arith.addf %5, %11 : vector<256x4xf32>
    %c0_13 = arith.constant 0 : index
    %c2 = arith.constant 2 : index
    %c0_14 = arith.constant 0 : index
    %c0_15 = arith.constant 0 : index
    %13 = vector.load %arg1[%c0_13, %c2, %c0_14, %c0_15] : memref<1x18x16x12xbf16, #tpu.memory_space<vmem>>, vector<1x16x16x12xbf16>
    %14 = vector.shape_cast %13 : vector<1x16x16x12xbf16> to vector<16x16x12xbf16>
    %15 = vector.shape_cast %14 : vector<16x16x12xbf16> to vector<256x12xbf16>
    %c2_16 = arith.constant 2 : index
    %c0_17 = arith.constant 0 : index
    %c0_18 = arith.constant 0 : index
    %16 = vector.load %arg2[%c2_16, %c0_17, %c0_18] : memref<3x12x4xbf16, #tpu.memory_space<vmem>>, vector<1x12x4xbf16>
    %17 = vector.shape_cast %16 : vector<1x12x4xbf16> to vector<12x4xbf16>
    %cst_19 = arith.constant dense<0.000000e+00> : vector<256x4xf32>
    %18 = tpu.matmul %15, %17, %cst_19 {dimension_numbers = #tpu.dot_dimension_numbers<[1], [0], [0], [1], [0, 0, 1, 1], [], []>} : vector<256x12xbf16>, vector<12x4xbf16>, vector<256x4xf32> -> vector<256x4xf32>
    %19 = arith.addf %12, %18 : vector<256x4xf32>
    %c0_20 = arith.constant 0 : index
    %c0_21 = arith.constant 0 : index
    %c0_22 = arith.constant 0 : index
    %20 = vector.load %arg3[%c0_20, %c0_21, %c0_22] : memref<1x256x4xf32, #tpu.memory_space<vmem>>, vector<1x256x4xf32>
    %21 = vector.shape_cast %20 : vector<1x256x4xf32> to vector<256x4xf32>
    %22 = vector.shape_cast %19 : vector<256x4xf32> to vector<1x256x4xf32>
    tpu.vector_store %arg3[%c0_20, %c0_21, %c0_22], %22 {strides = array<i32>} : memref<1x256x4xf32, #tpu.memory_space<vmem>>, vector<1x256x4xf32>,
    %cst_23 = arith.constant dense<0.000000e+00> : vector<4xf32>
    %23 = vector.multi_reduction <add>, %19, %cst_23 [0] : vector<256x4xf32> to vector<4xf32>
    %24 = vector.shape_cast %23 : vector<4xf32> to vector<1x4xf32>
    %c0_24 = arith.constant 0 : index
    %c0_25 = arith.constant 0 : index
    %c0_26 = arith.constant 0 : index
    %25 = vector.load %arg4[%c0_24, %c0_25, %c0_26] : memref<1x2x4xf32, #tpu.memory_space<vmem>>, vector<1x1x4xf32>
    %26 = vector.shape_cast %25 : vector<1x1x4xf32> to vector<1x4xf32>
    %27 = vector.shape_cast %24 : vector<1x4xf32> to vector<1x1x4xf32>
    tpu.vector_store %arg4[%c0_24, %c0_25, %c0_26], %27 {strides = array<i32>} : memref<1x2x4xf32, #tpu.memory_space<vmem>>, vector<1x1x4xf32>,
    %28 = arith.mulf %19, %19 : vector<256x4xf32>
    %cst_27 = arith.constant dense<0.000000e+00> : vector<4xf32>
    %29 = vector.multi_reduction <add>, %28, %cst_27 [0] : vector<256x4xf32> to vector<4xf32>
    %30 = vector.shape_cast %29 : vector<4xf32> to vector<1x4xf32>
    %c0_28 = arith.constant 0 : index
    %c1_29 = arith.constant 1 : index
    %c0_30 = arith.constant 0 : index
    %31 = vector.load %arg4[%c0_28, %c1_29, %c0_30] : memref<1x2x4xf32, #tpu.memory_space<vmem>>, vector<1x1x4xf32>
    %32 = vector.shape_cast %31 : vector<1x1x4xf32> to vector<1x4xf32>
    %33 = vector.shape_cast %30 : vector<1x4xf32> to vector<1x1x4xf32>
    tpu.vector_store %arg4[%c0_28, %c1_29, %c0_30], %33 {strides = array<i32>} : memref<1x2x4xf32, #tpu.memory_space<vmem>>, vector<1x1x4xf32>,
    return
  }
  func.func @transform_0(%arg0: i32) -> (i32, i32, i32, i32) {
    %c0_i32 = arith.constant 0 : i32
    %c0_i32_0 = arith.constant 0 : i32
    %c0_i32_1 = arith.constant 0 : i32
    %c0_i32_2 = arith.constant 0 : i32
    return %arg0, %c0_i32, %c0_i32_0, %c0_i32_1 : i32, i32, i32, i32
  }
  func.func @transform_1(%arg0: i32) -> (i32, i32, i32) {
    %c0_i32 = arith.constant 0 : i32
    %c0_i32_0 = arith.constant 0 : i32
    %c0_i32_1 = arith.constant 0 : i32
    %c0_i32_2 = arith.constant 0 : i32
    return %c0_i32, %c0_i32_0, %c0_i32_1 : i32, i32, i32
  }
  func.func @transform_2(%arg0: i32) -> (i32, i32, i32) {
    %c0_i32 = arith.constant 0 : i32
    %c0_i32_0 = arith.constant 0 : i32
    %c0_i32_1 = arith.constant 0 : i32
    return %arg0, %c0_i32, %c0_i32_0 : i32, i32, i32
  }
  func.func @transform_3(%arg0: i32) -> (i32, i32, i32) {
    %c0_i32 = arith.constant 0 : i32
    %c0_i32_0 = arith.constant 0 : i32
    %c0_i32_1 = arith.constant 0 : i32
    return %arg0, %c0_i32, %c0_i32_0 : i32, i32, i32
  }
}

module attributes {stable_mosaic.version = 11 : i64} {
  func.func @kernel(%arg0: i32, %arg1: memref<256x4xbf16, #tpu.memory_space<vmem>>, %arg2: memref<4x16xbf16, #tpu.memory_space<vmem>>, %arg3: memref<256x4xbf16, #tpu.memory_space<vmem>>, %arg4: memref<4x16xbf16, #tpu.memory_space<vmem>>, %arg5: memref<256x16xf32, #tpu.memory_space<vmem>>, %arg6: memref<1x2x16xf32, #tpu.memory_space<vmem>>, %arg7: memref<256x16xf32, #tpu.memory_space<vmem>>, %arg8: memref<1x2x16xf32, #tpu.memory_space<vmem>>) attributes {dimension_semantics = [#tpu.dimension_semantics<parallel>], iteration_bounds = array<i64: 2>, scalar_prefetch = 0 : i64, scratch_operands = 0 : i64, tpu.core_type = #tpu.core_type<tc>, window_params = [{transform_indices = @transform_0, window_bounds = array<i64: 256, 4>}, {pipeline_mode = #tpu.pipeline_mode<synchronous>, transform_indices = @transform_1, window_bounds = array<i64: 4, 16>}, {transform_indices = @transform_2, window_bounds = array<i64: 256, 4>}, {pipeline_mode = #tpu.pipeline_mode<synchronous>, transform_indices = @transform_3, window_bounds = array<i64: 4, 16>}, {transform_indices = @transform_4, window_bounds = array<i64: 256, 16>}, {transform_indices = @transform_5, window_bounds = array<i64: 1, 2, 16>}, {transform_indices = @transform_6, window_bounds = array<i64: 256, 16>}, {transform_indices = @transform_7, window_bounds = array<i64: 1, 2, 16>}]} {
    %c0 = arith.constant 0 : index
    %c0_0 = arith.constant 0 : index
    %0 = vector.load %arg1[%c0, %c0_0] : memref<256x4xbf16, #tpu.memory_space<vmem>>, vector<256x4xbf16>
    %c0_1 = arith.constant 0 : index
    %c0_2 = arith.constant 0 : index
    %1 = vector.load %arg2[%c0_1, %c0_2] : memref<4x16xbf16, #tpu.memory_space<vmem>>, vector<4x16xbf16>
    %cst = arith.constant dense<0.000000e+00> : vector<256x16xf32>
    %2 = tpu.matmul %0, %1, %cst {dimension_numbers = #tpu.dot_dimension_numbers<[1], [0], [0], [1], [0, 0, 1, 1], [], []>} : vector<256x4xbf16>, vector<4x16xbf16>, vector<256x16xf32> -> vector<256x16xf32>
    %c0_3 = arith.constant 0 : index
    %c0_4 = arith.constant 0 : index
    %3 = vector.load %arg5[%c0_3, %c0_4] : memref<256x16xf32, #tpu.memory_space<vmem>>, vector<256x16xf32>
    tpu.vector_store %arg5[%c0_3, %c0_4], %2 {strides = array<i32>} : memref<256x16xf32, #tpu.memory_space<vmem>>, vector<256x16xf32>,
    %cst_5 = arith.constant dense<0.000000e+00> : vector<16xf32>
    %4 = vector.multi_reduction <add>, %2, %cst_5 [0] : vector<256x16xf32> to vector<16xf32>
    %5 = vector.shape_cast %4 : vector<16xf32> to vector<1x16xf32>
    %c0_6 = arith.constant 0 : index
    %c0_7 = arith.constant 0 : index
    %c0_8 = arith.constant 0 : index
    %6 = vector.load %arg6[%c0_6, %c0_7, %c0_8] : memref<1x2x16xf32, #tpu.memory_space<vmem>>, vector<1x1x16xf32>
    %7 = vector.shape_cast %6 : vector<1x1x16xf32> to vector<1x16xf32>
    %8 = vector.shape_cast %5 : vector<1x16xf32> to vector<1x1x16xf32>
    tpu.vector_store %arg6[%c0_6, %c0_7, %c0_8], %8 {strides = array<i32>} : memref<1x2x16xf32, #tpu.memory_space<vmem>>, vector<1x1x16xf32>,
    %9 = arith.mulf %2, %2 : vector<256x16xf32>
    %cst_9 = arith.constant dense<0.000000e+00> : vector<16xf32>
    %10 = vector.multi_reduction <add>, %9, %cst_9 [0] : vector<256x16xf32> to vector<16xf32>
    %11 = vector.shape_cast %10 : vector<16xf32> to vector<1x16xf32>
    %c0_10 = arith.constant 0 : index
    %c1 = arith.constant 1 : index
    %c0_11 = arith.constant 0 : index
    %12 = vector.load %arg6[%c0_10, %c1, %c0_11] : memref<1x2x16xf32, #tpu.memory_space<vmem>>, vector<1x1x16xf32>
    %13 = vector.shape_cast %12 : vector<1x1x16xf32> to vector<1x16xf32>
    %14 = vector.shape_cast %11 : vector<1x16xf32> to vector<1x1x16xf32>
    tpu.vector_store %arg6[%c0_10, %c1, %c0_11], %14 {strides = array<i32>} : memref<1x2x16xf32, #tpu.memory_space<vmem>>, vector<1x1x16xf32>,
    %c0_12 = arith.constant 0 : index
    %c0_13 = arith.constant 0 : index
    %15 = vector.load %arg3[%c0_12, %c0_13] : memref<256x4xbf16, #tpu.memory_space<vmem>>, vector<256x4xbf16>
    %c0_14 = arith.constant 0 : index
    %c0_15 = arith.constant 0 : index
    %16 = vector.load %arg4[%c0_14, %c0_15] : memref<4x16xbf16, #tpu.memory_space<vmem>>, vector<4x16xbf16>
    %cst_16 = arith.constant dense<0.000000e+00> : vector<256x16xf32>
    %17 = tpu.matmul %15, %16, %cst_16 {dimension_numbers = #tpu.dot_dimension_numbers<[1], [0], [0], [1], [0, 0, 1, 1], [], []>} : vector<256x4xbf16>, vector<4x16xbf16>, vector<256x16xf32> -> vector<256x16xf32>
    %c0_17 = arith.constant 0 : index
    %c0_18 = arith.constant 0 : index
    %18 = vector.load %arg7[%c0_17, %c0_18] : memref<256x16xf32, #tpu.memory_space<vmem>>, vector<256x16xf32>
    tpu.vector_store %arg7[%c0_17, %c0_18], %17 {strides = array<i32>} : memref<256x16xf32, #tpu.memory_space<vmem>>, vector<256x16xf32>,
    %cst_19 = arith.constant dense<0.000000e+00> : vector<16xf32>
    %19 = vector.multi_reduction <add>, %17, %cst_19 [0] : vector<256x16xf32> to vector<16xf32>
    %20 = vector.shape_cast %19 : vector<16xf32> to vector<1x16xf32>
    %c0_20 = arith.constant 0 : index
    %c0_21 = arith.constant 0 : index
    %c0_22 = arith.constant 0 : index
    %21 = vector.load %arg8[%c0_20, %c0_21, %c0_22] : memref<1x2x16xf32, #tpu.memory_space<vmem>>, vector<1x1x16xf32>
    %22 = vector.shape_cast %21 : vector<1x1x16xf32> to vector<1x16xf32>
    %23 = vector.shape_cast %20 : vector<1x16xf32> to vector<1x1x16xf32>
    tpu.vector_store %arg8[%c0_20, %c0_21, %c0_22], %23 {strides = array<i32>} : memref<1x2x16xf32, #tpu.memory_space<vmem>>, vector<1x1x16xf32>,
    %24 = arith.mulf %17, %17 : vector<256x16xf32>
    %cst_23 = arith.constant dense<0.000000e+00> : vector<16xf32>
    %25 = vector.multi_reduction <add>, %24, %cst_23 [0] : vector<256x16xf32> to vector<16xf32>
    %26 = vector.shape_cast %25 : vector<16xf32> to vector<1x16xf32>
    %c0_24 = arith.constant 0 : index
    %c1_25 = arith.constant 1 : index
    %c0_26 = arith.constant 0 : index
    %27 = vector.load %arg8[%c0_24, %c1_25, %c0_26] : memref<1x2x16xf32, #tpu.memory_space<vmem>>, vector<1x1x16xf32>
    %28 = vector.shape_cast %27 : vector<1x1x16xf32> to vector<1x16xf32>
    %29 = vector.shape_cast %26 : vector<1x16xf32> to vector<1x1x16xf32>
    tpu.vector_store %arg8[%c0_24, %c1_25, %c0_26], %29 {strides = array<i32>} : memref<1x2x16xf32, #tpu.memory_space<vmem>>, vector<1x1x16xf32>,
    return
  }
  func.func @transform_0(%arg0: i32) -> (i32, i32) {
    %c0_i32 = arith.constant 0 : i32
    %c0_i32_0 = arith.constant 0 : i32
    return %arg0, %c0_i32 : i32, i32
  }
  func.func @transform_1(%arg0: i32) -> (i32, i32) {
    %c0_i32 = arith.constant 0 : i32
    %c0_i32_0 = arith.constant 0 : i32
    %c0_i32_1 = arith.constant 0 : i32
    return %c0_i32, %c0_i32_0 : i32, i32
  }
  func.func @transform_2(%arg0: i32) -> (i32, i32) {
    %c0_i32 = arith.constant 0 : i32
    %c0_i32_0 = arith.constant 0 : i32
    return %arg0, %c0_i32 : i32, i32
  }
  func.func @transform_3(%arg0: i32) -> (i32, i32) {
    %c0_i32 = arith.constant 0 : i32
    %c0_i32_0 = arith.constant 0 : i32
    %c0_i32_1 = arith.constant 0 : i32
    return %c0_i32, %c0_i32_0 : i32, i32
  }
  func.func @transform_4(%arg0: i32) -> (i32, i32) {
    %c0_i32 = arith.constant 0 : i32
    %c0_i32_0 = arith.constant 0 : i32
    return %arg0, %c0_i32 : i32, i32
  }
  func.func @transform_5(%arg0: i32) -> (i32, i32, i32) {
    %c0_i32 = arith.constant 0 : i32
    %c0_i32_0 = arith.constant 0 : i32
    %c0_i32_1 = arith.constant 0 : i32
    return %arg0, %c0_i32, %c0_i32_0 : i32, i32, i32
  }
  func.func @transform_6(%arg0: i32) -> (i32, i32) {
    %c0_i32 = arith.constant 0 : i32
    %c0_i32_0 = arith.constant 0 : i32
    return %arg0, %c0_i32 : i32, i32
  }
  func.func @transform_7(%arg0: i32) -> (i32, i32, i32) {
    %c0_i32 = arith.constant 0 : i32
    %c0_i32_0 = arith.constant 0 : i32
    %c0_i32_1 = arith.constant 0 : i32
    return %arg0, %c0_i32, %c0_i32_0 : i32, i32, i32
  }
}

module attributes {stable_mosaic.version = 11 : i64} {
  func.func @kernel(%arg0: i32, %arg1: memref<256x16xf32, #tpu.memory_space<vmem>>, %arg2: memref<1x16xf32, #tpu.memory_space<vmem>>, %arg3: memref<1x16xf32, #tpu.memory_space<vmem>>, %arg4: memref<256x16xf32, #tpu.memory_space<vmem>>, %arg5: memref<1x16xf32, #tpu.memory_space<vmem>>, %arg6: memref<1x16xf32, #tpu.memory_space<vmem>>, %arg7: memref<256x16xf32, #tpu.memory_space<vmem>>) attributes {dimension_semantics = [#tpu.dimension_semantics<parallel>], iteration_bounds = array<i64: 2>, scalar_prefetch = 0 : i64, scratch_operands = 0 : i64, tpu.core_type = #tpu.core_type<tc>, window_params = [{transform_indices = @transform_0, window_bounds = array<i64: 256, 16>}, {pipeline_mode = #tpu.pipeline_mode<synchronous>, transform_indices = @transform_1, window_bounds = array<i64: 1, 16>}, {pipeline_mode = #tpu.pipeline_mode<synchronous>, transform_indices = @transform_2, window_bounds = array<i64: 1, 16>}, {transform_indices = @transform_3, window_bounds = array<i64: 256, 16>}, {pipeline_mode = #tpu.pipeline_mode<synchronous>, transform_indices = @transform_4, window_bounds = array<i64: 1, 16>}, {pipeline_mode = #tpu.pipeline_mode<synchronous>, transform_indices = @transform_5, window_bounds = array<i64: 1, 16>}, {transform_indices = @transform_6, window_bounds = array<i64: 256, 16>}]} {
    %c0 = arith.constant 0 : index
    %c0_0 = arith.constant 0 : index
    %0 = vector.load %arg1[%c0, %c0_0] : memref<256x16xf32, #tpu.memory_space<vmem>>, vector<256x16xf32>
    %c0_1 = arith.constant 0 : index
    %c0_2 = arith.constant 0 : index
    %1 = vector.load %arg2[%c0_1, %c0_2] : memref<1x16xf32, #tpu.memory_space<vmem>>, vector<1x16xf32>
    %2 = vector.broadcast %1 : vector<1x16xf32> to vector<256x16xf32>
    %3 = arith.mulf %0, %2 : vector<256x16xf32>
    %c0_3 = arith.constant 0 : index
    %c0_4 = arith.constant 0 : index
    %4 = vector.load %arg3[%c0_3, %c0_4] : memref<1x16xf32, #tpu.memory_space<vmem>>, vector<1x16xf32>
    %5 = vector.broadcast %4 : vector<1x16xf32> to vector<256x16xf32>
    %6 = arith.addf %3, %5 : vector<256x16xf32>
    %c0_5 = arith.constant 0 : index
    %c0_6 = arith.constant 0 : index
    %7 = vector.load %arg4[%c0_5, %c0_6] : memref<256x16xf32, #tpu.memory_space<vmem>>, vector<256x16xf32>
    %c0_7 = arith.constant 0 : index
    %c0_8 = arith.constant 0 : index
    %8 = vector.load %arg5[%c0_7, %c0_8] : memref<1x16xf32, #tpu.memory_space<vmem>>, vector<1x16xf32>
    %9 = vector.broadcast %8 : vector<1x16xf32> to vector<256x16xf32>
    %10 = arith.mulf %7, %9 : vector<256x16xf32>
    %c0_9 = arith.constant 0 : index
    %c0_10 = arith.constant 0 : index
    %11 = vector.load %arg6[%c0_9, %c0_10] : memref<1x16xf32, #tpu.memory_space<vmem>>, vector<1x16xf32>
    %12 = vector.broadcast %11 : vector<1x16xf32> to vector<256x16xf32>
    %13 = arith.addf %10, %12 : vector<256x16xf32>
    %14 = arith.addf %6, %13 : vector<256x16xf32>
    %cst = arith.constant 0.000000e+00 : f32
    %15 = vector.broadcast %cst : f32 to vector<256x16xf32>
    %16 = arith.maximumf %14, %15 : vector<256x16xf32>
    %c0_11 = arith.constant 0 : index
    %c0_12 = arith.constant 0 : index
    %17 = vector.load %arg7[%c0_11, %c0_12] : memref<256x16xf32, #tpu.memory_space<vmem>>, vector<256x16xf32>
    tpu.vector_store %arg7[%c0_11, %c0_12], %16 {strides = array<i32>} : memref<256x16xf32, #tpu.memory_space<vmem>>, vector<256x16xf32>,
    return
  }
  func.func @transform_0(%arg0: i32) -> (i32, i32) {
    %c0_i32 = arith.constant 0 : i32
    %c0_i32_0 = arith.constant 0 : i32
    return %arg0, %c0_i32 : i32, i32
  }
  func.func @transform_1(%arg0: i32) -> (i32, i32) {
    %c0_i32 = arith.constant 0 : i32
    %c0_i32_0 = arith.constant 0 : i32
    %c0_i32_1 = arith.constant 0 : i32
    return %c0_i32, %c0_i32_0 : i32, i32
  }
  func.func @transform_2(%arg0: i32) -> (i32, i32) {
    %c0_i32 = arith.constant 0 : i32
    %c0_i32_0 = arith.constant 0 : i32
    %c0_i32_1 = arith.constant 0 : i32
    return %c0_i32, %c0_i32_0 : i32, i32
  }
  func.func @transform_3(%arg0: i32) -> (i32, i32) {
    %c0_i32 = arith.constant 0 : i32
    %c0_i32_0 = arith.constant 0 : i32
    return %arg0, %c0_i32 : i32, i32
  }
  func.func @transform_4(%arg0: i32) -> (i32, i32) {
    %c0_i32 = arith.constant 0 : i32
    %c0_i32_0 = arith.constant 0 : i32
    %c0_i32_1 = arith.constant 0 : i32
    return %c0_i32, %c0_i32_0 : i32, i32
  }
  func.func @transform_5(%arg0: i32) -> (i32, i32) {
    %c0_i32 = arith.constant 0 : i32
    %c0_i32_0 = arith.constant 0 : i32
    %c0_i32_1 = arith.constant 0 : i32
    return %c0_i32, %c0_i32_0 : i32, i32
  }
  func.func @transform_6(%arg0: i32) -> (i32, i32) {
    %c0_i32 = arith.constant 0 : i32
    %c0_i32_0 = arith.constant 0 : i32
    return %arg0, %c0_i32 : i32, i32
  }
}

</mosaic_0001>

<llo_original>
// kernel: bottleneck_forward.7
$region0: #{bottleneck_forward.7}
  #allocation0 [shape = 'u32[]', space=smem, size = 0x4, offset = 0x4, fixed_abs, tag = 'smem constant byte address 0x4 - core index']
  #allocation1 [shape = 'u32[144,128]{1,0:T(1,128)}', space=vmem, size = 0x12000, scoped, tag = 'internal scratch']
  %s0 = inlined_call_operand.vmem [shape: f32[512,4], index: 0, kind: input, shape index: {}]
  %s1 = inlined_call_operand.vmem [shape: f32[1,4], index: 1, kind: input, shape index: {}]
  %s2 = inlined_call_operand.vmem [shape: f32[1,4], index: 2, kind: input, shape index: {}]
  %s3 = inlined_call_operand.vmem [shape: bf16[512,4], index: 3, kind: output, shape index: {}]
  %s4 = sld [smem:[#allocation0]]
  $region45: #{bottleneck_forward.7} parent=0
    _
  %s6 = ssub.s32 1, %s4
  %s7 = scalar_select 0, %s6, %s4
  loop: start=0, step=1, limit=4
  $region2: #{bottleneck_forward.7} parent=0 // loop_pre_header
    _
  $region3: #{bottleneck_forward.7} parent=0 // loop_header
    %s9 = sphi 0, %s13
    %p10 = scmp.ge.s32.totalorder %s9, 4
    %s19 = sphi 0, %s21
    %s22 = sphi 0, %s19
    %s23 = sphi 0, %s22
    %s39 = sphi 0, %s23
    %s43 = sphi 0, %s43
    %s45 = sphi 0, %s43
    %s46 = sphi 0, %s45
    %s60 = sphi 0, %s46
    %s64 = sphi 0, %s64
    %s66 = sphi 0, %s64
    %s67 = sphi 0, %s66
    %s81 = sphi 0, %s67
    %s87 = sphi 0, %s89
    %s90 = sphi 0, %s87
    %s91 = sphi 0, %s90
    %s107 = sphi 0, %s91
  $region4: #{bottleneck_forward.7} parent=0 // loop_header_branch
    %12 = sbr.rel (%p10) target = $region8
  $region5: #{bottleneck_forward.7} parent=0 // loop_body
    %s14 = ssub.s32 %s9, 1
    %s15 = ssub.s32 %s9, 2
    %s16 = sadd.s32 %s9, 1
    %s17 = ssub.s32 %s9, %s16
    %p18 = scmp.eq.s32.totalorder %s17, 0
    %s20 = sadd.s32 %s19, 1
    %s21 = scalar_select %p18, %s19, %s20
    %p24 = pneg %p18
    %p25 = scmp.eq.s32.totalorder %s9, 1
    %p26 = por %p24, %p25
    %p27 = scmp.ne.s32.totalorder %s19, %s22
    %p28 = scmp.eq.s32.totalorder %s9, 0
    %p29 = por %p27, %p28
    %p30 = scmp.ne.s32.totalorder %s19, %s22
    %p31 = scmp.eq.s32.totalorder %s14, 1
    %p32 = por %p30, %p31
    %p33 = scmp.ne.s32.totalorder %s22, %s23
    %p34 = scmp.eq.s32.totalorder %s14, 0
    %p35 = por %p33, %p34
    %p36 = scmp.ne.s32.totalorder %s22, %s23
    %p37 = scmp.eq.s32.totalorder %s15, 1
    %p38 = por %p36, %p37
    %p40 = scmp.ne.s32.totalorder %s23, %s39
    %p41 = scmp.eq.s32.totalorder %s15, 0
    %p42 = por %p40, %p41
    %s44 = sadd.s32 %s43, 1
    %p47 = scmp.eq.s32.totalorder %s9, 1
    %p48 = scmp.ne.s32.totalorder %s43, %s45
    %p49 = scmp.eq.s32.totalorder %s9, 0
    %p50 = por %p48, %p49
    %p51 = scmp.ne.s32.totalorder %s43, %s45
    %p52 = scmp.eq.s32.totalorder %s14, 1
    %p53 = por %p51, %p52
    %p54 = scmp.ne.s32.totalorder %s45, %s46
    %p55 = scmp.eq.s32.totalorder %s14, 0
    %p56 = por %p54, %p55
    %p57 = scmp.ne.s32.totalorder %s45, %s46
    %p58 = scmp.eq.s32.totalorder %s15, 1
    %p59 = por %p57, %p58
    %p61 = scmp.ne.s32.totalorder %s46, %s60
    %p62 = scmp.eq.s32.totalorder %s15, 0
    %p63 = por %p61, %p62
    %s65 = sadd.s32 %s64, 1
    %p68 = scmp.eq.s32.totalorder %s9, 1
    %p69 = scmp.ne.s32.totalorder %s64, %s66
    %p70 = scmp.eq.s32.totalorder %s9, 0
    %p71 = por %p69, %p70
    %p72 = scmp.ne.s32.totalorder %s64, %s66
    %p73 = scmp.eq.s32.totalorder %s14, 1
    %p74 = por %p72, %p73
    %p75 = scmp.ne.s32.totalorder %s66, %s67
    %p76 = scmp.eq.s32.totalorder %s14, 0
    %p77 = por %p75, %p76
    %p78 = scmp.ne.s32.totalorder %s66, %s67
    %p79 = scmp.eq.s32.totalorder %s15, 1
    %p80 = por %p78, %p79
    %p82 = scmp.ne.s32.totalorder %s67, %s81
    %p83 = scmp.eq.s32.totalorder %s15, 0
    %p84 = por %p82, %p83
    %s85 = ssub.s32 %s9, %s16
    %p86 = scmp.eq.s32.totalorder %s85, 0
    %s88 = sadd.s32 %s87, 1
    %s89 = scalar_select %p86, %s87, %s88
    %p92 = pneg %p86
    %p93 = scmp.eq.s32.totalorder %s9, 1
    %p94 = por %p92, %p93
    %p95 = scmp.ne.s32.totalorder %s87, %s90
    %p96 = scmp.eq.s32.totalorder %s9, 0
    %p97 = por %p95, %p96
    %p98 = scmp.ne.s32.totalorder %s87, %s90
    %p99 = scmp.eq.s32.totalorder %s14, 1
    %p100 = por %p98, %p99
    %p101 = scmp.ne.s32.totalorder %s90, %s91
    %p102 = scmp.eq.s32.totalorder %s14, 0
    %p103 = por %p101, %p102
    %p104 = scmp.ne.s32.totalorder %s90, %s91
    %p105 = scmp.eq.s32.totalorder %s15, 1
    %p106 = por %p104, %p105
    %p108 = scmp.ne.s32.totalorder %s91, %s107
    %p109 = scmp.eq.s32.totalorder %s15, 0
    %p110 = por %p108, %p109
    %p111 = scmp.le.s32.totalorder 1, %s9
    %p112 = scmp.lt.s32.totalorder %s9, 3
    %p113 = pnand %p111, %p112
    %p114 = pneg %p113
    // Predicated region
    $region9: #{bottleneck_forward.7} parent=5 // pred_check
      _
    $region10: #{bottleneck_forward.7} parent=5 // pred_check_branch
      %116 = sbr.rel (%p113) target = $region12
    $region11: #{bottleneck_forward.7} parent=5 // pred_region
      %s117 = ssub.s32 %s9, 1
      // Predicated region
      $region13: #{bottleneck_forward.7} parent=11 // pred_check
        %p118 = pneg %p56
      $region14: #{bottleneck_forward.7} parent=11 // pred_check_branch
        %120 = sbr.rel (%p118) target = $region16
      $region15: #{bottleneck_forward.7} parent=11 // pred_region
        _
      $region16: #{bottleneck_forward.7} parent=11 // pred_fallthru
        _
      // Predicated region
      $region17: #{bottleneck_forward.7} parent=11 // pred_check
        %p121 = pneg %p77
      $region18: #{bottleneck_forward.7} parent=11 // pred_check_branch
        %123 = sbr.rel (%p121) target = $region20
      $region19: #{bottleneck_forward.7} parent=11 // pred_region
        _
      $region20: #{bottleneck_forward.7} parent=11 // pred_fallthru
        _
    $region12: #{bottleneck_forward.7} parent=5 // pred_fallthru
      _
    %p124 = scmp.lt.s32.totalorder %s9, 2
    // Predicated region
    $region21: #{bottleneck_forward.7} parent=5 // pred_check
      %p125 = pneg %p124
    $region22: #{bottleneck_forward.7} parent=5 // pred_check_branch
      %127 = sbr.rel (%p125) target = $region24
    $region23: #{bottleneck_forward.7} parent=5 // pred_region
      // Predicated region
      $region25: #{bottleneck_forward.7} parent=23 // pred_check
        %p128 = pneg %p29
      $region26: #{bottleneck_forward.7} parent=23 // pred_check_branch
        %130 = sbr.rel (%p128) target = $region28
      $region27: #{bottleneck_forward.7} parent=23 // pred_region
        %s131 = smul.u32 32, %s9
        %p132 = scmp.lt.s32.totalorder %s131, 63
        %s133 = scalar_select %p132, %s131, 63
        %s134 = smul.addr %s133, 8
        %s135 = scalar_lea.vmem %s0, %s134
        %s136 = smul.u32 32, %s9
      $region28: #{bottleneck_forward.7} parent=23 // pred_fallthru
        _
    $region24: #{bottleneck_forward.7} parent=5 // pred_fallthru
      _
    %p137 = scmp.le.s32.totalorder 1, %s9
    %p138 = scmp.lt.s32.totalorder %s9, 3
    %p139 = pnand %p137, %p138
    %p140 = pneg %p139
    // Predicated region
    $region29: #{bottleneck_forward.7} parent=5 // pred_check
      _
    $region30: #{bottleneck_forward.7} parent=5 // pred_check_branch
      %142 = sbr.rel (%p139) target = $region32
    $region31: #{bottleneck_forward.7} parent=5 // pred_region
      %s143 = ssub.s32 %s9, 1
      %s144 = smul.u32 32, %s14
      %p145 = scmp.lt.s32.totalorder %s144, 63
      %s146 = scalar_select %p145, %s144, 63
      %s147 = smul.addr %s146, 8
      %s148 = scalar_lea.vmem %s0, %s147
      %p149 = pneg %p35
      %p150 = pneg %p32
      %p151 = pneg %p56
      %p152 = pneg %p53
      %p153 = pneg %p77
      %p154 = pneg %p74
      %p155 = pneg %p103
      %p156 = pneg %p100
      %s157 = smul.u32 32, %s14
      %p158 = scmp.lt.s32.totalorder %s157, 63
      %s159 = scalar_select %p158, %s157, 63
      %s160 = smul.addr %s159, 4
      %s161 = scalar_lea.vmem %s3, %s160
      %s162 = smul.u32 32, %s14
      %p163 = scmp.lt.s32.totalorder %s162, 63
      %s164 = scalar_select %p163, %s162, 63
      %s165 = smul.addr %s164, 8
      %s166 = scalar_lea.vmem %s0, %s165
      %s167 = smul.u32 32, %s14
      %s168 = smul.u32 32, %s14
      %p169 = scmp.lt.s32.totalorder %s168, 63
      %s170 = scalar_select %p169, %s168, 63
      %s171 = smul.addr %s170, 4
      %s172 = scalar_lea.vmem %s3, %s171
      %s173 = smul.u32 32, %s14
      %v174 = vld [vmem:[%s166] sm:$0xff]
      %v175 = vld [vmem:[%s166 + $0x8] sm:$0xff]
      %v176 = vld [vmem:[%s166 + $0x10] sm:$0xff]
      %v177 = vld [vmem:[%s166 + $0x18] sm:$0xff]
      %v178 = vld [vmem:[%s166 + $0x20] sm:$0xff]
      %v179 = vld [vmem:[%s166 + $0x28] sm:$0xff]
      %v180 = vld [vmem:[%s166 + $0x30] sm:$0xff]
      %v181 = vld [vmem:[%s166 + $0x38] sm:$0xff]
      %v182 = vld [vmem:[%s166 + $0x40] sm:$0xff]
      %v183 = vld [vmem:[%s166 + $0x48] sm:$0xff]
      %v184 = vld [vmem:[%s166 + $0x50] sm:$0xff]
      %v185 = vld [vmem:[%s166 + $0x58] sm:$0xff]
      %v186 = vld [vmem:[%s166 + $0x60] sm:$0xff]
      %v187 = vld [vmem:[%s166 + $0x68] sm:$0xff]
      %v188 = vld [vmem:[%s166 + $0x70] sm:$0xff]
      %v189 = vld [vmem:[%s166 + $0x78] sm:$0xff]
      %v190 = vld [vmem:[%s166 + $0x80] sm:$0xff]
      %v191 = vld [vmem:[%s166 + $0x88] sm:$0xff]
      %v192 = vld [vmem:[%s166 + $0x90] sm:$0xff]
      %v193 = vld [vmem:[%s166 + $0x98] sm:$0xff]
      %v194 = vld [vmem:[%s166 + $0xa0] sm:$0xff]
      %v195 = vld [vmem:[%s166 + $0xa8] sm:$0xff]
      %v196 = vld [vmem:[%s166 + $0xb0] sm:$0xff]
      %v197 = vld [vmem:[%s166 + $0xb8] sm:$0xff]
      %v198 = vld [vmem:[%s166 + $0xc0] sm:$0xff]
      %v199 = vld [vmem:[%s166 + $0xc8] sm:$0xff]
      %v200 = vld [vmem:[%s166 + $0xd0] sm:$0xff]
      %v201 = vld [vmem:[%s166 + $0xd8] sm:$0xff]
      %v202 = vld [vmem:[%s166 + $0xe0] sm:$0xff]
      %v203 = vld [vmem:[%s166 + $0xe8] sm:$0xff]
      %v204 = vld [vmem:[%s166 + $0xf0] sm:$0xff]
      %v205 = vld [vmem:[%s166 + $0xf8] sm:$0xff]
      %v206 = vld [vmem:[%s1] sm:$0x1]
      %v208 = vlaneseq
      %v209 = vshrl.u32 %v208, 7
      %v210 = vsub.s32 0, %v209
      %v211 = vrot.slane %v206, %v210
      %v213 = vmul.f32 %v174, %v211
      %v214 = vmul.f32 %v175, %v211
      %v215 = vmul.f32 %v176, %v211
      %v216 = vmul.f32 %v177, %v211
      %v217 = vmul.f32 %v178, %v211
      %v218 = vmul.f32 %v179, %v211
      %v219 = vmul.f32 %v180, %v211
      %v220 = vmul.f32 %v181, %v211
      %v221 = vmul.f32 %v182, %v211
      %v222 = vmul.f32 %v183, %v211
      %v223 = vmul.f32 %v184, %v211
      %v224 = vmul.f32 %v185, %v211
      %v225 = vmul.f32 %v186, %v211
      %v226 = vmul.f32 %v187, %v211
      %v227 = vmul.f32 %v188, %v211
      %v228 = vmul.f32 %v189, %v211
      %v229 = vmul.f32 %v190, %v211
      %v230 = vmul.f32 %v191, %v211
      %v231 = vmul.f32 %v192, %v211
      %v232 = vmul.f32 %v193, %v211
      %v233 = vmul.f32 %v194, %v211
      %v234 = vmul.f32 %v195, %v211
      %v235 = vmul.f32 %v196, %v211
      %v236 = vmul.f32 %v197, %v211
      %v237 = vmul.f32 %v198, %v211
      %v238 = vmul.f32 %v199, %v211
      %v239 = vmul.f32 %v200, %v211
      %v240 = vmul.f32 %v201, %v211
      %v241 = vmul.f32 %v202, %v211
      %v242 = vmul.f32 %v203, %v211
      %v243 = vmul.f32 %v204, %v211
      %v244 = vmul.f32 %v205, %v211
      %v245 = vld [vmem:[%s2] sm:$0x1]
      %v247 = vlaneseq
      %v248 = vshrl.u32 %v247, 7
      %v249 = vsub.s32 0, %v248
      %v250 = vrot.slane %v245, %v249
      %v252 = vadd.f32 %v213, %v250
      %v253 = vadd.f32 %v214, %v250
      %v254 = vadd.f32 %v215, %v250
      %v255 = vadd.f32 %v216, %v250
      %v256 = vadd.f32 %v217, %v250
      %v257 = vadd.f32 %v218, %v250
      %v258 = vadd.f32 %v219, %v250
      %v259 = vadd.f32 %v220, %v250
      %v260 = vadd.f32 %v221, %v250
      %v261 = vadd.f32 %v222, %v250
      %v262 = vadd.f32 %v223, %v250
      %v263 = vadd.f32 %v224, %v250
      %v264 = vadd.f32 %v225, %v250
      %v265 = vadd.f32 %v226, %v250
      %v266 = vadd.f32 %v227, %v250
      %v267 = vadd.f32 %v228, %v250
      %v268 = vadd.f32 %v229, %v250
      %v269 = vadd.f32 %v230, %v250
      %v270 = vadd.f32 %v231, %v250
      %v271 = vadd.f32 %v232, %v250
      %v272 = vadd.f32 %v233, %v250
      %v273 = vadd.f32 %v234, %v250
      %v274 = vadd.f32 %v235, %v250
      %v275 = vadd.f32 %v236, %v250
      %v276 = vadd.f32 %v237, %v250
      %v277 = vadd.f32 %v238, %v250
      %v278 = vadd.f32 %v239, %v250
      %v279 = vadd.f32 %v240, %v250
      %v280 = vadd.f32 %v241, %v250
      %v281 = vadd.f32 %v242, %v250
      %v282 = vadd.f32 %v243, %v250
      %v283 = vadd.f32 %v244, %v250
      %v284 = vmax.f32 %v252, 0.0
      %v285 = vmax.f32 %v253, 0.0
      %v286 = vmax.f32 %v254, 0.0
      %v287 = vmax.f32 %v255, 0.0
      %v288 = vmax.f32 %v256, 0.0
      %v289 = vmax.f32 %v257, 0.0
      %v290 = vmax.f32 %v258, 0.0
      %v291 = vmax.f32 %v259, 0.0
      %v292 = vmax.f32 %v260, 0.0
      %v293 = vmax.f32 %v261, 0.0
      %v294 = vmax.f32 %v262, 0.0
      %v295 = vmax.f32 %v263, 0.0
      %v296 = vmax.f32 %v264, 0.0
      %v297 = vmax.f32 %v265, 0.0
      %v298 = vmax.f32 %v266, 0.0
      %v299 = vmax.f32 %v267, 0.0
      %v300 = vmax.f32 %v268, 0.0
      %v301 = vmax.f32 %v269, 0.0
      %v302 = vmax.f32 %v270, 0.0
      %v303 = vmax.f32 %v271, 0.0
      %v304 = vmax.f32 %v272, 0.0
      %v305 = vmax.f32 %v273, 0.0
      %v306 = vmax.f32 %v274, 0.0
      %v307 = vmax.f32 %v275, 0.0
      %v308 = vmax.f32 %v276, 0.0
      %v309 = vmax.f32 %v277, 0.0
      %v310 = vmax.f32 %v278, 0.0
      %v311 = vmax.f32 %v279, 0.0
      %v312 = vmax.f32 %v280, 0.0
      %v313 = vmax.f32 %v281, 0.0
      %v314 = vmax.f32 %v282, 0.0
      %v315 = vmax.f32 %v283, 0.0
      %v316 = vpack.c.bf16 %v285, %v284
      %v317 = vpack.c.bf16 %v287, %v286
      %v318 = vpack.c.bf16 %v289, %v288
      %v319 = vpack.c.bf16 %v291, %v290
      %v320 = vpack.c.bf16 %v293, %v292
      %v321 = vpack.c.bf16 %v295, %v294
      %v322 = vpack.c.bf16 %v297, %v296
      %v323 = vpack.c.bf16 %v299, %v298
      %v324 = vpack.c.bf16 %v301, %v300
      %v325 = vpack.c.bf16 %v303, %v302
      %v326 = vpack.c.bf16 %v305, %v304
      %v327 = vpack.c.bf16 %v307, %v306
      %v328 = vpack.c.bf16 %v309, %v308
      %v329 = vpack.c.bf16 %v311, %v310
      %v330 = vpack.c.bf16 %v313, %v312
      %v331 = vpack.c.bf16 %v315, %v314
      %v348 = vunpack.c.l.b16 %v316
      %v349 = vunpack.c.h.b16 %v316
      %v350 = vunpack.c.l.b16 %v317
      %v351 = vunpack.c.h.b16 %v317
      %v352 = vunpack.c.l.b16 %v318
      %v353 = vunpack.c.h.b16 %v318
      %v354 = vunpack.c.l.b16 %v319
      %v355 = vunpack.c.h.b16 %v319
      %v356 = vunpack.c.l.b16 %v320
      %v357 = vunpack.c.h.b16 %v320
      %v358 = vunpack.c.l.b16 %v321
      %v359 = vunpack.c.h.b16 %v321
      %v360 = vunpack.c.l.b16 %v322
      %v361 = vunpack.c.h.b16 %v322
      %v362 = vunpack.c.l.b16 %v323
      %v363 = vunpack.c.h.b16 %v323
      %v364 = vunpack.c.l.b16 %v324
      %v365 = vunpack.c.h.b16 %v324
      %v366 = vunpack.c.l.b16 %v325
      %v367 = vunpack.c.h.b16 %v325
      %v368 = vunpack.c.l.b16 %v326
      %v369 = vunpack.c.h.b16 %v326
      %v370 = vunpack.c.l.b16 %v327
      %v371 = vunpack.c.h.b16 %v327
      %v372 = vunpack.c.l.b16 %v328
      %v373 = vunpack.c.h.b16 %v328
      %v374 = vunpack.c.l.b16 %v329
      %v375 = vunpack.c.h.b16 %v329
      %v376 = vunpack.c.l.b16 %v330
      %v377 = vunpack.c.h.b16 %v330
      %v378 = vunpack.c.l.b16 %v331
      %v379 = vunpack.c.h.b16 %v331
      %v380 = vpack.c.b16 %v348, %v348
      %v381 = vpack.c.b16 %v349, %v349
      %v382 = vpack.c.b16 %v350, %v350
      %v383 = vpack.c.b16 %v351, %v351
      %v384 = vpack.c.b16 %v352, %v352
      %v385 = vpack.c.b16 %v353, %v353
      %v386 = vpack.c.b16 %v354, %v354
      %v387 = vpack.c.b16 %v355, %v355
      %v388 = vpack.c.b16 %v356, %v356
      %v389 = vpack.c.b16 %v357, %v357
      %v390 = vpack.c.b16 %v358, %v358
      %v391 = vpack.c.b16 %v359, %v359
      %v392 = vpack.c.b16 %v360, %v360
      %v393 = vpack.c.b16 %v361, %v361
      %v394 = vpack.c.b16 %v362, %v362
      %v395 = vpack.c.b16 %v363, %v363
      %v396 = vpack.c.b16 %v364, %v364
      %v397 = vpack.c.b16 %v365, %v365
      %v398 = vpack.c.b16 %v366, %v366
      %v399 = vpack.c.b16 %v367, %v367
      %v400 = vpack.c.b16 %v368, %v368
      %v401 = vpack.c.b16 %v369, %v369
      %v402 = vpack.c.b16 %v370, %v370
      %v403 = vpack.c.b16 %v371, %v371
      %v404 = vpack.c.b16 %v372, %v372
      %v405 = vpack.c.b16 %v373, %v373
      %v406 = vpack.c.b16 %v374, %v374
      %v407 = vpack.c.b16 %v375, %v375
      %v408 = vpack.c.b16 %v376, %v376
      %v409 = vpack.c.b16 %v377, %v377
      %v410 = vpack.c.b16 %v378, %v378
      %v411 = vpack.c.b16 %v379, %v379
      %vm444 = vcmask 27648
      %445 = vst.msk [vmem:[%s172] sm:$0xf] %vm444, %v380
      %446 = vst.msk [vmem:[%s172 + $0x4] sm:$0xf] %vm444, %v381
      %447 = vst.msk [vmem:[%s172 + $0x8] sm:$0xf] %vm444, %v382
      %448 = vst.msk [vmem:[%s172 + $0xc] sm:$0xf] %vm444, %v383
      %449 = vst.msk [vmem:[%s172 + $0x10] sm:$0xf] %vm444, %v384
      %450 = vst.msk [vmem:[%s172 + $0x14] sm:$0xf] %vm444, %v385
      %451 = vst.msk [vmem:[%s172 + $0x18] sm:$0xf] %vm444, %v386
      %452 = vst.msk [vmem:[%s172 + $0x1c] sm:$0xf] %vm444, %v387
      %453 = vst.msk [vmem:[%s172 + $0x20] sm:$0xf] %vm444, %v388
      %454 = vst.msk [vmem:[%s172 + $0x24] sm:$0xf] %vm444, %v389
      %455 = vst.msk [vmem:[%s172 + $0x28] sm:$0xf] %vm444, %v390
      %456 = vst.msk [vmem:[%s172 + $0x2c] sm:$0xf] %vm444, %v391
      %457 = vst.msk [vmem:[%s172 + $0x30] sm:$0xf] %vm444, %v392
      %458 = vst.msk [vmem:[%s172 + $0x34] sm:$0xf] %vm444, %v393
      %459 = vst.msk [vmem:[%s172 + $0x38] sm:$0xf] %vm444, %v394
      %460 = vst.msk [vmem:[%s172 + $0x3c] sm:$0xf] %vm444, %v395
      %461 = vst.msk [vmem:[%s172 + $0x40] sm:$0xf] %vm444, %v396
      %462 = vst.msk [vmem:[%s172 + $0x44] sm:$0xf] %vm444, %v397
      %463 = vst.msk [vmem:[%s172 + $0x48] sm:$0xf] %vm444, %v398
      %464 = vst.msk [vmem:[%s172 + $0x4c] sm:$0xf] %vm444, %v399
      %465 = vst.msk [vmem:[%s172 + $0x50] sm:$0xf] %vm444, %v400
      %466 = vst.msk [vmem:[%s172 + $0x54] sm:$0xf] %vm444, %v401
      %467 = vst.msk [vmem:[%s172 + $0x58] sm:$0xf] %vm444, %v402
      %468 = vst.msk [vmem:[%s172 + $0x5c] sm:$0xf] %vm444, %v403
      %469 = vst.msk [vmem:[%s172 + $0x60] sm:$0xf] %vm444, %v404
      %470 = vst.msk [vmem:[%s172 + $0x64] sm:$0xf] %vm444, %v405
      %471 = vst.msk [vmem:[%s172 + $0x68] sm:$0xf] %vm444, %v406
      %472 = vst.msk [vmem:[%s172 + $0x6c] sm:$0xf] %vm444, %v407
      %473 = vst.msk [vmem:[%s172 + $0x70] sm:$0xf] %vm444, %v408
      %474 = vst.msk [vmem:[%s172 + $0x74] sm:$0xf] %vm444, %v409
      %475 = vst.msk [vmem:[%s172 + $0x78] sm:$0xf] %vm444, %v410
      %476 = vst.msk [vmem:[%s172 + $0x7c] sm:$0xf] %vm444, %v411
      %s477 = smul.u32 32, %s14
      %p478 = scmp.lt.s32.totalorder %s477, 63
      %s479 = scalar_select %p478, %s477, 63
      %s480 = smul.addr %s479, 4
      %s481 = scalar_lea.vmem %s3, %s480
      // Predicated region
      $region33: #{bottleneck_forward.7} parent=31 // pred_check
        %p482 = pneg %p100
      $region34: #{bottleneck_forward.7} parent=31 // pred_check_branch
        %484 = sbr.rel (%p482) target = $region36
      $region35: #{bottleneck_forward.7} parent=31 // pred_region
        %s485 = smul.u32 32, %s14
      $region36: #{bottleneck_forward.7} parent=31 // pred_fallthru
        _
    $region32: #{bottleneck_forward.7} parent=5 // pred_fallthru
      _
    %p486 = scmp.le.s32.totalorder 2, %s9
    // Predicated region
    $region37: #{bottleneck_forward.7} parent=5 // pred_check
      %p487 = pneg %p486
    $region38: #{bottleneck_forward.7} parent=5 // pred_check_branch
      %489 = sbr.rel (%p487) target = $region40
    $region39: #{bottleneck_forward.7} parent=5 // pred_region
      %s490 = ssub.s32 %s9, 2
      // Predicated region
      $region41: #{bottleneck_forward.7} parent=39 // pred_check
        %p491 = pneg %p106
      $region42: #{bottleneck_forward.7} parent=39 // pred_check_branch
        %493 = sbr.rel (%p491) target = $region44
      $region43: #{bottleneck_forward.7} parent=39 // pred_region
        %s494 = smul.u32 32, %s15
        %p495 = scmp.lt.s32.totalorder %s494, 63
        %s496 = scalar_select %p495, %s494, 63
        %s497 = smul.addr %s496, 4
        %s498 = scalar_lea.vmem %s3, %s497
      $region44: #{bottleneck_forward.7} parent=39 // pred_fallthru
        _
    $region40: #{bottleneck_forward.7} parent=5 // pred_fallthru
      _
  $region6: #{bottleneck_forward.7} parent=0 // loop_footer
    %s13 = sadd.s32 1, %s9
  $region7: #{bottleneck_forward.7} parent=0 // loop_footer_branch
    %8 = sbr.rel target = $region3
  $region8: #{bottleneck_forward.7} parent=0 // loop_exit
    _

// kernel: bottleneck_forward.6
$region0: #{bottleneck_forward.6}
  #allocation0 [shape = 'u32[]', space=smem, size = 0x4, offset = 0x4, fixed_abs, tag = 'smem constant byte address 0x4 - core index']
  #allocation1 [shape = 'u32[144,128]{1,0:T(1,128)}', space=vmem, size = 0x12000, scoped, tag = 'internal scratch']
  %s0 = inlined_call_operand.vmem [shape: bf16[512,4], index: 0, kind: input, shape index: {}]
  %s1 = inlined_call_operand.vmem [shape: bf16[4,4], index: 1, kind: input, shape index: {}]
  %s2 = inlined_call_operand.vmem [shape: f32[512,4], index: 2, kind: output, shape index: {0}]
  %s3 = inlined_call_operand.vmem [shape: f32[2,2,4], index: 3, kind: output, shape index: {1}]
  %4 = xla_tuple %s2, %s3
  %s5 = sld [smem:[#allocation0]]
  $region49: #{bottleneck_forward.6} parent=0
    _
  %s7 = ssub.s32 1, %s5
  %s8 = scalar_select 0, %s7, %s5
  loop: start=0, step=1, limit=4
  $region2: #{bottleneck_forward.6} parent=0 // loop_pre_header
    _
  $region3: #{bottleneck_forward.6} parent=0 // loop_header
    %s10 = sphi 0, %s14
    %p11 = scmp.ge.s32.totalorder %s10, 4
    %s20 = sphi 0, %s22
    %s23 = sphi 0, %s20
    %s24 = sphi 0, %s23
    %s40 = sphi 0, %s24
    %s44 = sphi 0, %s44
    %s46 = sphi 0, %s44
    %s47 = sphi 0, %s46
    %s61 = sphi 0, %s47
    %s67 = sphi 0, %s69
    %s70 = sphi 0, %s67
    %s71 = sphi 0, %s70
    %s87 = sphi 0, %s71
    %s93 = sphi 0, %s95
    %s96 = sphi 0, %s93
    %s97 = sphi 0, %s96
    %s113 = sphi 0, %s97
  $region4: #{bottleneck_forward.6} parent=0 // loop_header_branch
    %13 = sbr.rel (%p11) target = $region8
  $region5: #{bottleneck_forward.6} parent=0 // loop_body
    %s15 = ssub.s32 %s10, 1
    %s16 = ssub.s32 %s10, 2
    %s17 = sadd.s32 %s10, 1
    %s18 = ssub.s32 %s10, %s17
    %p19 = scmp.eq.s32.totalorder %s18, 0
    %s21 = sadd.s32 %s20, 1
    %s22 = scalar_select %p19, %s20, %s21
    %p25 = pneg %p19
    %p26 = scmp.eq.s32.totalorder %s10, 1
    %p27 = por %p25, %p26
    %p28 = scmp.ne.s32.totalorder %s20, %s23
    %p29 = scmp.eq.s32.totalorder %s10, 0
    %p30 = por %p28, %p29
    %p31 = scmp.ne.s32.totalorder %s20, %s23
    %p32 = scmp.eq.s32.totalorder %s15, 1
    %p33 = por %p31, %p32
    %p34 = scmp.ne.s32.totalorder %s23, %s24
    %p35 = scmp.eq.s32.totalorder %s15, 0
    %p36 = por %p34, %p35
    %p37 = scmp.ne.s32.totalorder %s23, %s24
    %p38 = scmp.eq.s32.totalorder %s16, 1
    %p39 = por %p37, %p38
    %p41 = scmp.ne.s32.totalorder %s24, %s40
    %p42 = scmp.eq.s32.totalorder %s16, 0
    %p43 = por %p41, %p42
    %s45 = sadd.s32 %s44, 1
    %p48 = scmp.eq.s32.totalorder %s10, 1
    %p49 = scmp.ne.s32.totalorder %s44, %s46
    %p50 = scmp.eq.s32.totalorder %s10, 0
    %p51 = por %p49, %p50
    %p52 = scmp.ne.s32.totalorder %s44, %s46
    %p53 = scmp.eq.s32.totalorder %s15, 1
    %p54 = por %p52, %p53
    %p55 = scmp.ne.s32.totalorder %s46, %s47
    %p56 = scmp.eq.s32.totalorder %s15, 0
    %p57 = por %p55, %p56
    %p58 = scmp.ne.s32.totalorder %s46, %s47
    %p59 = scmp.eq.s32.totalorder %s16, 1
    %p60 = por %p58, %p59
    %p62 = scmp.ne.s32.totalorder %s47, %s61
    %p63 = scmp.eq.s32.totalorder %s16, 0
    %p64 = por %p62, %p63
    %s65 = ssub.s32 %s10, %s17
    %p66 = scmp.eq.s32.totalorder %s65, 0
    %s68 = sadd.s32 %s67, 1
    %s69 = scalar_select %p66, %s67, %s68
    %p72 = pneg %p66
    %p73 = scmp.eq.s32.totalorder %s10, 1
    %p74 = por %p72, %p73
    %p75 = scmp.ne.s32.totalorder %s67, %s70
    %p76 = scmp.eq.s32.totalorder %s10, 0
    %p77 = por %p75, %p76
    %p78 = scmp.ne.s32.totalorder %s67, %s70
    %p79 = scmp.eq.s32.totalorder %s15, 1
    %p80 = por %p78, %p79
    %p81 = scmp.ne.s32.totalorder %s70, %s71
    %p82 = scmp.eq.s32.totalorder %s15, 0
    %p83 = por %p81, %p82
    %p84 = scmp.ne.s32.totalorder %s70, %s71
    %p85 = scmp.eq.s32.totalorder %s16, 1
    %p86 = por %p84, %p85
    %p88 = scmp.ne.s32.totalorder %s71, %s87
    %p89 = scmp.eq.s32.totalorder %s16, 0
    %p90 = por %p88, %p89
    %s91 = ssub.s32 %s10, %s17
    %p92 = scmp.eq.s32.totalorder %s91, 0
    %s94 = sadd.s32 %s93, 1
    %s95 = scalar_select %p92, %s93, %s94
    %p98 = pneg %p92
    %p99 = scmp.eq.s32.totalorder %s10, 1
    %p100 = por %p98, %p99
    %p101 = scmp.ne.s32.totalorder %s93, %s96
    %p102 = scmp.eq.s32.totalorder %s10, 0
    %p103 = por %p101, %p102
    %p104 = scmp.ne.s32.totalorder %s93, %s96
    %p105 = scmp.eq.s32.totalorder %s15, 1
    %p106 = por %p104, %p105
    %p107 = scmp.ne.s32.totalorder %s96, %s97
    %p108 = scmp.eq.s32.totalorder %s15, 0
    %p109 = por %p107, %p108
    %p110 = scmp.ne.s32.totalorder %s96, %s97
    %p111 = scmp.eq.s32.totalorder %s16, 1
    %p112 = por %p110, %p111
    %p114 = scmp.ne.s32.totalorder %s97, %s113
    %p115 = scmp.eq.s32.totalorder %s16, 0
    %p116 = por %p114, %p115
    %p117 = scmp.le.s32.totalorder 1, %s10
    %p118 = scmp.lt.s32.totalorder %s10, 3
    %p119 = pnand %p117, %p118
    %p120 = pneg %p119
    // Predicated region
    $region9: #{bottleneck_forward.6} parent=5 // pred_check
      _
    $region10: #{bottleneck_forward.6} parent=5 // pred_check_branch
      %122 = sbr.rel (%p119) target = $region12
    $region11: #{bottleneck_forward.6} parent=5 // pred_region
      %s123 = ssub.s32 %s10, 1
      // Predicated region
      $region13: #{bottleneck_forward.6} parent=11 // pred_check
        %p124 = pneg %p57
      $region14: #{bottleneck_forward.6} parent=11 // pred_check_branch
        %126 = sbr.rel (%p124) target = $region16
      $region15: #{bottleneck_forward.6} parent=11 // pred_region
        _
      $region16: #{bottleneck_forward.6} parent=11 // pred_fallthru
        _
    $region12: #{bottleneck_forward.6} parent=5 // pred_fallthru
      _
    %p127 = scmp.lt.s32.totalorder %s10, 2
    // Predicated region
    $region17: #{bottleneck_forward.6} parent=5 // pred_check
      %p128 = pneg %p127
    $region18: #{bottleneck_forward.6} parent=5 // pred_check_branch
      %130 = sbr.rel (%p128) target = $region20
    $region19: #{bottleneck_forward.6} parent=5 // pred_region
      // Predicated region
      $region21: #{bottleneck_forward.6} parent=19 // pred_check
        %p131 = pneg %p30
      $region22: #{bottleneck_forward.6} parent=19 // pred_check_branch
        %133 = sbr.rel (%p131) target = $region24
      $region23: #{bottleneck_forward.6} parent=19 // pred_region
        %s134 = smul.u32 32, %s10
        %p135 = scmp.lt.s32.totalorder %s134, 63
        %s136 = scalar_select %p135, %s134, 63
        %s137 = smul.addr %s136, 4
        %s138 = scalar_lea.vmem %s0, %s137
        %s139 = smul.u32 32, %s10
      $region24: #{bottleneck_forward.6} parent=19 // pred_fallthru
        _
    $region20: #{bottleneck_forward.6} parent=5 // pred_fallthru
      _
    %p140 = scmp.le.s32.totalorder 1, %s10
    %p141 = scmp.lt.s32.totalorder %s10, 3
    %p142 = pnand %p140, %p141
    %p143 = pneg %p142
    // Predicated region
    $region25: #{bottleneck_forward.6} parent=5 // pred_check
      _
    $region26: #{bottleneck_forward.6} parent=5 // pred_check_branch
      %145 = sbr.rel (%p142) target = $region28
    $region27: #{bottleneck_forward.6} parent=5 // pred_region
      %s146 = ssub.s32 %s10, 1
      %s147 = smul.u32 32, %s15
      %p148 = scmp.lt.s32.totalorder %s147, 63
      %s149 = scalar_select %p148, %s147, 63
      %s150 = smul.addr %s149, 4
      %s151 = scalar_lea.vmem %s0, %s150
      %p152 = pneg %p36
      %p153 = pneg %p33
      %p154 = pneg %p57
      %p155 = pneg %p54
      %p156 = pneg %p83
      %p157 = pneg %p80
      %s158 = smul.u32 32, %s15
      %p159 = scmp.lt.s32.totalorder %s158, 63
      %s160 = scalar_select %p159, %s158, 63
      %s161 = smul.addr %s160, 8
      %s162 = scalar_lea.vmem %s2, %s161
      %p163 = pneg %p109
      %p164 = pneg %p106
      %p165 = scmp.lt.s32.totalorder %s15, 1
      %s166 = scalar_select %p165, %s15, 1
      %s167 = smul.addr %s166, 2
      %s168 = scalar_lea.vmem %s3, %s167
      %s169 = smul.u32 32, %s15
      %p170 = scmp.lt.s32.totalorder %s169, 63
      %s171 = scalar_select %p170, %s169, 63
      %s172 = smul.addr %s171, 4
      %s173 = scalar_lea.vmem %s0, %s172
      %s174 = smul.u32 32, %s15
      %s175 = smul.u32 32, %s15
      %p176 = scmp.lt.s32.totalorder %s175, 63
      %s177 = scalar_select %p176, %s175, 63
      %s178 = smul.addr %s177, 8
      %s179 = scalar_lea.vmem %s2, %s178
      %s180 = smul.u32 32, %s15
      %p181 = scmp.lt.s32.totalorder %s15, 1
      %s182 = scalar_select %p181, %s15, 1
      %s183 = smul.addr %s182, 2
      %s184 = scalar_lea.vmem %s3, %s183
      %v186 = vld [vmem:[%s173] sm:$0xf]
      %v187 = vld [vmem:[%s173 + $0x4] sm:$0xf]
      %v188 = vld [vmem:[%s173 + $0x8] sm:$0xf]
      %v189 = vld [vmem:[%s173 + $0xc] sm:$0xf]
      %v190 = vld [vmem:[%s173 + $0x10] sm:$0xf]
      %v191 = vld [vmem:[%s173 + $0x14] sm:$0xf]
      %v192 = vld [vmem:[%s173 + $0x18] sm:$0xf]
      %v193 = vld [vmem:[%s173 + $0x1c] sm:$0xf]
      %v194 = vld [vmem:[%s173 + $0x20] sm:$0xf]
      %v195 = vld [vmem:[%s173 + $0x24] sm:$0xf]
      %v196 = vld [vmem:[%s173 + $0x28] sm:$0xf]
      %v197 = vld [vmem:[%s173 + $0x2c] sm:$0xf]
      %v198 = vld [vmem:[%s173 + $0x30] sm:$0xf]
      %v199 = vld [vmem:[%s173 + $0x34] sm:$0xf]
      %v200 = vld [vmem:[%s173 + $0x38] sm:$0xf]
      %v201 = vld [vmem:[%s173 + $0x3c] sm:$0xf]
      %v202 = vld [vmem:[%s173 + $0x40] sm:$0xf]
      %v203 = vld [vmem:[%s173 + $0x44] sm:$0xf]
      %v204 = vld [vmem:[%s173 + $0x48] sm:$0xf]
      %v205 = vld [vmem:[%s173 + $0x4c] sm:$0xf]
      %v206 = vld [vmem:[%s173 + $0x50] sm:$0xf]
      %v207 = vld [vmem:[%s173 + $0x54] sm:$0xf]
      %v208 = vld [vmem:[%s173 + $0x58] sm:$0xf]
      %v209 = vld [vmem:[%s173 + $0x5c] sm:$0xf]
      %v210 = vld [vmem:[%s173 + $0x60] sm:$0xf]
      %v211 = vld [vmem:[%s173 + $0x64] sm:$0xf]
      %v212 = vld [vmem:[%s173 + $0x68] sm:$0xf]
      %v213 = vld [vmem:[%s173 + $0x6c] sm:$0xf]
      %v214 = vld [vmem:[%s173 + $0x70] sm:$0xf]
      %v215 = vld [vmem:[%s173 + $0x74] sm:$0xf]
      %v216 = vld [vmem:[%s173 + $0x78] sm:$0xf]
      %v217 = vld [vmem:[%s173 + $0x7c] sm:$0xf]
      %v218 = vld [vmem:[%s1] sm:$0x3]
      %v251 = vunpack.c.l.b16 %v186
      %v252 = vunpack.c.l.b16 %v187
      %v253 = vunpack.c.l.b16 %v188
      %v254 = vunpack.c.l.b16 %v189
      %v255 = vunpack.c.l.b16 %v190
      %v256 = vunpack.c.l.b16 %v191
      %v257 = vunpack.c.l.b16 %v192
      %v258 = vunpack.c.l.b16 %v193
      %v259 = vunpack.c.l.b16 %v194
      %v260 = vunpack.c.l.b16 %v195
      %v261 = vunpack.c.l.b16 %v196
      %v262 = vunpack.c.l.b16 %v197
      %v263 = vunpack.c.l.b16 %v198
      %v264 = vunpack.c.l.b16 %v199
      %v265 = vunpack.c.l.b16 %v200
      %v266 = vunpack.c.l.b16 %v201
      %v267 = vunpack.c.l.b16 %v202
      %v268 = vunpack.c.l.b16 %v203
      %v269 = vunpack.c.l.b16 %v204
      %v270 = vunpack.c.l.b16 %v205
      %v271 = vunpack.c.l.b16 %v206
      %v272 = vunpack.c.l.b16 %v207
      %v273 = vunpack.c.l.b16 %v208
      %v274 = vunpack.c.l.b16 %v209
      %v275 = vunpack.c.l.b16 %v210
      %v276 = vunpack.c.l.b16 %v211
      %v277 = vunpack.c.l.b16 %v212
      %v278 = vunpack.c.l.b16 %v213
      %v279 = vunpack.c.l.b16 %v214
      %v280 = vunpack.c.l.b16 %v215
      %v281 = vunpack.c.l.b16 %v216
      %v282 = vunpack.c.l.b16 %v217
      %v283 = vpack.c.b16 %v252, %v251
      %v284 = vpack.c.b16 %v254, %v253
      %v285 = vpack.c.b16 %v256, %v255
      %v286 = vpack.c.b16 %v258, %v257
      %v287 = vpack.c.b16 %v260, %v259
      %v288 = vpack.c.b16 %v262, %v261
      %v289 = vpack.c.b16 %v264, %v263
      %v290 = vpack.c.b16 %v266, %v265
      %v291 = vpack.c.b16 %v268, %v267
      %v292 = vpack.c.b16 %v270, %v269
      %v293 = vpack.c.b16 %v272, %v271
      %v294 = vpack.c.b16 %v274, %v273
      %v295 = vpack.c.b16 %v276, %v275
      %v296 = vpack.c.b16 %v278, %v277
      %v297 = vpack.c.b16 %v280, %v279
      %v298 = vpack.c.b16 %v282, %v281
      %vm299 = vcmask 31744
      %v301 = vsel %vm299, %v283, 0
      %v304 = vsel %vm299, %v284, 0
      %v307 = vsel %vm299, %v285, 0
      %v310 = vsel %vm299, %v286, 0
      %v313 = vsel %vm299, %v287, 0
      %v316 = vsel %vm299, %v288, 0
      %v319 = vsel %vm299, %v289, 0
      %v322 = vsel %vm299, %v290, 0
      %v325 = vsel %vm299, %v291, 0
      %v328 = vsel %vm299, %v292, 0
      %v331 = vsel %vm299, %v293, 0
      %v334 = vsel %vm299, %v294, 0
      %v337 = vsel %vm299, %v295, 0
      %v340 = vsel %vm299, %v296, 0
      %v343 = vsel %vm299, %v297, 0
      %v346 = vsel %vm299, %v298, 0
      %vm348 = vcmask 1041408
      %v350 = vsel %vm348, %v218, 0
      %352 = vmatprep.subr.bf16.mxu0 0
      %353 = vmatpush1.bf16.msra.mxu0 %v350
      %354 = vmatprep.subr.bf16.mxu0 0
      %355 = vmatpush1.bf16.msra.mxu0 0
      %356 = vmatprep.subr.bf16.mxu0 0
      %357 = vmatpush1.bf16.msra.mxu0 0
      %358 = vmatprep.subr.bf16.mxu0 0
      %359 = vmatpush1.bf16.msra.mxu0 0
      %360 = vmatprep.subr.bf16.mxu0 0
      %361 = vmatpush1.bf16.msra.mxu0 0
      %362 = vmatprep.subr.bf16.mxu0 0
      %363 = vmatpush1.bf16.msra.mxu0 0
      %364 = vmatprep.subr.bf16.mxu0 0
      %365 = vmatpush1.bf16.msra.mxu0 0
      %366 = vmatprep.subr.bf16.mxu0 0
      %367 = vmatpush1.bf16.msra.mxu0 0
      %368 = vmatprep.subr.bf16.mxu0 0
      %369 = vmatpush1.bf16.msra.mxu0 0
      %370 = vmatprep.subr.bf16.mxu0 0
      %371 = vmatpush1.bf16.msra.mxu0 0
      %372 = vmatprep.subr.bf16.mxu0 0
      %373 = vmatpush1.bf16.msra.mxu0 0
      %374 = vmatprep.subr.bf16.mxu0 0
      %375 = vmatpush1.bf16.msra.mxu0 0
      %376 = vmatprep.subr.bf16.mxu0 0
      %377 = vmatpush1.bf16.msra.mxu0 0
      %378 = vmatprep.subr.bf16.mxu0 0
      %379 = vmatpush1.bf16.msra.mxu0 0
      %380 = vmatprep.subr.bf16.mxu0 0
      %381 = vmatpush1.bf16.msra.mxu0 0
      %382 = vmatprep.subr.bf16.mxu0 0
      %383 = vmatpush1.bf16.msra.mxu0 0
      %384 = vmatprep.mubr.bf16.mxu0 0
      %385 = vmatmul.mubr.bf16.gmra.mrb[0].mxu0 %v301
      %v386 = vpop.f32.mrb[0].mxu0
      %v387 = vadd.f32 0.0, %v386
      %v388 = vpop.f32.mrb[0].mxu0
      %v389 = vpop.f32.mrb[0].mxu0
      %v390 = vadd.f32 0.0, %v389
      %v391 = vpop.f32.mrb[0].mxu0
      %392 = vmatprep.mubr.bf16.mxu0 0
      %393 = vmatmul.mubr.bf16.gmra.mrb[0].mxu0 %v304
      %v394 = vpop.f32.mrb[0].mxu0
      %v395 = vadd.f32 0.0, %v394
      %v396 = vpop.f32.mrb[0].mxu0
      %v397 = vpop.f32.mrb[0].mxu0
      %v398 = vadd.f32 0.0, %v397
      %v399 = vpop.f32.mrb[0].mxu0
      %400 = vmatprep.mubr.bf16.mxu0 0
      %401 = vmatmul.mubr.bf16.gmra.mrb[0].mxu0 %v307
      %v402 = vpop.f32.mrb[0].mxu0
      %v403 = vadd.f32 0.0, %v402
      %v404 = vpop.f32.mrb[0].mxu0
      %v405 = vpop.f32.mrb[0].mxu0
      %v406 = vadd.f32 0.0, %v405
      %v407 = vpop.f32.mrb[0].mxu0
      %408 = vmatprep.mubr.bf16.mxu0 0
      %409 = vmatmul.mubr.bf16.gmra.mrb[0].mxu0 %v310
      %v410 = vpop.f32.mrb[0].mxu0
      %v411 = vadd.f32 0.0, %v410
      %v412 = vpop.f32.mrb[0].mxu0
      %v413 = vpop.f32.mrb[0].mxu0
      %v414 = vadd.f32 0.0, %v413
      %v415 = vpop.f32.mrb[0].mxu0
      %416 = vmatprep.mubr.bf16.mxu0 0
      %417 = vmatmul.mubr.bf16.gmra.mrb[0].mxu0 %v313
      %v418 = vpop.f32.mrb[0].mxu0
      %v419 = vadd.f32 0.0, %v418
      %v420 = vpop.f32.mrb[0].mxu0
      %v421 = vpop.f32.mrb[0].mxu0
      %v422 = vadd.f32 0.0, %v421
      %v423 = vpop.f32.mrb[0].mxu0
      %424 = vmatprep.mubr.bf16.mxu0 0
      %425 = vmatmul.mubr.bf16.gmra.mrb[0].mxu0 %v316
      %v426 = vpop.f32.mrb[0].mxu0
      %v427 = vadd.f32 0.0, %v426
      %v428 = vpop.f32.mrb[0].mxu0
      %v429 = vpop.f32.mrb[0].mxu0
      %v430 = vadd.f32 0.0, %v429
      %v431 = vpop.f32.mrb[0].mxu0
      %432 = vmatprep.mubr.bf16.mxu0 0
      %433 = vmatmul.mubr.bf16.gmra.mrb[0].mxu0 %v319
      %v434 = vpop.f32.mrb[0].mxu0
      %v435 = vadd.f32 0.0, %v434
      %v436 = vpop.f32.mrb[0].mxu0
      %v437 = vpop.f32.mrb[0].mxu0
      %v438 = vadd.f32 0.0, %v437
      %v439 = vpop.f32.mrb[0].mxu0
      %440 = vmatprep.mubr.bf16.mxu0 0
      %441 = vmatmul.mubr.bf16.gmra.mrb[0].mxu0 %v322
      %v442 = vpop.f32.mrb[0].mxu0
      %v443 = vadd.f32 0.0, %v442
      %v444 = vpop.f32.mrb[0].mxu0
      %v445 = vpop.f32.mrb[0].mxu0
      %v446 = vadd.f32 0.0, %v445
      %v447 = vpop.f32.mrb[0].mxu0
      %448 = vmatprep.mubr.bf16.mxu0 0
      %449 = vmatmul.mubr.bf16.gmra.mrb[0].mxu0 %v325
      %v450 = vpop.f32.mrb[0].mxu0
      %v451 = vadd.f32 0.0, %v450
      %v452 = vpop.f32.mrb[0].mxu0
      %v453 = vpop.f32.mrb[0].mxu0
      %v454 = vadd.f32 0.0, %v453
      %v455 = vpop.f32.mrb[0].mxu0
      %456 = vmatprep.mubr.bf16.mxu0 0
      %457 = vmatmul.mubr.bf16.gmra.mrb[0].mxu0 %v328
      %v458 = vpop.f32.mrb[0].mxu0
      %v459 = vadd.f32 0.0, %v458
      %v460 = vpop.f32.mrb[0].mxu0
      %v461 = vpop.f32.mrb[0].mxu0
      %v462 = vadd.f32 0.0, %v461
      %v463 = vpop.f32.mrb[0].mxu0
      %464 = vmatprep.mubr.bf16.mxu0 0
      %465 = vmatmul.mubr.bf16.gmra.mrb[0].mxu0 %v331
      %v466 = vpop.f32.mrb[0].mxu0
      %v467 = vadd.f32 0.0, %v466
      %v468 = vpop.f32.mrb[0].mxu0
      %v469 = vpop.f32.mrb[0].mxu0
      %v470 = vadd.f32 0.0, %v469
      %v471 = vpop.f32.mrb[0].mxu0
      %472 = vmatprep.mubr.bf16.mxu0 0
      %473 = vmatmul.mubr.bf16.gmra.mrb[0].mxu0 %v334
      %v474 = vpop.f32.mrb[0].mxu0
      %v475 = vadd.f32 0.0, %v474
      %v476 = vpop.f32.mrb[0].mxu0
      %v477 = vpop.f32.mrb[0].mxu0
      %v478 = vadd.f32 0.0, %v477
      %v479 = vpop.f32.mrb[0].mxu0
      %480 = vmatprep.mubr.bf16.mxu0 0
      %481 = vmatmul.mubr.bf16.gmra.mrb[0].mxu0 %v337
      %v482 = vpop.f32.mrb[0].mxu0
      %v483 = vadd.f32 0.0, %v482
      %v484 = vpop.f32.mrb[0].mxu0
      %v485 = vpop.f32.mrb[0].mxu0
      %v486 = vadd.f32 0.0, %v485
      %v487 = vpop.f32.mrb[0].mxu0
      %488 = vmatprep.mubr.bf16.mxu0 0
      %489 = vmatmul.mubr.bf16.gmra.mrb[0].mxu0 %v340
      %v490 = vpop.f32.mrb[0].mxu0
      %v491 = vadd.f32 0.0, %v490
      %v492 = vpop.f32.mrb[0].mxu0
      %v493 = vpop.f32.mrb[0].mxu0
      %v494 = vadd.f32 0.0, %v493
      %v495 = vpop.f32.mrb[0].mxu0
      %496 = vmatprep.mubr.bf16.mxu0 0
      %497 = vmatmul.mubr.bf16.gmra.mrb[0].mxu0 %v343
      %v498 = vpop.f32.mrb[0].mxu0
      %v499 = vadd.f32 0.0, %v498
      %v500 = vpop.f32.mrb[0].mxu0
      %v501 = vpop.f32.mrb[0].mxu0
      %v502 = vadd.f32 0.0, %v501
      %v503 = vpop.f32.mrb[0].mxu0
      %504 = vmatprep.mubr.bf16.mxu0 0
      %505 = vmatmul.mubr.bf16.gmra.mrb[0].mxu0 %v346
      %v506 = vpop.f32.mrb[0].mxu0
      %v507 = vadd.f32 0.0, %v506
      %v508 = vpop.f32.mrb[0].mxu0
      %v509 = vpop.f32.mrb[0].mxu0
      %v510 = vadd.f32 0.0, %v509
      %v511 = vpop.f32.mrb[0].mxu0
      %512 = vdwg.mxu0
      %513 = vst.msk [vmem:[%s179] sm:$0xff] %vm299, %v387
      %514 = vst.msk [vmem:[%s179 + $0x8] sm:$0xff] %vm299, %v390
      %515 = vst.msk [vmem:[%s179 + $0x10] sm:$0xff] %vm299, %v395
      %516 = vst.msk [vmem:[%s179 + $0x18] sm:$0xff] %vm299, %v398
      %517 = vst.msk [vmem:[%s179 + $0x20] sm:$0xff] %vm299, %v403
      %518 = vst.msk [vmem:[%s179 + $0x28] sm:$0xff] %vm299, %v406
      %519 = vst.msk [vmem:[%s179 + $0x30] sm:$0xff] %vm299, %v411
      %520 = vst.msk [vmem:[%s179 + $0x38] sm:$0xff] %vm299, %v414
      %521 = vst.msk [vmem:[%s179 + $0x40] sm:$0xff] %vm299, %v419
      %522 = vst.msk [vmem:[%s179 + $0x48] sm:$0xff] %vm299, %v422
      %523 = vst.msk [vmem:[%s179 + $0x50] sm:$0xff] %vm299, %v427
      %524 = vst.msk [vmem:[%s179 + $0x58] sm:$0xff] %vm299, %v430
      %525 = vst.msk [vmem:[%s179 + $0x60] sm:$0xff] %vm299, %v435
      %526 = vst.msk [vmem:[%s179 + $0x68] sm:$0xff] %vm299, %v438
      %527 = vst.msk [vmem:[%s179 + $0x70] sm:$0xff] %vm299, %v443
      %528 = vst.msk [vmem:[%s179 + $0x78] sm:$0xff] %vm299, %v446
      %529 = vst.msk [vmem:[%s179 + $0x80] sm:$0xff] %vm299, %v451
      %530 = vst.msk [vmem:[%s179 + $0x88] sm:$0xff] %vm299, %v454
      %531 = vst.msk [vmem:[%s179 + $0x90] sm:$0xff] %vm299, %v459
      %532 = vst.msk [vmem:[%s179 + $0x98] sm:$0xff] %vm299, %v462
      %533 = vst.msk [vmem:[%s179 + $0xa0] sm:$0xff] %vm299, %v467
      %534 = vst.msk [vmem:[%s179 + $0xa8] sm:$0xff] %vm299, %v470
      %535 = vst.msk [vmem:[%s179 + $0xb0] sm:$0xff] %vm299, %v475
      %536 = vst.msk [vmem:[%s179 + $0xb8] sm:$0xff] %vm299, %v478
      %537 = vst.msk [vmem:[%s179 + $0xc0] sm:$0xff] %vm299, %v483
      %538 = vst.msk [vmem:[%s179 + $0xc8] sm:$0xff] %vm299, %v486
      %539 = vst.msk [vmem:[%s179 + $0xd0] sm:$0xff] %vm299, %v491
      %540 = vst.msk [vmem:[%s179 + $0xd8] sm:$0xff] %vm299, %v494
      %541 = vst.msk [vmem:[%s179 + $0xe0] sm:$0xff] %vm299, %v499
      %542 = vst.msk [vmem:[%s179 + $0xe8] sm:$0xff] %vm299, %v502
      %543 = vst.msk [vmem:[%s179 + $0xf0] sm:$0xff] %vm299, %v507
      %544 = vst.msk [vmem:[%s179 + $0xf8] sm:$0xff] %vm299, %v510
      %v545 = vsel %vm299, %v387, 0.0
      %v546 = vsel %vm299, %v390, 0.0
      %v547 = vadd.f32 %v545, %v546
      %v548 = vsel %vm299, %v395, 0.0
      %v549 = vadd.f32 %v547, %v548
      %v550 = vsel %vm299, %v398, 0.0
      %v551 = vadd.f32 %v549, %v550
      %v552 = vsel %vm299, %v403, 0.0
      %v553 = vadd.f32 %v551, %v552
      %v554 = vsel %vm299, %v406, 0.0
      %v555 = vadd.f32 %v553, %v554
      %v556 = vsel %vm299, %v411, 0.0
      %v557 = vadd.f32 %v555, %v556
      %v558 = vsel %vm299, %v414, 0.0
      %v559 = vadd.f32 %v557, %v558
      %v560 = vsel %vm299, %v419, 0.0
      %v561 = vadd.f32 %v559, %v560
      %v562 = vsel %vm299, %v422, 0.0
      %v563 = vadd.f32 %v561, %v562
      %v564 = vsel %vm299, %v427, 0.0
      %v565 = vadd.f32 %v563, %v564
      %v566 = vsel %vm299, %v430, 0.0
      %v567 = vadd.f32 %v565, %v566
      %v568 = vsel %vm299, %v435, 0.0
      %v569 = vadd.f32 %v567, %v568
      %v570 = vsel %vm299, %v438, 0.0
      %v571 = vadd.f32 %v569, %v570
      %v572 = vsel %vm299, %v443, 0.0
      %v573 = vadd.f32 %v571, %v572
      %v574 = vsel %vm299, %v446, 0.0
      %v575 = vadd.f32 %v573, %v574
      %v576 = vsel %vm299, %v451, 0.0
      %v577 = vadd.f32 %v575, %v576
      %v578 = vsel %vm299, %v454, 0.0
      %v579 = vadd.f32 %v577, %v578
      %v580 = vsel %vm299, %v459, 0.0
      %v581 = vadd.f32 %v579, %v580
      %v582 = vsel %vm299, %v462, 0.0
      %v583 = vadd.f32 %v581, %v582
      %v584 = vsel %vm299, %v467, 0.0
      %v585 = vadd.f32 %v583, %v584
      %v586 = vsel %vm299, %v470, 0.0
      %v587 = vadd.f32 %v585, %v586
      %v588 = vsel %vm299, %v475, 0.0
      %v589 = vadd.f32 %v587, %v588
      %v590 = vsel %vm299, %v478, 0.0
      %v591 = vadd.f32 %v589, %v590
      %v592 = vsel %vm299, %v483, 0.0
      %v593 = vadd.f32 %v591, %v592
      %v594 = vsel %vm299, %v486, 0.0
      %v595 = vadd.f32 %v593, %v594
      %v596 = vsel %vm299, %v491, 0.0
      %v597 = vadd.f32 %v595, %v596
      %v598 = vsel %vm299, %v494, 0.0
      %v599 = vadd.f32 %v597, %v598
      %v600 = vsel %vm299, %v499, 0.0
      %v601 = vadd.f32 %v599, %v600
      %v602 = vsel %vm299, %v502, 0.0
      %v603 = vadd.f32 %v601, %v602
      %v604 = vsel %vm299, %v507, 0.0
      %v605 = vadd.f32 %v603, %v604
      %v606 = vsel %vm299, %v510, 0.0
      %v607 = vadd.f32 %v605, %v606
      %v608 = vrot.slane %v607, 4
      %v609 = vadd.f32 %v607, %v608
      %v610 = vrot.slane %v609, 2
      %v611 = vadd.f32 %v609, %v610
      %v612 = vrot.slane %v611, 1
      %v613 = vadd.f32 %v611, %v612
      %vm614 = vcmask 24576
      %615 = vst.msk [vmem:[%s184] sm:$0x1] %vm614, %v613
      %v616 = vmul.f32 %v387, %v387
      %v617 = vmul.f32 %v390, %v390
      %v618 = vmul.f32 %v395, %v395
      %v619 = vmul.f32 %v398, %v398
      %v620 = vmul.f32 %v403, %v403
      %v621 = vmul.f32 %v406, %v406
      %v622 = vmul.f32 %v411, %v411
      %v623 = vmul.f32 %v414, %v414
      %v624 = vmul.f32 %v419, %v419
      %v625 = vmul.f32 %v422, %v422
      %v626 = vmul.f32 %v427, %v427
      %v627 = vmul.f32 %v430, %v430
      %v628 = vmul.f32 %v435, %v435
      %v629 = vmul.f32 %v438, %v438
      %v630 = vmul.f32 %v443, %v443
      %v631 = vmul.f32 %v446, %v446
      %v632 = vmul.f32 %v451, %v451
      %v633 = vmul.f32 %v454, %v454
      %v634 = vmul.f32 %v459, %v459
      %v635 = vmul.f32 %v462, %v462
      %v636 = vmul.f32 %v467, %v467
      %v637 = vmul.f32 %v470, %v470
      %v638 = vmul.f32 %v475, %v475
      %v639 = vmul.f32 %v478, %v478
      %v640 = vmul.f32 %v483, %v483
      %v641 = vmul.f32 %v486, %v486
      %v642 = vmul.f32 %v491, %v491
      %v643 = vmul.f32 %v494, %v494
      %v644 = vmul.f32 %v499, %v499
      %v645 = vmul.f32 %v502, %v502
      %v646 = vmul.f32 %v507, %v507
      %v647 = vmul.f32 %v510, %v510
      %v648 = vsel %vm299, %v616, 0.0
      %v649 = vsel %vm299, %v617, 0.0
      %v650 = vadd.f32 %v648, %v649
      %v651 = vsel %vm299, %v618, 0.0
      %v652 = vadd.f32 %v650, %v651
      %v653 = vsel %vm299, %v619, 0.0
      %v654 = vadd.f32 %v652, %v653
      %v655 = vsel %vm299, %v620, 0.0
      %v656 = vadd.f32 %v654, %v655
      %v657 = vsel %vm299, %v621, 0.0
      %v658 = vadd.f32 %v656, %v657
      %v659 = vsel %vm299, %v622, 0.0
      %v660 = vadd.f32 %v658, %v659
      %v661 = vsel %vm299, %v623, 0.0
      %v662 = vadd.f32 %v660, %v661
      %v663 = vsel %vm299, %v624, 0.0
      %v664 = vadd.f32 %v662, %v663
      %v665 = vsel %vm299, %v625, 0.0
      %v666 = vadd.f32 %v664, %v665
      %v667 = vsel %vm299, %v626, 0.0
      %v668 = vadd.f32 %v666, %v667
      %v669 = vsel %vm299, %v627, 0.0
      %v670 = vadd.f32 %v668, %v669
      %v671 = vsel %vm299, %v628, 0.0
      %v672 = vadd.f32 %v670, %v671
      %v673 = vsel %vm299, %v629, 0.0
      %v674 = vadd.f32 %v672, %v673
      %v675 = vsel %vm299, %v630, 0.0
      %v676 = vadd.f32 %v674, %v675
      %v677 = vsel %vm299, %v631, 0.0
      %v678 = vadd.f32 %v676, %v677
      %v679 = vsel %vm299, %v632, 0.0
      %v680 = vadd.f32 %v678, %v679
      %v681 = vsel %vm299, %v633, 0.0
      %v682 = vadd.f32 %v680, %v681
      %v683 = vsel %vm299, %v634, 0.0
      %v684 = vadd.f32 %v682, %v683
      %v685 = vsel %vm299, %v635, 0.0
      %v686 = vadd.f32 %v684, %v685
      %v687 = vsel %vm299, %v636, 0.0
      %v688 = vadd.f32 %v686, %v687
      %v689 = vsel %vm299, %v637, 0.0
      %v690 = vadd.f32 %v688, %v689
      %v691 = vsel %vm299, %v638, 0.0
      %v692 = vadd.f32 %v690, %v691
      %v693 = vsel %vm299, %v639, 0.0
      %v694 = vadd.f32 %v692, %v693
      %v695 = vsel %vm299, %v640, 0.0
      %v696 = vadd.f32 %v694, %v695
      %v697 = vsel %vm299, %v641, 0.0
      %v698 = vadd.f32 %v696, %v697
      %v699 = vsel %vm299, %v642, 0.0
      %v700 = vadd.f32 %v698, %v699
      %v701 = vsel %vm299, %v643, 0.0
      %v702 = vadd.f32 %v700, %v701
      %v703 = vsel %vm299, %v644, 0.0
      %v704 = vadd.f32 %v702, %v703
      %v705 = vsel %vm299, %v645, 0.0
      %v706 = vadd.f32 %v704, %v705
      %v707 = vsel %vm299, %v646, 0.0
      %v708 = vadd.f32 %v706, %v707
      %v709 = vsel %vm299, %v647, 0.0
      %v710 = vadd.f32 %v708, %v709
      %v711 = vrot.slane %v710, 4
      %v712 = vadd.f32 %v710, %v711
      %v713 = vrot.slane %v712, 2
      %v714 = vadd.f32 %v712, %v713
      %v715 = vrot.slane %v714, 1
      %v716 = vadd.f32 %v714, %v715
      %717 = vst.msk [vmem:[%s184 + $0x1] sm:$0x1] %vm614, %v716
      %s718 = smul.u32 32, %s15
      %p719 = scmp.lt.s32.totalorder %s718, 63
      %s720 = scalar_select %p719, %s718, 63
      %s721 = smul.addr %s720, 8
      %s722 = scalar_lea.vmem %s2, %s721
      %p723 = scmp.lt.s32.totalorder %s15, 1
      %s724 = scalar_select %p723, %s15, 1
      %s725 = smul.addr %s724, 2
      %s726 = scalar_lea.vmem %s3, %s725
      // Predicated region
      $region29: #{bottleneck_forward.6} parent=27 // pred_check
        %p727 = pneg %p80
      $region30: #{bottleneck_forward.6} parent=27 // pred_check_branch
        %729 = sbr.rel (%p727) target = $region32
      $region31: #{bottleneck_forward.6} parent=27 // pred_region
        %s730 = smul.u32 32, %s15
      $region32: #{bottleneck_forward.6} parent=27 // pred_fallthru
        _
      // Predicated region
      $region33: #{bottleneck_forward.6} parent=27 // pred_check
        %p731 = pneg %p106
      $region34: #{bottleneck_forward.6} parent=27 // pred_check_branch
        %733 = sbr.rel (%p731) target = $region36
      $region35: #{bottleneck_forward.6} parent=27 // pred_region
        _
      $region36: #{bottleneck_forward.6} parent=27 // pred_fallthru
        _
    $region28: #{bottleneck_forward.6} parent=5 // pred_fallthru
      _
    %p734 = scmp.le.s32.totalorder 2, %s10
    // Predicated region
    $region37: #{bottleneck_forward.6} parent=5 // pred_check
      %p735 = pneg %p734
    $region38: #{bottleneck_forward.6} parent=5 // pred_check_branch
      %737 = sbr.rel (%p735) target = $region40
    $region39: #{bottleneck_forward.6} parent=5 // pred_region
      %s738 = ssub.s32 %s10, 2
      // Predicated region
      $region41: #{bottleneck_forward.6} parent=39 // pred_check
        %p739 = pneg %p86
      $region42: #{bottleneck_forward.6} parent=39 // pred_check_branch
        %741 = sbr.rel (%p739) target = $region44
      $region43: #{bottleneck_forward.6} parent=39 // pred_region
        %s742 = smul.u32 32, %s16
        %p743 = scmp.lt.s32.totalorder %s742, 63
        %s744 = scalar_select %p743, %s742, 63
        %s745 = smul.addr %s744, 8
        %s746 = scalar_lea.vmem %s2, %s745
      $region44: #{bottleneck_forward.6} parent=39 // pred_fallthru
        _
      // Predicated region
      $region45: #{bottleneck_forward.6} parent=39 // pred_check
        %p747 = pneg %p112
      $region46: #{bottleneck_forward.6} parent=39 // pred_check_branch
        %749 = sbr.rel (%p747) target = $region48
      $region47: #{bottleneck_forward.6} parent=39 // pred_region
        %p750 = scmp.lt.s32.totalorder %s16, 1
        %s751 = scalar_select %p750, %s16, 1
        %s752 = smul.addr %s751, 2
        %s753 = scalar_lea.vmem %s3, %s752
      $region48: #{bottleneck_forward.6} parent=39 // pred_fallthru
        _
    $region40: #{bottleneck_forward.6} parent=5 // pred_fallthru
      _
  $region6: #{bottleneck_forward.6} parent=0 // loop_footer
    %s14 = sadd.s32 1, %s10
  $region7: #{bottleneck_forward.6} parent=0 // loop_footer_branch
    %9 = sbr.rel target = $region3
  $region8: #{bottleneck_forward.6} parent=0 // loop_exit
    _

// kernel: bottleneck_forward.11
$region0: #{bottleneck_forward.11}
  #allocation0 [shape = 'u32[]', space=smem, size = 0x4, offset = 0x4, fixed_abs, tag = 'smem constant byte address 0x4 - core index']
  #allocation1 [shape = 'u32[144,128]{1,0:T(1,128)}', space=vmem, size = 0x12000, scoped, tag = 'internal scratch']
  %s0 = inlined_call_operand.vmem [shape: f32[512,16], index: 0, kind: input, shape index: {}]
  %s1 = inlined_call_operand.vmem [shape: f32[1,16], index: 1, kind: input, shape index: {}]
  %s2 = inlined_call_operand.vmem [shape: f32[1,16], index: 2, kind: input, shape index: {}]
  %s3 = inlined_call_operand.vmem [shape: f32[512,16], index: 3, kind: input, shape index: {}]
  %s4 = inlined_call_operand.vmem [shape: f32[1,16], index: 4, kind: input, shape index: {}]
  %s5 = inlined_call_operand.vmem [shape: f32[1,16], index: 5, kind: input, shape index: {}]
  %s6 = inlined_call_operand.vmem [shape: f32[512,16], index: 6, kind: output, shape index: {}]
  %s7 = sld [smem:[#allocation0]]
  $region57: #{bottleneck_forward.11} parent=0
    _
  %s9 = ssub.s32 1, %s7
  %s10 = scalar_select 0, %s9, %s7
  loop: start=0, step=1, limit=4
  $region2: #{bottleneck_forward.11} parent=0 // loop_pre_header
    _
  $region3: #{bottleneck_forward.11} parent=0 // loop_header
    %s12 = sphi 0, %s16
    %p13 = scmp.ge.s32.totalorder %s12, 4
    %s22 = sphi 0, %s24
    %s25 = sphi 0, %s22
    %s26 = sphi 0, %s25
    %s42 = sphi 0, %s26
    %s46 = sphi 0, %s46
    %s48 = sphi 0, %s46
    %s49 = sphi 0, %s48
    %s63 = sphi 0, %s49
    %s67 = sphi 0, %s67
    %s69 = sphi 0, %s67
    %s70 = sphi 0, %s69
    %s84 = sphi 0, %s70
    %s90 = sphi 0, %s92
    %s93 = sphi 0, %s90
    %s94 = sphi 0, %s93
    %s110 = sphi 0, %s94
    %s114 = sphi 0, %s114
    %s116 = sphi 0, %s114
    %s117 = sphi 0, %s116
    %s131 = sphi 0, %s117
    %s135 = sphi 0, %s135
    %s137 = sphi 0, %s135
    %s138 = sphi 0, %s137
    %s152 = sphi 0, %s138
    %s158 = sphi 0, %s160
    %s161 = sphi 0, %s158
    %s162 = sphi 0, %s161
    %s178 = sphi 0, %s162
  $region4: #{bottleneck_forward.11} parent=0 // loop_header_branch
    %15 = sbr.rel (%p13) target = $region8
  $region5: #{bottleneck_forward.11} parent=0 // loop_body
    %s17 = ssub.s32 %s12, 1
    %s18 = ssub.s32 %s12, 2
    %s19 = sadd.s32 %s12, 1
    %s20 = ssub.s32 %s12, %s19
    %p21 = scmp.eq.s32.totalorder %s20, 0
    %s23 = sadd.s32 %s22, 1
    %s24 = scalar_select %p21, %s22, %s23
    %p27 = pneg %p21
    %p28 = scmp.eq.s32.totalorder %s12, 1
    %p29 = por %p27, %p28
    %p30 = scmp.ne.s32.totalorder %s22, %s25
    %p31 = scmp.eq.s32.totalorder %s12, 0
    %p32 = por %p30, %p31
    %p33 = scmp.ne.s32.totalorder %s22, %s25
    %p34 = scmp.eq.s32.totalorder %s17, 1
    %p35 = por %p33, %p34
    %p36 = scmp.ne.s32.totalorder %s25, %s26
    %p37 = scmp.eq.s32.totalorder %s17, 0
    %p38 = por %p36, %p37
    %p39 = scmp.ne.s32.totalorder %s25, %s26
    %p40 = scmp.eq.s32.totalorder %s18, 1
    %p41 = por %p39, %p40
    %p43 = scmp.ne.s32.totalorder %s26, %s42
    %p44 = scmp.eq.s32.totalorder %s18, 0
    %p45 = por %p43, %p44
    %s47 = sadd.s32 %s46, 1
    %p50 = scmp.eq.s32.totalorder %s12, 1
    %p51 = scmp.ne.s32.totalorder %s46, %s48
    %p52 = scmp.eq.s32.totalorder %s12, 0
    %p53 = por %p51, %p52
    %p54 = scmp.ne.s32.totalorder %s46, %s48
    %p55 = scmp.eq.s32.totalorder %s17, 1
    %p56 = por %p54, %p55
    %p57 = scmp.ne.s32.totalorder %s48, %s49
    %p58 = scmp.eq.s32.totalorder %s17, 0
    %p59 = por %p57, %p58
    %p60 = scmp.ne.s32.totalorder %s48, %s49
    %p61 = scmp.eq.s32.totalorder %s18, 1
    %p62 = por %p60, %p61
    %p64 = scmp.ne.s32.totalorder %s49, %s63
    %p65 = scmp.eq.s32.totalorder %s18, 0
    %p66 = por %p64, %p65
    %s68 = sadd.s32 %s67, 1
    %p71 = scmp.eq.s32.totalorder %s12, 1
    %p72 = scmp.ne.s32.totalorder %s67, %s69
    %p73 = scmp.eq.s32.totalorder %s12, 0
    %p74 = por %p72, %p73
    %p75 = scmp.ne.s32.totalorder %s67, %s69
    %p76 = scmp.eq.s32.totalorder %s17, 1
    %p77 = por %p75, %p76
    %p78 = scmp.ne.s32.totalorder %s69, %s70
    %p79 = scmp.eq.s32.totalorder %s17, 0
    %p80 = por %p78, %p79
    %p81 = scmp.ne.s32.totalorder %s69, %s70
    %p82 = scmp.eq.s32.totalorder %s18, 1
    %p83 = por %p81, %p82
    %p85 = scmp.ne.s32.totalorder %s70, %s84
    %p86 = scmp.eq.s32.totalorder %s18, 0
    %p87 = por %p85, %p86
    %s88 = ssub.s32 %s12, %s19
    %p89 = scmp.eq.s32.totalorder %s88, 0
    %s91 = sadd.s32 %s90, 1
    %s92 = scalar_select %p89, %s90, %s91
    %p95 = pneg %p89
    %p96 = scmp.eq.s32.totalorder %s12, 1
    %p97 = por %p95, %p96
    %p98 = scmp.ne.s32.totalorder %s90, %s93
    %p99 = scmp.eq.s32.totalorder %s12, 0
    %p100 = por %p98, %p99
    %p101 = scmp.ne.s32.totalorder %s90, %s93
    %p102 = scmp.eq.s32.totalorder %s17, 1
    %p103 = por %p101, %p102
    %p104 = scmp.ne.s32.totalorder %s93, %s94
    %p105 = scmp.eq.s32.totalorder %s17, 0
    %p106 = por %p104, %p105
    %p107 = scmp.ne.s32.totalorder %s93, %s94
    %p108 = scmp.eq.s32.totalorder %s18, 1
    %p109 = por %p107, %p108
    %p111 = scmp.ne.s32.totalorder %s94, %s110
    %p112 = scmp.eq.s32.totalorder %s18, 0
    %p113 = por %p111, %p112
    %s115 = sadd.s32 %s114, 1
    %p118 = scmp.eq.s32.totalorder %s12, 1
    %p119 = scmp.ne.s32.totalorder %s114, %s116
    %p120 = scmp.eq.s32.totalorder %s12, 0
    %p121 = por %p119, %p120
    %p122 = scmp.ne.s32.totalorder %s114, %s116
    %p123 = scmp.eq.s32.totalorder %s17, 1
    %p124 = por %p122, %p123
    %p125 = scmp.ne.s32.totalorder %s116, %s117
    %p126 = scmp.eq.s32.totalorder %s17, 0
    %p127 = por %p125, %p126
    %p128 = scmp.ne.s32.totalorder %s116, %s117
    %p129 = scmp.eq.s32.totalorder %s18, 1
    %p130 = por %p128, %p129
    %p132 = scmp.ne.s32.totalorder %s117, %s131
    %p133 = scmp.eq.s32.totalorder %s18, 0
    %p134 = por %p132, %p133
    %s136 = sadd.s32 %s135, 1
    %p139 = scmp.eq.s32.totalorder %s12, 1
    %p140 = scmp.ne.s32.totalorder %s135, %s137
    %p141 = scmp.eq.s32.totalorder %s12, 0
    %p142 = por %p140, %p141
    %p143 = scmp.ne.s32.totalorder %s135, %s137
    %p144 = scmp.eq.s32.totalorder %s17, 1
    %p145 = por %p143, %p144
    %p146 = scmp.ne.s32.totalorder %s137, %s138
    %p147 = scmp.eq.s32.totalorder %s17, 0
    %p148 = por %p146, %p147
    %p149 = scmp.ne.s32.totalorder %s137, %s138
    %p150 = scmp.eq.s32.totalorder %s18, 1
    %p151 = por %p149, %p150
    %p153 = scmp.ne.s32.totalorder %s138, %s152
    %p154 = scmp.eq.s32.totalorder %s18, 0
    %p155 = por %p153, %p154
    %s156 = ssub.s32 %s12, %s19
    %p157 = scmp.eq.s32.totalorder %s156, 0
    %s159 = sadd.s32 %s158, 1
    %s160 = scalar_select %p157, %s158, %s159
    %p163 = pneg %p157
    %p164 = scmp.eq.s32.totalorder %s12, 1
    %p165 = por %p163, %p164
    %p166 = scmp.ne.s32.totalorder %s158, %s161
    %p167 = scmp.eq.s32.totalorder %s12, 0
    %p168 = por %p166, %p167
    %p169 = scmp.ne.s32.totalorder %s158, %s161
    %p170 = scmp.eq.s32.totalorder %s17, 1
    %p171 = por %p169, %p170
    %p172 = scmp.ne.s32.totalorder %s161, %s162
    %p173 = scmp.eq.s32.totalorder %s17, 0
    %p174 = por %p172, %p173
    %p175 = scmp.ne.s32.totalorder %s161, %s162
    %p176 = scmp.eq.s32.totalorder %s18, 1
    %p177 = por %p175, %p176
    %p179 = scmp.ne.s32.totalorder %s162, %s178
    %p180 = scmp.eq.s32.totalorder %s18, 0
    %p181 = por %p179, %p180
    %p182 = scmp.le.s32.totalorder 1, %s12
    %p183 = scmp.lt.s32.totalorder %s12, 3
    %p184 = pnand %p182, %p183
    %p185 = pneg %p184
    // Predicated region
    $region9: #{bottleneck_forward.11} parent=5 // pred_check
      _
    $region10: #{bottleneck_forward.11} parent=5 // pred_check_branch
      %187 = sbr.rel (%p184) target = $region12
    $region11: #{bottleneck_forward.11} parent=5 // pred_region
      %s188 = ssub.s32 %s12, 1
      // Predicated region
      $region13: #{bottleneck_forward.11} parent=11 // pred_check
        %p189 = pneg %p59
      $region14: #{bottleneck_forward.11} parent=11 // pred_check_branch
        %191 = sbr.rel (%p189) target = $region16
      $region15: #{bottleneck_forward.11} parent=11 // pred_region
        _
      $region16: #{bottleneck_forward.11} parent=11 // pred_fallthru
        _
      // Predicated region
      $region17: #{bottleneck_forward.11} parent=11 // pred_check
        %p192 = pneg %p80
      $region18: #{bottleneck_forward.11} parent=11 // pred_check_branch
        %194 = sbr.rel (%p192) target = $region20
      $region19: #{bottleneck_forward.11} parent=11 // pred_region
        _
      $region20: #{bottleneck_forward.11} parent=11 // pred_fallthru
        _
      // Predicated region
      $region21: #{bottleneck_forward.11} parent=11 // pred_check
        %p195 = pneg %p127
      $region22: #{bottleneck_forward.11} parent=11 // pred_check_branch
        %197 = sbr.rel (%p195) target = $region24
      $region23: #{bottleneck_forward.11} parent=11 // pred_region
        _
      $region24: #{bottleneck_forward.11} parent=11 // pred_fallthru
        _
      // Predicated region
      $region25: #{bottleneck_forward.11} parent=11 // pred_check
        %p198 = pneg %p148
      $region26: #{bottleneck_forward.11} parent=11 // pred_check_branch
        %200 = sbr.rel (%p198) target = $region28
      $region27: #{bottleneck_forward.11} parent=11 // pred_region
        _
      $region28: #{bottleneck_forward.11} parent=11 // pred_fallthru
        _
    $region12: #{bottleneck_forward.11} parent=5 // pred_fallthru
      _
    %p201 = scmp.lt.s32.totalorder %s12, 2
    // Predicated region
    $region29: #{bottleneck_forward.11} parent=5 // pred_check
      %p202 = pneg %p201
    $region30: #{bottleneck_forward.11} parent=5 // pred_check_branch
      %204 = sbr.rel (%p202) target = $region32
    $region31: #{bottleneck_forward.11} parent=5 // pred_region
      // Predicated region
      $region33: #{bottleneck_forward.11} parent=31 // pred_check
        %p205 = pneg %p32
      $region34: #{bottleneck_forward.11} parent=31 // pred_check_branch
        %207 = sbr.rel (%p205) target = $region36
      $region35: #{bottleneck_forward.11} parent=31 // pred_region
        %s208 = smul.u32 32, %s12
        %p209 = scmp.lt.s32.totalorder %s208, 63
        %s210 = scalar_select %p209, %s208, 63
        %s211 = smul.addr %s210, 8
        %s212 = scalar_lea.vmem %s0, %s211
        %s213 = smul.u32 32, %s12
      $region36: #{bottleneck_forward.11} parent=31 // pred_fallthru
        _
      // Predicated region
      $region37: #{bottleneck_forward.11} parent=31 // pred_check
        %p214 = pneg %p100
      $region38: #{bottleneck_forward.11} parent=31 // pred_check_branch
        %216 = sbr.rel (%p214) target = $region40
      $region39: #{bottleneck_forward.11} parent=31 // pred_region
        %s217 = smul.u32 32, %s12
        %p218 = scmp.lt.s32.totalorder %s217, 63
        %s219 = scalar_select %p218, %s217, 63
        %s220 = smul.addr %s219, 8
        %s221 = scalar_lea.vmem %s3, %s220
        %s222 = smul.u32 32, %s12
      $region40: #{bottleneck_forward.11} parent=31 // pred_fallthru
        _
    $region32: #{bottleneck_forward.11} parent=5 // pred_fallthru
      _
    %p223 = scmp.le.s32.totalorder 1, %s12
    %p224 = scmp.lt.s32.totalorder %s12, 3
    %p225 = pnand %p223, %p224
    %p226 = pneg %p225
    // Predicated region
    $region41: #{bottleneck_forward.11} parent=5 // pred_check
      _
    $region42: #{bottleneck_forward.11} parent=5 // pred_check_branch
      %228 = sbr.rel (%p225) target = $region44
    $region43: #{bottleneck_forward.11} parent=5 // pred_region
      %s229 = ssub.s32 %s12, 1
      %s230 = smul.u32 32, %s17
      %p231 = scmp.lt.s32.totalorder %s230, 63
      %s232 = scalar_select %p231, %s230, 63
      %s233 = smul.addr %s232, 8
      %s234 = scalar_lea.vmem %s0, %s233
      %p235 = pneg %p38
      %p236 = pneg %p35
      %p237 = pneg %p59
      %p238 = pneg %p56
      %p239 = pneg %p80
      %p240 = pneg %p77
      %s241 = smul.u32 32, %s17
      %p242 = scmp.lt.s32.totalorder %s241, 63
      %s243 = scalar_select %p242, %s241, 63
      %s244 = smul.addr %s243, 8
      %s245 = scalar_lea.vmem %s3, %s244
      %p246 = pneg %p106
      %p247 = pneg %p103
      %p248 = pneg %p127
      %p249 = pneg %p124
      %p250 = pneg %p148
      %p251 = pneg %p145
      %p252 = pneg %p174
      %p253 = pneg %p171
      %s254 = smul.u32 32, %s17
      %p255 = scmp.lt.s32.totalorder %s254, 63
      %s256 = scalar_select %p255, %s254, 63
      %s257 = smul.addr %s256, 8
      %s258 = scalar_lea.vmem %s6, %s257
      %s259 = smul.u32 32, %s17
      %p260 = scmp.lt.s32.totalorder %s259, 63
      %s261 = scalar_select %p260, %s259, 63
      %s262 = smul.addr %s261, 8
      %s263 = scalar_lea.vmem %s0, %s262
      %s264 = smul.u32 32, %s17
      %s265 = smul.u32 32, %s17
      %p266 = scmp.lt.s32.totalorder %s265, 63
      %s267 = scalar_select %p266, %s265, 63
      %s268 = smul.addr %s267, 8
      %s269 = scalar_lea.vmem %s3, %s268
      %s270 = smul.u32 32, %s17
      %s271 = smul.u32 32, %s17
      %p272 = scmp.lt.s32.totalorder %s271, 63
      %s273 = scalar_select %p272, %s271, 63
      %s274 = smul.addr %s273, 8
      %s275 = scalar_lea.vmem %s6, %s274
      %s276 = smul.u32 32, %s17
      %v277 = vld [vmem:[%s263] sm:$0xff]
      %v278 = vld [vmem:[%s263 + $0x8] sm:$0xff]
      %v279 = vld [vmem:[%s263 + $0x10] sm:$0xff]
      %v280 = vld [vmem:[%s263 + $0x18] sm:$0xff]
      %v281 = vld [vmem:[%s263 + $0x20] sm:$0xff]
      %v282 = vld [vmem:[%s263 + $0x28] sm:$0xff]
      %v283 = vld [vmem:[%s263 + $0x30] sm:$0xff]
      %v284 = vld [vmem:[%s263 + $0x38] sm:$0xff]
      %v285 = vld [vmem:[%s263 + $0x40] sm:$0xff]
      %v286 = vld [vmem:[%s263 + $0x48] sm:$0xff]
      %v287 = vld [vmem:[%s263 + $0x50] sm:$0xff]
      %v288 = vld [vmem:[%s263 + $0x58] sm:$0xff]
      %v289 = vld [vmem:[%s263 + $0x60] sm:$0xff]
      %v290 = vld [vmem:[%s263 + $0x68] sm:$0xff]
      %v291 = vld [vmem:[%s263 + $0x70] sm:$0xff]
      %v292 = vld [vmem:[%s263 + $0x78] sm:$0xff]
      %v293 = vld [vmem:[%s263 + $0x80] sm:$0xff]
      %v294 = vld [vmem:[%s263 + $0x88] sm:$0xff]
      %v295 = vld [vmem:[%s263 + $0x90] sm:$0xff]
      %v296 = vld [vmem:[%s263 + $0x98] sm:$0xff]
      %v297 = vld [vmem:[%s263 + $0xa0] sm:$0xff]
      %v298 = vld [vmem:[%s263 + $0xa8] sm:$0xff]
      %v299 = vld [vmem:[%s263 + $0xb0] sm:$0xff]
      %v300 = vld [vmem:[%s263 + $0xb8] sm:$0xff]
      %v301 = vld [vmem:[%s263 + $0xc0] sm:$0xff]
      %v302 = vld [vmem:[%s263 + $0xc8] sm:$0xff]
      %v303 = vld [vmem:[%s263 + $0xd0] sm:$0xff]
      %v304 = vld [vmem:[%s263 + $0xd8] sm:$0xff]
      %v305 = vld [vmem:[%s263 + $0xe0] sm:$0xff]
      %v306 = vld [vmem:[%s263 + $0xe8] sm:$0xff]
      %v307 = vld [vmem:[%s263 + $0xf0] sm:$0xff]
      %v308 = vld [vmem:[%s263 + $0xf8] sm:$0xff]
      %v309 = vld [vmem:[%s1] sm:$0x1]
      %v311 = vlaneseq
      %v312 = vshrl.u32 %v311, 7
      %v313 = vsub.s32 0, %v312
      %v314 = vrot.slane %v309, %v313
      %v316 = vmul.f32 %v277, %v314
      %v317 = vmul.f32 %v278, %v314
      %v318 = vmul.f32 %v279, %v314
      %v319 = vmul.f32 %v280, %v314
      %v320 = vmul.f32 %v281, %v314
      %v321 = vmul.f32 %v282, %v314
      %v322 = vmul.f32 %v283, %v314
      %v323 = vmul.f32 %v284, %v314
      %v324 = vmul.f32 %v285, %v314
      %v325 = vmul.f32 %v286, %v314
      %v326 = vmul.f32 %v287, %v314
      %v327 = vmul.f32 %v288, %v314
      %v328 = vmul.f32 %v289, %v314
      %v329 = vmul.f32 %v290, %v314
      %v330 = vmul.f32 %v291, %v314
      %v331 = vmul.f32 %v292, %v314
      %v332 = vmul.f32 %v293, %v314
      %v333 = vmul.f32 %v294, %v314
      %v334 = vmul.f32 %v295, %v314
      %v335 = vmul.f32 %v296, %v314
      %v336 = vmul.f32 %v297, %v314
      %v337 = vmul.f32 %v298, %v314
      %v338 = vmul.f32 %v299, %v314
      %v339 = vmul.f32 %v300, %v314
      %v340 = vmul.f32 %v301, %v314
      %v341 = vmul.f32 %v302, %v314
      %v342 = vmul.f32 %v303, %v314
      %v343 = vmul.f32 %v304, %v314
      %v344 = vmul.f32 %v305, %v314
      %v345 = vmul.f32 %v306, %v314
      %v346 = vmul.f32 %v307, %v314
      %v347 = vmul.f32 %v308, %v314
      %v348 = vld [vmem:[%s2] sm:$0x1]
      %v350 = vlaneseq
      %v351 = vshrl.u32 %v350, 7
      %v352 = vsub.s32 0, %v351
      %v353 = vrot.slane %v348, %v352
      %v355 = vadd.f32 %v316, %v353
      %v356 = vadd.f32 %v317, %v353
      %v357 = vadd.f32 %v318, %v353
      %v358 = vadd.f32 %v319, %v353
      %v359 = vadd.f32 %v320, %v353
      %v360 = vadd.f32 %v321, %v353
      %v361 = vadd.f32 %v322, %v353
      %v362 = vadd.f32 %v323, %v353
      %v363 = vadd.f32 %v324, %v353
      %v364 = vadd.f32 %v325, %v353
      %v365 = vadd.f32 %v326, %v353
      %v366 = vadd.f32 %v327, %v353
      %v367 = vadd.f32 %v328, %v353
      %v368 = vadd.f32 %v329, %v353
      %v369 = vadd.f32 %v330, %v353
      %v370 = vadd.f32 %v331, %v353
      %v371 = vadd.f32 %v332, %v353
      %v372 = vadd.f32 %v333, %v353
      %v373 = vadd.f32 %v334, %v353
      %v374 = vadd.f32 %v335, %v353
      %v375 = vadd.f32 %v336, %v353
      %v376 = vadd.f32 %v337, %v353
      %v377 = vadd.f32 %v338, %v353
      %v378 = vadd.f32 %v339, %v353
      %v379 = vadd.f32 %v340, %v353
      %v380 = vadd.f32 %v341, %v353
      %v381 = vadd.f32 %v342, %v353
      %v382 = vadd.f32 %v343, %v353
      %v383 = vadd.f32 %v344, %v353
      %v384 = vadd.f32 %v345, %v353
      %v385 = vadd.f32 %v346, %v353
      %v386 = vadd.f32 %v347, %v353
      %v387 = vld [vmem:[%s269] sm:$0xff]
      %v388 = vld [vmem:[%s269 + $0x8] sm:$0xff]
      %v389 = vld [vmem:[%s269 + $0x10] sm:$0xff]
      %v390 = vld [vmem:[%s269 + $0x18] sm:$0xff]
      %v391 = vld [vmem:[%s269 + $0x20] sm:$0xff]
      %v392 = vld [vmem:[%s269 + $0x28] sm:$0xff]
      %v393 = vld [vmem:[%s269 + $0x30] sm:$0xff]
      %v394 = vld [vmem:[%s269 + $0x38] sm:$0xff]
      %v395 = vld [vmem:[%s269 + $0x40] sm:$0xff]
      %v396 = vld [vmem:[%s269 + $0x48] sm:$0xff]
      %v397 = vld [vmem:[%s269 + $0x50] sm:$0xff]
      %v398 = vld [vmem:[%s269 + $0x58] sm:$0xff]
      %v399 = vld [vmem:[%s269 + $0x60] sm:$0xff]
      %v400 = vld [vmem:[%s269 + $0x68] sm:$0xff]
      %v401 = vld [vmem:[%s269 + $0x70] sm:$0xff]
      %v402 = vld [vmem:[%s269 + $0x78] sm:$0xff]
      %v403 = vld [vmem:[%s269 + $0x80] sm:$0xff]
      %v404 = vld [vmem:[%s269 + $0x88] sm:$0xff]
      %v405 = vld [vmem:[%s269 + $0x90] sm:$0xff]
      %v406 = vld [vmem:[%s269 + $0x98] sm:$0xff]
      %v407 = vld [vmem:[%s269 + $0xa0] sm:$0xff]
      %v408 = vld [vmem:[%s269 + $0xa8] sm:$0xff]
      %v409 = vld [vmem:[%s269 + $0xb0] sm:$0xff]
      %v410 = vld [vmem:[%s269 + $0xb8] sm:$0xff]
      %v411 = vld [vmem:[%s269 + $0xc0] sm:$0xff]
      %v412 = vld [vmem:[%s269 + $0xc8] sm:$0xff]
      %v413 = vld [vmem:[%s269 + $0xd0] sm:$0xff]
      %v414 = vld [vmem:[%s269 + $0xd8] sm:$0xff]
      %v415 = vld [vmem:[%s269 + $0xe0] sm:$0xff]
      %v416 = vld [vmem:[%s269 + $0xe8] sm:$0xff]
      %v417 = vld [vmem:[%s269 + $0xf0] sm:$0xff]
      %v418 = vld [vmem:[%s269 + $0xf8] sm:$0xff]
      %v419 = vld [vmem:[%s4] sm:$0x1]
      %v421 = vlaneseq
      %v422 = vshrl.u32 %v421, 7
      %v423 = vsub.s32 0, %v422
      %v424 = vrot.slane %v419, %v423
      %v426 = vmul.f32 %v387, %v424
      %v427 = vmul.f32 %v388, %v424
      %v428 = vmul.f32 %v389, %v424
      %v429 = vmul.f32 %v390, %v424
      %v430 = vmul.f32 %v391, %v424
      %v431 = vmul.f32 %v392, %v424
      %v432 = vmul.f32 %v393, %v424
      %v433 = vmul.f32 %v394, %v424
      %v434 = vmul.f32 %v395, %v424
      %v435 = vmul.f32 %v396, %v424
      %v436 = vmul.f32 %v397, %v424
      %v437 = vmul.f32 %v398, %v424
      %v438 = vmul.f32 %v399, %v424
      %v439 = vmul.f32 %v400, %v424
      %v440 = vmul.f32 %v401, %v424
      %v441 = vmul.f32 %v402, %v424
      %v442 = vmul.f32 %v403, %v424
      %v443 = vmul.f32 %v404, %v424
      %v444 = vmul.f32 %v405, %v424
      %v445 = vmul.f32 %v406, %v424
      %v446 = vmul.f32 %v407, %v424
      %v447 = vmul.f32 %v408, %v424
      %v448 = vmul.f32 %v409, %v424
      %v449 = vmul.f32 %v410, %v424
      %v450 = vmul.f32 %v411, %v424
      %v451 = vmul.f32 %v412, %v424
      %v452 = vmul.f32 %v413, %v424
      %v453 = vmul.f32 %v414, %v424
      %v454 = vmul.f32 %v415, %v424
      %v455 = vmul.f32 %v416, %v424
      %v456 = vmul.f32 %v417, %v424
      %v457 = vmul.f32 %v418, %v424
      %v458 = vld [vmem:[%s5] sm:$0x1]
      %v460 = vlaneseq
      %v461 = vshrl.u32 %v460, 7
      %v462 = vsub.s32 0, %v461
      %v463 = vrot.slane %v458, %v462
      %v465 = vadd.f32 %v426, %v463
      %v466 = vadd.f32 %v427, %v463
      %v467 = vadd.f32 %v428, %v463
      %v468 = vadd.f32 %v429, %v463
      %v469 = vadd.f32 %v430, %v463
      %v470 = vadd.f32 %v431, %v463
      %v471 = vadd.f32 %v432, %v463
      %v472 = vadd.f32 %v433, %v463
      %v473 = vadd.f32 %v434, %v463
      %v474 = vadd.f32 %v435, %v463
      %v475 = vadd.f32 %v436, %v463
      %v476 = vadd.f32 %v437, %v463
      %v477 = vadd.f32 %v438, %v463
      %v478 = vadd.f32 %v439, %v463
      %v479 = vadd.f32 %v440, %v463
      %v480 = vadd.f32 %v441, %v463
      %v481 = vadd.f32 %v442, %v463
      %v482 = vadd.f32 %v443, %v463
      %v483 = vadd.f32 %v444, %v463
      %v484 = vadd.f32 %v445, %v463
      %v485 = vadd.f32 %v446, %v463
      %v486 = vadd.f32 %v447, %v463
      %v487 = vadd.f32 %v448, %v463
      %v488 = vadd.f32 %v449, %v463
      %v489 = vadd.f32 %v450, %v463
      %v490 = vadd.f32 %v451, %v463
      %v491 = vadd.f32 %v452, %v463
      %v492 = vadd.f32 %v453, %v463
      %v493 = vadd.f32 %v454, %v463
      %v494 = vadd.f32 %v455, %v463
      %v495 = vadd.f32 %v456, %v463
      %v496 = vadd.f32 %v457, %v463
      %v497 = vadd.f32 %v355, %v465
      %v498 = vadd.f32 %v356, %v466
      %v499 = vadd.f32 %v357, %v467
      %v500 = vadd.f32 %v358, %v468
      %v501 = vadd.f32 %v359, %v469
      %v502 = vadd.f32 %v360, %v470
      %v503 = vadd.f32 %v361, %v471
      %v504 = vadd.f32 %v362, %v472
      %v505 = vadd.f32 %v363, %v473
      %v506 = vadd.f32 %v364, %v474
      %v507 = vadd.f32 %v365, %v475
      %v508 = vadd.f32 %v366, %v476
      %v509 = vadd.f32 %v367, %v477
      %v510 = vadd.f32 %v368, %v478
      %v511 = vadd.f32 %v369, %v479
      %v512 = vadd.f32 %v370, %v480
      %v513 = vadd.f32 %v371, %v481
      %v514 = vadd.f32 %v372, %v482
      %v515 = vadd.f32 %v373, %v483
      %v516 = vadd.f32 %v374, %v484
      %v517 = vadd.f32 %v375, %v485
      %v518 = vadd.f32 %v376, %v486
      %v519 = vadd.f32 %v377, %v487
      %v520 = vadd.f32 %v378, %v488
      %v521 = vadd.f32 %v379, %v489
      %v522 = vadd.f32 %v380, %v490
      %v523 = vadd.f32 %v381, %v491
      %v524 = vadd.f32 %v382, %v492
      %v525 = vadd.f32 %v383, %v493
      %v526 = vadd.f32 %v384, %v494
      %v527 = vadd.f32 %v385, %v495
      %v528 = vadd.f32 %v386, %v496
      %v529 = vmax.f32 %v497, 0.0
      %v530 = vmax.f32 %v498, 0.0
      %v531 = vmax.f32 %v499, 0.0
      %v532 = vmax.f32 %v500, 0.0
      %v533 = vmax.f32 %v501, 0.0
      %v534 = vmax.f32 %v502, 0.0
      %v535 = vmax.f32 %v503, 0.0
      %v536 = vmax.f32 %v504, 0.0
      %v537 = vmax.f32 %v505, 0.0
      %v538 = vmax.f32 %v506, 0.0
      %v539 = vmax.f32 %v507, 0.0
      %v540 = vmax.f32 %v508, 0.0
      %v541 = vmax.f32 %v509, 0.0
      %v542 = vmax.f32 %v510, 0.0
      %v543 = vmax.f32 %v511, 0.0
      %v544 = vmax.f32 %v512, 0.0
      %v545 = vmax.f32 %v513, 0.0
      %v546 = vmax.f32 %v514, 0.0
      %v547 = vmax.f32 %v515, 0.0
      %v548 = vmax.f32 %v516, 0.0
      %v549 = vmax.f32 %v517, 0.0
      %v550 = vmax.f32 %v518, 0.0
      %v551 = vmax.f32 %v519, 0.0
      %v552 = vmax.f32 %v520, 0.0
      %v553 = vmax.f32 %v521, 0.0
      %v554 = vmax.f32 %v522, 0.0
      %v555 = vmax.f32 %v523, 0.0
      %v556 = vmax.f32 %v524, 0.0
      %v557 = vmax.f32 %v525, 0.0
      %v558 = vmax.f32 %v526, 0.0
      %v559 = vmax.f32 %v527, 0.0
      %v560 = vmax.f32 %v528, 0.0
      %vm561 = vcmask 130048
      %562 = vst.msk [vmem:[%s275] sm:$0xff] %vm561, %v529
      %563 = vst.msk [vmem:[%s275 + $0x8] sm:$0xff] %vm561, %v530
      %564 = vst.msk [vmem:[%s275 + $0x10] sm:$0xff] %vm561, %v531
      %565 = vst.msk [vmem:[%s275 + $0x18] sm:$0xff] %vm561, %v532
      %566 = vst.msk [vmem:[%s275 + $0x20] sm:$0xff] %vm561, %v533
      %567 = vst.msk [vmem:[%s275 + $0x28] sm:$0xff] %vm561, %v534
      %568 = vst.msk [vmem:[%s275 + $0x30] sm:$0xff] %vm561, %v535
      %569 = vst.msk [vmem:[%s275 + $0x38] sm:$0xff] %vm561, %v536
      %570 = vst.msk [vmem:[%s275 + $0x40] sm:$0xff] %vm561, %v537
      %571 = vst.msk [vmem:[%s275 + $0x48] sm:$0xff] %vm561, %v538
      %572 = vst.msk [vmem:[%s275 + $0x50] sm:$0xff] %vm561, %v539
      %573 = vst.msk [vmem:[%s275 + $0x58] sm:$0xff] %vm561, %v540
      %574 = vst.msk [vmem:[%s275 + $0x60] sm:$0xff] %vm561, %v541
      %575 = vst.msk [vmem:[%s275 + $0x68] sm:$0xff] %vm561, %v542
      %576 = vst.msk [vmem:[%s275 + $0x70] sm:$0xff] %vm561, %v543
      %577 = vst.msk [vmem:[%s275 + $0x78] sm:$0xff] %vm561, %v544
      %578 = vst.msk [vmem:[%s275 + $0x80] sm:$0xff] %vm561, %v545
      %579 = vst.msk [vmem:[%s275 + $0x88] sm:$0xff] %vm561, %v546
      %580 = vst.msk [vmem:[%s275 + $0x90] sm:$0xff] %vm561, %v547
      %581 = vst.msk [vmem:[%s275 + $0x98] sm:$0xff] %vm561, %v548
      %582 = vst.msk [vmem:[%s275 + $0xa0] sm:$0xff] %vm561, %v549
      %583 = vst.msk [vmem:[%s275 + $0xa8] sm:$0xff] %vm561, %v550
      %584 = vst.msk [vmem:[%s275 + $0xb0] sm:$0xff] %vm561, %v551
      %585 = vst.msk [vmem:[%s275 + $0xb8] sm:$0xff] %vm561, %v552
      %586 = vst.msk [vmem:[%s275 + $0xc0] sm:$0xff] %vm561, %v553
      %587 = vst.msk [vmem:[%s275 + $0xc8] sm:$0xff] %vm561, %v554
      %588 = vst.msk [vmem:[%s275 + $0xd0] sm:$0xff] %vm561, %v555
      %589 = vst.msk [vmem:[%s275 + $0xd8] sm:$0xff] %vm561, %v556
      %590 = vst.msk [vmem:[%s275 + $0xe0] sm:$0xff] %vm561, %v557
      %591 = vst.msk [vmem:[%s275 + $0xe8] sm:$0xff] %vm561, %v558
      %592 = vst.msk [vmem:[%s275 + $0xf0] sm:$0xff] %vm561, %v559
      %593 = vst.msk [vmem:[%s275 + $0xf8] sm:$0xff] %vm561, %v560
      %s594 = smul.u32 32, %s17
      %p595 = scmp.lt.s32.totalorder %s594, 63
      %s596 = scalar_select %p595, %s594, 63
      %s597 = smul.addr %s596, 8
      %s598 = scalar_lea.vmem %s6, %s597
      // Predicated region
      $region45: #{bottleneck_forward.11} parent=43 // pred_check
        %p599 = pneg %p171
      $region46: #{bottleneck_forward.11} parent=43 // pred_check_branch
        %601 = sbr.rel (%p599) target = $region48
      $region47: #{bottleneck_forward.11} parent=43 // pred_region
        %s602 = smul.u32 32, %s17
      $region48: #{bottleneck_forward.11} parent=43 // pred_fallthru
        _
    $region44: #{bottleneck_forward.11} parent=5 // pred_fallthru
      _
    %p603 = scmp.le.s32.totalorder 2, %s12
    // Predicated region
    $region49: #{bottleneck_forward.11} parent=5 // pred_check
      %p604 = pneg %p603
    $region50: #{bottleneck_forward.11} parent=5 // pred_check_branch
      %606 = sbr.rel (%p604) target = $region52
    $region51: #{bottleneck_forward.11} parent=5 // pred_region
      %s607 = ssub.s32 %s12, 2
      // Predicated region
      $region53: #{bottleneck_forward.11} parent=51 // pred_check
        %p608 = pneg %p177
      $region54: #{bottleneck_forward.11} parent=51 // pred_check_branch
        %610 = sbr.rel (%p608) target = $region56
      $region55: #{bottleneck_forward.11} parent=51 // pred_region
        %s611 = smul.u32 32, %s18
        %p612 = scmp.lt.s32.totalorder %s611, 63
        %s613 = scalar_select %p612, %s611, 63
        %s614 = smul.addr %s613, 8
        %s615 = scalar_lea.vmem %s6, %s614
      $region56: #{bottleneck_forward.11} parent=51 // pred_fallthru
        _
    $region52: #{bottleneck_forward.11} parent=5 // pred_fallthru
      _
  $region6: #{bottleneck_forward.11} parent=0 // loop_footer
    %s16 = sadd.s32 1, %s12
  $region7: #{bottleneck_forward.11} parent=0 // loop_footer_branch
    %11 = sbr.rel target = $region3
  $region8: #{bottleneck_forward.11} parent=0 // loop_exit
    _

// kernel: bottleneck_forward.8
$region0: #{bottleneck_forward.8}
  #allocation0 [shape = 'u32[]', space=smem, size = 0x4, offset = 0x4, fixed_abs, tag = 'smem constant byte address 0x4 - core index']
  #allocation1 [shape = 'u32[144,128]{1,0:T(1,128)}', space=vmem, size = 0x12000, scoped, tag = 'internal scratch']
  %s0 = inlined_call_operand.vmem [shape: bf16[2,18,16,12], index: 0, kind: input, shape index: {}]
  %s1 = inlined_call_operand.vmem [shape: bf16[3,12,4], index: 1, kind: input, shape index: {}]
  %s2 = inlined_call_operand.vmem [shape: f32[2,256,4], index: 2, kind: output, shape index: {0}]
  %s3 = inlined_call_operand.vmem [shape: f32[2,2,4], index: 3, kind: output, shape index: {1}]
  %4 = xla_tuple %s2, %s3
  %s5 = sld [smem:[#allocation0]]
  $region49: #{bottleneck_forward.8} parent=0
    _
  %s7 = ssub.s32 1, %s5
  %s8 = scalar_select 0, %s7, %s5
  loop: start=0, step=1, limit=4
  $region2: #{bottleneck_forward.8} parent=0 // loop_pre_header
    _
  $region3: #{bottleneck_forward.8} parent=0 // loop_header
    %s10 = sphi 0, %s14
    %p11 = scmp.ge.s32.totalorder %s10, 4
    %s20 = sphi 0, %s22
    %s23 = sphi 0, %s20
    %s24 = sphi 0, %s23
    %s40 = sphi 0, %s24
    %s44 = sphi 0, %s44
    %s46 = sphi 0, %s44
    %s47 = sphi 0, %s46
    %s61 = sphi 0, %s47
    %s67 = sphi 0, %s69
    %s70 = sphi 0, %s67
    %s71 = sphi 0, %s70
    %s87 = sphi 0, %s71
    %s93 = sphi 0, %s95
    %s96 = sphi 0, %s93
    %s97 = sphi 0, %s96
    %s113 = sphi 0, %s97
  $region4: #{bottleneck_forward.8} parent=0 // loop_header_branch
    %13 = sbr.rel (%p11) target = $region8
  $region5: #{bottleneck_forward.8} parent=0 // loop_body
    %s15 = ssub.s32 %s10, 1
    %s16 = ssub.s32 %s10, 2
    %s17 = sadd.s32 %s10, 1
    %s18 = ssub.s32 %s10, %s17
    %p19 = scmp.eq.s32.totalorder %s18, 0
    %s21 = sadd.s32 %s20, 1
    %s22 = scalar_select %p19, %s20, %s21
    %p25 = pneg %p19
    %p26 = scmp.eq.s32.totalorder %s10, 1
    %p27 = por %p25, %p26
    %p28 = scmp.ne.s32.totalorder %s20, %s23
    %p29 = scmp.eq.s32.totalorder %s10, 0
    %p30 = por %p28, %p29
    %p31 = scmp.ne.s32.totalorder %s20, %s23
    %p32 = scmp.eq.s32.totalorder %s15, 1
    %p33 = por %p31, %p32
    %p34 = scmp.ne.s32.totalorder %s23, %s24
    %p35 = scmp.eq.s32.totalorder %s15, 0
    %p36 = por %p34, %p35
    %p37 = scmp.ne.s32.totalorder %s23, %s24
    %p38 = scmp.eq.s32.totalorder %s16, 1
    %p39 = por %p37, %p38
    %p41 = scmp.ne.s32.totalorder %s24, %s40
    %p42 = scmp.eq.s32.totalorder %s16, 0
    %p43 = por %p41, %p42
    %s45 = sadd.s32 %s44, 1
    %p48 = scmp.eq.s32.totalorder %s10, 1
    %p49 = scmp.ne.s32.totalorder %s44, %s46
    %p50 = scmp.eq.s32.totalorder %s10, 0
    %p51 = por %p49, %p50
    %p52 = scmp.ne.s32.totalorder %s44, %s46
    %p53 = scmp.eq.s32.totalorder %s15, 1
    %p54 = por %p52, %p53
    %p55 = scmp.ne.s32.totalorder %s46, %s47
    %p56 = scmp.eq.s32.totalorder %s15, 0
    %p57 = por %p55, %p56
    %p58 = scmp.ne.s32.totalorder %s46, %s47
    %p59 = scmp.eq.s32.totalorder %s16, 1
    %p60 = por %p58, %p59
    %p62 = scmp.ne.s32.totalorder %s47, %s61
    %p63 = scmp.eq.s32.totalorder %s16, 0
    %p64 = por %p62, %p63
    %s65 = ssub.s32 %s10, %s17
    %p66 = scmp.eq.s32.totalorder %s65, 0
    %s68 = sadd.s32 %s67, 1
    %s69 = scalar_select %p66, %s67, %s68
    %p72 = pneg %p66
    %p73 = scmp.eq.s32.totalorder %s10, 1
    %p74 = por %p72, %p73
    %p75 = scmp.ne.s32.totalorder %s67, %s70
    %p76 = scmp.eq.s32.totalorder %s10, 0
    %p77 = por %p75, %p76
    %p78 = scmp.ne.s32.totalorder %s67, %s70
    %p79 = scmp.eq.s32.totalorder %s15, 1
    %p80 = por %p78, %p79
    %p81 = scmp.ne.s32.totalorder %s70, %s71
    %p82 = scmp.eq.s32.totalorder %s15, 0
    %p83 = por %p81, %p82
    %p84 = scmp.ne.s32.totalorder %s70, %s71
    %p85 = scmp.eq.s32.totalorder %s16, 1
    %p86 = por %p84, %p85
    %p88 = scmp.ne.s32.totalorder %s71, %s87
    %p89 = scmp.eq.s32.totalorder %s16, 0
    %p90 = por %p88, %p89
    %s91 = ssub.s32 %s10, %s17
    %p92 = scmp.eq.s32.totalorder %s91, 0
    %s94 = sadd.s32 %s93, 1
    %s95 = scalar_select %p92, %s93, %s94
    %p98 = pneg %p92
    %p99 = scmp.eq.s32.totalorder %s10, 1
    %p100 = por %p98, %p99
    %p101 = scmp.ne.s32.totalorder %s93, %s96
    %p102 = scmp.eq.s32.totalorder %s10, 0
    %p103 = por %p101, %p102
    %p104 = scmp.ne.s32.totalorder %s93, %s96
    %p105 = scmp.eq.s32.totalorder %s15, 1
    %p106 = por %p104, %p105
    %p107 = scmp.ne.s32.totalorder %s96, %s97
    %p108 = scmp.eq.s32.totalorder %s15, 0
    %p109 = por %p107, %p108
    %p110 = scmp.ne.s32.totalorder %s96, %s97
    %p111 = scmp.eq.s32.totalorder %s16, 1
    %p112 = por %p110, %p111
    %p114 = scmp.ne.s32.totalorder %s97, %s113
    %p115 = scmp.eq.s32.totalorder %s16, 0
    %p116 = por %p114, %p115
    %p117 = scmp.le.s32.totalorder 1, %s10
    %p118 = scmp.lt.s32.totalorder %s10, 3
    %p119 = pnand %p117, %p118
    %p120 = pneg %p119
    // Predicated region
    $region9: #{bottleneck_forward.8} parent=5 // pred_check
      _
    $region10: #{bottleneck_forward.8} parent=5 // pred_check_branch
      %122 = sbr.rel (%p119) target = $region12
    $region11: #{bottleneck_forward.8} parent=5 // pred_region
      %s123 = ssub.s32 %s10, 1
      // Predicated region
      $region13: #{bottleneck_forward.8} parent=11 // pred_check
        %p124 = pneg %p57
      $region14: #{bottleneck_forward.8} parent=11 // pred_check_branch
        %126 = sbr.rel (%p124) target = $region16
      $region15: #{bottleneck_forward.8} parent=11 // pred_region
        _
      $region16: #{bottleneck_forward.8} parent=11 // pred_fallthru
        _
    $region12: #{bottleneck_forward.8} parent=5 // pred_fallthru
      _
    %p127 = scmp.lt.s32.totalorder %s10, 2
    // Predicated region
    $region17: #{bottleneck_forward.8} parent=5 // pred_check
      %p128 = pneg %p127
    $region18: #{bottleneck_forward.8} parent=5 // pred_check_branch
      %130 = sbr.rel (%p128) target = $region20
    $region19: #{bottleneck_forward.8} parent=5 // pred_region
      // Predicated region
      $region21: #{bottleneck_forward.8} parent=19 // pred_check
        %p131 = pneg %p30
      $region22: #{bottleneck_forward.8} parent=19 // pred_check_branch
        %133 = sbr.rel (%p131) target = $region24
      $region23: #{bottleneck_forward.8} parent=19 // pred_region
        %p134 = scmp.lt.s32.totalorder %s10, 1
        %s135 = scalar_select %p134, %s10, 1
        %s136 = smul.addr %s135, 36
        %s137 = smul.addr %s136, 4
        %s138 = scalar_lea.vmem %s0, %s137
      $region24: #{bottleneck_forward.8} parent=19 // pred_fallthru
        _
    $region20: #{bottleneck_forward.8} parent=5 // pred_fallthru
      _
    %p139 = scmp.le.s32.totalorder 1, %s10
    %p140 = scmp.lt.s32.totalorder %s10, 3
    %p141 = pnand %p139, %p140
    %p142 = pneg %p141
    // Predicated region
    $region25: #{bottleneck_forward.8} parent=5 // pred_check
      _
    $region26: #{bottleneck_forward.8} parent=5 // pred_check_branch
      %144 = sbr.rel (%p141) target = $region28
    $region27: #{bottleneck_forward.8} parent=5 // pred_region
      %s145 = ssub.s32 %s10, 1
      %p146 = scmp.lt.s32.totalorder %s15, 1
      %s147 = scalar_select %p146, %s15, 1
      %s148 = smul.addr %s147, 36
      %s149 = smul.addr %s148, 4
      %s150 = scalar_lea.vmem %s0, %s149
      %p151 = pneg %p36
      %p152 = pneg %p33
      %p153 = pneg %p57
      %p154 = pneg %p54
      %p155 = pneg %p83
      %p156 = pneg %p80
      %p157 = scmp.lt.s32.totalorder %s15, 1
      %s158 = scalar_select %p157, %s15, 1
      %s159 = smul.addr %s158, 32
      %s160 = smul.addr %s159, 8
      %s161 = scalar_lea.vmem %s2, %s160
      %p162 = pneg %p109
      %p163 = pneg %p106
      %p164 = scmp.lt.s32.totalorder %s15, 1
      %s165 = scalar_select %p164, %s15, 1
      %s166 = smul.addr %s165, 2
      %s167 = scalar_lea.vmem %s3, %s166
      %p168 = scmp.lt.s32.totalorder %s15, 1
      %s169 = scalar_select %p168, %s15, 1
      %s170 = smul.addr %s169, 36
      %s171 = smul.addr %s170, 4
      %s172 = scalar_lea.vmem %s0, %s171
      %p173 = scmp.lt.s32.totalorder %s15, 1
      %s174 = scalar_select %p173, %s15, 1
      %s175 = smul.addr %s174, 32
      %s176 = smul.addr %s175, 8
      %s177 = scalar_lea.vmem %s2, %s176
      %p178 = scmp.lt.s32.totalorder %s15, 1
      %s179 = scalar_select %p178, %s15, 1
      %s180 = smul.addr %s179, 2
      %s181 = scalar_lea.vmem %s3, %s180
      %v183 = vld [vmem:[%s172] sm:$0xf]
      %v184 = vld [vmem:[%s172 + $0x4] sm:$0xf]
      %v185 = vld [vmem:[%s172 + $0x8] sm:$0xf]
      %v186 = vld [vmem:[%s172 + $0xc] sm:$0xf]
      %v187 = vld [vmem:[%s172 + $0x10] sm:$0xf]
      %v188 = vld [vmem:[%s172 + $0x14] sm:$0xf]
      %v189 = vld [vmem:[%s172 + $0x18] sm:$0xf]
      %v190 = vld [vmem:[%s172 + $0x1c] sm:$0xf]
      %v191 = vld [vmem:[%s172 + $0x20] sm:$0xf]
      %v192 = vld [vmem:[%s172 + $0x24] sm:$0xf]
      %v193 = vld [vmem:[%s172 + $0x28] sm:$0xf]
      %v194 = vld [vmem:[%s172 + $0x2c] sm:$0xf]
      %v195 = vld [vmem:[%s172 + $0x30] sm:$0xf]
      %v196 = vld [vmem:[%s172 + $0x34] sm:$0xf]
      %v197 = vld [vmem:[%s172 + $0x38] sm:$0xf]
      %v198 = vld [vmem:[%s172 + $0x3c] sm:$0xf]
      %v199 = vld [vmem:[%s172 + $0x40] sm:$0xf]
      %v200 = vld [vmem:[%s172 + $0x44] sm:$0xf]
      %v201 = vld [vmem:[%s172 + $0x48] sm:$0xf]
      %v202 = vld [vmem:[%s172 + $0x4c] sm:$0xf]
      %v203 = vld [vmem:[%s172 + $0x50] sm:$0xf]
      %v204 = vld [vmem:[%s172 + $0x54] sm:$0xf]
      %v205 = vld [vmem:[%s172 + $0x58] sm:$0xf]
      %v206 = vld [vmem:[%s172 + $0x5c] sm:$0xf]
      %v207 = vld [vmem:[%s172 + $0x60] sm:$0xf]
      %v208 = vld [vmem:[%s172 + $0x64] sm:$0xf]
      %v209 = vld [vmem:[%s172 + $0x68] sm:$0xf]
      %v210 = vld [vmem:[%s172 + $0x6c] sm:$0xf]
      %v211 = vld [vmem:[%s172 + $0x70] sm:$0xf]
      %v212 = vld [vmem:[%s172 + $0x74] sm:$0xf]
      %v213 = vld [vmem:[%s172 + $0x78] sm:$0xf]
      %v214 = vld [vmem:[%s172 + $0x7c] sm:$0xf]
      %v215 = vld [vmem:[%s1] sm:$0xf]
      %v216 = vld [vmem:[%s1 + $0x4] sm:$0x3]
      %s217 = scalar_lea.vmem %s172, 8
      %v218 = vld [vmem:[%s217] sm:$0xf]
      %v219 = vld [vmem:[%s217 + $0x4] sm:$0xf]
      %v220 = vld [vmem:[%s217 + $0x8] sm:$0xf]
      %v221 = vld [vmem:[%s217 + $0xc] sm:$0xf]
      %v222 = vld [vmem:[%s217 + $0x10] sm:$0xf]
      %v223 = vld [vmem:[%s217 + $0x14] sm:$0xf]
      %v224 = vld [vmem:[%s217 + $0x18] sm:$0xf]
      %v225 = vld [vmem:[%s217 + $0x1c] sm:$0xf]
      %v226 = vld [vmem:[%s217 + $0x20] sm:$0xf]
      %v227 = vld [vmem:[%s217 + $0x24] sm:$0xf]
      %v228 = vld [vmem:[%s217 + $0x28] sm:$0xf]
      %v229 = vld [vmem:[%s217 + $0x2c] sm:$0xf]
      %v230 = vld [vmem:[%s217 + $0x30] sm:$0xf]
      %v231 = vld [vmem:[%s217 + $0x34] sm:$0xf]
      %v232 = vld [vmem:[%s217 + $0x38] sm:$0xf]
      %v233 = vld [vmem:[%s217 + $0x3c] sm:$0xf]
      %v234 = vld [vmem:[%s217 + $0x40] sm:$0xf]
      %v235 = vld [vmem:[%s217 + $0x44] sm:$0xf]
      %v236 = vld [vmem:[%s217 + $0x48] sm:$0xf]
      %v237 = vld [vmem:[%s217 + $0x4c] sm:$0xf]
      %v238 = vld [vmem:[%s217 + $0x50] sm:$0xf]
      %v239 = vld [vmem:[%s217 + $0x54] sm:$0xf]
      %v240 = vld [vmem:[%s217 + $0x58] sm:$0xf]
      %v241 = vld [vmem:[%s217 + $0x5c] sm:$0xf]
      %v242 = vld [vmem:[%s217 + $0x60] sm:$0xf]
      %v243 = vld [vmem:[%s217 + $0x64] sm:$0xf]
      %v244 = vld [vmem:[%s217 + $0x68] sm:$0xf]
      %v245 = vld [vmem:[%s217 + $0x6c] sm:$0xf]
      %v246 = vld [vmem:[%s217 + $0x70] sm:$0xf]
      %v247 = vld [vmem:[%s217 + $0x74] sm:$0xf]
      %v248 = vld [vmem:[%s217 + $0x78] sm:$0xf]
      %v249 = vld [vmem:[%s217 + $0x7c] sm:$0xf]
      %s250 = scalar_lea.vmem %s1, 8
      %v251 = vld [vmem:[%s250] sm:$0xf]
      %v252 = vld [vmem:[%s250 + $0x4] sm:$0x3]
      %v285 = vunpack.c.l.b16 %v218
      %v286 = vunpack.c.l.b16 %v219
      %v287 = vunpack.c.l.b16 %v220
      %v288 = vunpack.c.l.b16 %v221
      %v289 = vunpack.c.l.b16 %v222
      %v290 = vunpack.c.l.b16 %v223
      %v291 = vunpack.c.l.b16 %v224
      %v292 = vunpack.c.l.b16 %v225
      %v293 = vunpack.c.l.b16 %v226
      %v294 = vunpack.c.l.b16 %v227
      %v295 = vunpack.c.l.b16 %v228
      %v296 = vunpack.c.l.b16 %v229
      %v297 = vunpack.c.l.b16 %v230
      %v298 = vunpack.c.l.b16 %v231
      %v299 = vunpack.c.l.b16 %v232
      %v300 = vunpack.c.l.b16 %v233
      %v301 = vunpack.c.l.b16 %v234
      %v302 = vunpack.c.l.b16 %v235
      %v303 = vunpack.c.l.b16 %v236
      %v304 = vunpack.c.l.b16 %v237
      %v305 = vunpack.c.l.b16 %v238
      %v306 = vunpack.c.l.b16 %v239
      %v307 = vunpack.c.l.b16 %v240
      %v308 = vunpack.c.l.b16 %v241
      %v309 = vunpack.c.l.b16 %v242
      %v310 = vunpack.c.l.b16 %v243
      %v311 = vunpack.c.l.b16 %v244
      %v312 = vunpack.c.l.b16 %v245
      %v313 = vunpack.c.l.b16 %v246
      %v314 = vunpack.c.l.b16 %v247
      %v315 = vunpack.c.l.b16 %v248
      %v316 = vunpack.c.l.b16 %v249
      %v317 = vpack.c.b16 %v286, %v285
      %v318 = vpack.c.b16 %v288, %v287
      %v319 = vpack.c.b16 %v290, %v289
      %v320 = vpack.c.b16 %v292, %v291
      %v321 = vpack.c.b16 %v294, %v293
      %v322 = vpack.c.b16 %v296, %v295
      %v323 = vpack.c.b16 %v298, %v297
      %v324 = vpack.c.b16 %v300, %v299
      %v325 = vpack.c.b16 %v302, %v301
      %v326 = vpack.c.b16 %v304, %v303
      %v327 = vpack.c.b16 %v306, %v305
      %v328 = vpack.c.b16 %v308, %v307
      %v329 = vpack.c.b16 %v310, %v309
      %v330 = vpack.c.b16 %v312, %v311
      %v331 = vpack.c.b16 %v314, %v313
      %v332 = vpack.c.b16 %v316, %v315
      %v335 = vunpack.c.l.b16 %v251
      %v336 = vunpack.c.l.b16 %v252
      %v337 = vpack.c.b16 %v336, %v335
      %vm338 = vcmask 97280
      %v340 = vsel %vm338, %v317, 0
      %v343 = vsel %vm338, %v318, 0
      %v346 = vsel %vm338, %v319, 0
      %v349 = vsel %vm338, %v320, 0
      %v352 = vsel %vm338, %v321, 0
      %v355 = vsel %vm338, %v322, 0
      %v358 = vsel %vm338, %v323, 0
      %v361 = vsel %vm338, %v324, 0
      %v364 = vsel %vm338, %v325, 0
      %v367 = vsel %vm338, %v326, 0
      %v370 = vsel %vm338, %v327, 0
      %v373 = vsel %vm338, %v328, 0
      %v376 = vsel %vm338, %v329, 0
      %v379 = vsel %vm338, %v330, 0
      %v382 = vsel %vm338, %v331, 0
      %v385 = vsel %vm338, %v332, 0
      %vm387 = vcmask 1045504
      %v389 = vsel %vm387, %v337, 0
      %391 = vmatprep.subr.bf16.mxu0 0
      %392 = vmatpush1.bf16.msra.mxu0 %v389
      %393 = vmatprep.subr.bf16.mxu0 0
      %394 = vmatpush1.bf16.msra.mxu0 0
      %395 = vmatprep.subr.bf16.mxu0 0
      %396 = vmatpush1.bf16.msra.mxu0 0
      %397 = vmatprep.subr.bf16.mxu0 0
      %398 = vmatpush1.bf16.msra.mxu0 0
      %399 = vmatprep.subr.bf16.mxu0 0
      %400 = vmatpush1.bf16.msra.mxu0 0
      %401 = vmatprep.subr.bf16.mxu0 0
      %402 = vmatpush1.bf16.msra.mxu0 0
      %403 = vmatprep.subr.bf16.mxu0 0
      %404 = vmatpush1.bf16.msra.mxu0 0
      %405 = vmatprep.subr.bf16.mxu0 0
      %406 = vmatpush1.bf16.msra.mxu0 0
      %407 = vmatprep.subr.bf16.mxu0 0
      %408 = vmatpush1.bf16.msra.mxu0 0
      %409 = vmatprep.subr.bf16.mxu0 0
      %410 = vmatpush1.bf16.msra.mxu0 0
      %411 = vmatprep.subr.bf16.mxu0 0
      %412 = vmatpush1.bf16.msra.mxu0 0
      %413 = vmatprep.subr.bf16.mxu0 0
      %414 = vmatpush1.bf16.msra.mxu0 0
      %415 = vmatprep.subr.bf16.mxu0 0
      %416 = vmatpush1.bf16.msra.mxu0 0
      %417 = vmatprep.subr.bf16.mxu0 0
      %418 = vmatpush1.bf16.msra.mxu0 0
      %419 = vmatprep.subr.bf16.mxu0 0
      %420 = vmatpush1.bf16.msra.mxu0 0
      %421 = vmatprep.subr.bf16.mxu0 0
      %422 = vmatpush1.bf16.msra.mxu0 0
      %423 = vmatprep.mubr.bf16.mxu0 0
      %424 = vmatmul.mubr.bf16.gmra.mrb[0].mxu0 %v340
      %v425 = vpop.f32.mrb[0].mxu0
      %v426 = vadd.f32 0.0, %v425
      %v427 = vpop.f32.mrb[0].mxu0
      %v428 = vpop.f32.mrb[0].mxu0
      %v429 = vadd.f32 0.0, %v428
      %v430 = vpop.f32.mrb[0].mxu0
      %431 = vmatprep.mubr.bf16.mxu0 0
      %432 = vmatmul.mubr.bf16.gmra.mrb[0].mxu0 %v343
      %v433 = vpop.f32.mrb[0].mxu0
      %v434 = vadd.f32 0.0, %v433
      %v435 = vpop.f32.mrb[0].mxu0
      %v436 = vpop.f32.mrb[0].mxu0
      %v437 = vadd.f32 0.0, %v436
      %v438 = vpop.f32.mrb[0].mxu0
      %439 = vmatprep.mubr.bf16.mxu0 0
      %440 = vmatmul.mubr.bf16.gmra.mrb[0].mxu0 %v346
      %v441 = vpop.f32.mrb[0].mxu0
      %v442 = vadd.f32 0.0, %v441
      %v443 = vpop.f32.mrb[0].mxu0
      %v444 = vpop.f32.mrb[0].mxu0
      %v445 = vadd.f32 0.0, %v444
      %v446 = vpop.f32.mrb[0].mxu0
      %447 = vmatprep.mubr.bf16.mxu0 0
      %448 = vmatmul.mubr.bf16.gmra.mrb[0].mxu0 %v349
      %v449 = vpop.f32.mrb[0].mxu0
      %v450 = vadd.f32 0.0, %v449
      %v451 = vpop.f32.mrb[0].mxu0
      %v452 = vpop.f32.mrb[0].mxu0
      %v453 = vadd.f32 0.0, %v452
      %v454 = vpop.f32.mrb[0].mxu0
      %455 = vmatprep.mubr.bf16.mxu0 0
      %456 = vmatmul.mubr.bf16.gmra.mrb[0].mxu0 %v352
      %v457 = vpop.f32.mrb[0].mxu0
      %v458 = vadd.f32 0.0, %v457
      %v459 = vpop.f32.mrb[0].mxu0
      %v460 = vpop.f32.mrb[0].mxu0
      %v461 = vadd.f32 0.0, %v460
      %v462 = vpop.f32.mrb[0].mxu0
      %463 = vmatprep.mubr.bf16.mxu0 0
      %464 = vmatmul.mubr.bf16.gmra.mrb[0].mxu0 %v355
      %v465 = vpop.f32.mrb[0].mxu0
      %v466 = vadd.f32 0.0, %v465
      %v467 = vpop.f32.mrb[0].mxu0
      %v468 = vpop.f32.mrb[0].mxu0
      %v469 = vadd.f32 0.0, %v468
      %v470 = vpop.f32.mrb[0].mxu0
      %471 = vmatprep.mubr.bf16.mxu0 0
      %472 = vmatmul.mubr.bf16.gmra.mrb[0].mxu0 %v358
      %v473 = vpop.f32.mrb[0].mxu0
      %v474 = vadd.f32 0.0, %v473
      %v475 = vpop.f32.mrb[0].mxu0
      %v476 = vpop.f32.mrb[0].mxu0
      %v477 = vadd.f32 0.0, %v476
      %v478 = vpop.f32.mrb[0].mxu0
      %479 = vmatprep.mubr.bf16.mxu0 0
      %480 = vmatmul.mubr.bf16.gmra.mrb[0].mxu0 %v361
      %v481 = vpop.f32.mrb[0].mxu0
      %v482 = vadd.f32 0.0, %v481
      %v483 = vpop.f32.mrb[0].mxu0
      %v484 = vpop.f32.mrb[0].mxu0
      %v485 = vadd.f32 0.0, %v484
      %v486 = vpop.f32.mrb[0].mxu0
      %487 = vmatprep.mubr.bf16.mxu0 0
      %488 = vmatmul.mubr.bf16.gmra.mrb[0].mxu0 %v364
      %v489 = vpop.f32.mrb[0].mxu0
      %v490 = vadd.f32 0.0, %v489
      %v491 = vpop.f32.mrb[0].mxu0
      %v492 = vpop.f32.mrb[0].mxu0
      %v493 = vadd.f32 0.0, %v492
      %v494 = vpop.f32.mrb[0].mxu0
      %495 = vmatprep.mubr.bf16.mxu0 0
      %496 = vmatmul.mubr.bf16.gmra.mrb[0].mxu0 %v367
      %v497 = vpop.f32.mrb[0].mxu0
      %v498 = vadd.f32 0.0, %v497
      %v499 = vpop.f32.mrb[0].mxu0
      %v500 = vpop.f32.mrb[0].mxu0
      %v501 = vadd.f32 0.0, %v500
      %v502 = vpop.f32.mrb[0].mxu0
      %503 = vmatprep.mubr.bf16.mxu0 0
      %504 = vmatmul.mubr.bf16.gmra.mrb[0].mxu0 %v370
      %v505 = vpop.f32.mrb[0].mxu0
      %v506 = vadd.f32 0.0, %v505
      %v507 = vpop.f32.mrb[0].mxu0
      %v508 = vpop.f32.mrb[0].mxu0
      %v509 = vadd.f32 0.0, %v508
      %v510 = vpop.f32.mrb[0].mxu0
      %511 = vmatprep.mubr.bf16.mxu0 0
      %512 = vmatmul.mubr.bf16.gmra.mrb[0].mxu0 %v373
      %v513 = vpop.f32.mrb[0].mxu0
      %v514 = vadd.f32 0.0, %v513
      %v515 = vpop.f32.mrb[0].mxu0
      %v516 = vpop.f32.mrb[0].mxu0
      %v517 = vadd.f32 0.0, %v516
      %v518 = vpop.f32.mrb[0].mxu0
      %519 = vmatprep.mubr.bf16.mxu0 0
      %520 = vmatmul.mubr.bf16.gmra.mrb[0].mxu0 %v376
      %v521 = vpop.f32.mrb[0].mxu0
      %v522 = vadd.f32 0.0, %v521
      %v523 = vpop.f32.mrb[0].mxu0
      %v524 = vpop.f32.mrb[0].mxu0
      %v525 = vadd.f32 0.0, %v524
      %v526 = vpop.f32.mrb[0].mxu0
      %527 = vmatprep.mubr.bf16.mxu0 0
      %528 = vmatmul.mubr.bf16.gmra.mrb[0].mxu0 %v379
      %v529 = vpop.f32.mrb[0].mxu0
      %v530 = vadd.f32 0.0, %v529
      %v531 = vpop.f32.mrb[0].mxu0
      %v532 = vpop.f32.mrb[0].mxu0
      %v533 = vadd.f32 0.0, %v532
      %v534 = vpop.f32.mrb[0].mxu0
      %535 = vmatprep.mubr.bf16.mxu0 0
      %536 = vmatmul.mubr.bf16.gmra.mrb[0].mxu0 %v382
      %v537 = vpop.f32.mrb[0].mxu0
      %v538 = vadd.f32 0.0, %v537
      %v539 = vpop.f32.mrb[0].mxu0
      %v540 = vpop.f32.mrb[0].mxu0
      %v541 = vadd.f32 0.0, %v540
      %v542 = vpop.f32.mrb[0].mxu0
      %543 = vmatprep.mubr.bf16.mxu0 0
      %544 = vmatmul.mubr.bf16.gmra.mrb[0].mxu0 %v385
      %v545 = vpop.f32.mrb[0].mxu0
      %v546 = vadd.f32 0.0, %v545
      %v547 = vpop.f32.mrb[0].mxu0
      %v548 = vpop.f32.mrb[0].mxu0
      %v549 = vadd.f32 0.0, %v548
      %v550 = vpop.f32.mrb[0].mxu0
      %551 = vdwg.mxu0
      %v584 = vunpack.c.l.b16 %v183
      %v585 = vunpack.c.l.b16 %v184
      %v586 = vunpack.c.l.b16 %v185
      %v587 = vunpack.c.l.b16 %v186
      %v588 = vunpack.c.l.b16 %v187
      %v589 = vunpack.c.l.b16 %v188
      %v590 = vunpack.c.l.b16 %v189
      %v591 = vunpack.c.l.b16 %v190
      %v592 = vunpack.c.l.b16 %v191
      %v593 = vunpack.c.l.b16 %v192
      %v594 = vunpack.c.l.b16 %v193
      %v595 = vunpack.c.l.b16 %v194
      %v596 = vunpack.c.l.b16 %v195
      %v597 = vunpack.c.l.b16 %v196
      %v598 = vunpack.c.l.b16 %v197
      %v599 = vunpack.c.l.b16 %v198
      %v600 = vunpack.c.l.b16 %v199
      %v601 = vunpack.c.l.b16 %v200
      %v602 = vunpack.c.l.b16 %v201
      %v603 = vunpack.c.l.b16 %v202
      %v604 = vunpack.c.l.b16 %v203
      %v605 = vunpack.c.l.b16 %v204
      %v606 = vunpack.c.l.b16 %v205
      %v607 = vunpack.c.l.b16 %v206
      %v608 = vunpack.c.l.b16 %v207
      %v609 = vunpack.c.l.b16 %v208
      %v610 = vunpack.c.l.b16 %v209
      %v611 = vunpack.c.l.b16 %v210
      %v612 = vunpack.c.l.b16 %v211
      %v613 = vunpack.c.l.b16 %v212
      %v614 = vunpack.c.l.b16 %v213
      %v615 = vunpack.c.l.b16 %v214
      %v616 = vpack.c.b16 %v585, %v584
      %v617 = vpack.c.b16 %v587, %v586
      %v618 = vpack.c.b16 %v589, %v588
      %v619 = vpack.c.b16 %v591, %v590
      %v620 = vpack.c.b16 %v593, %v592
      %v621 = vpack.c.b16 %v595, %v594
      %v622 = vpack.c.b16 %v597, %v596
      %v623 = vpack.c.b16 %v599, %v598
      %v624 = vpack.c.b16 %v601, %v600
      %v625 = vpack.c.b16 %v603, %v602
      %v626 = vpack.c.b16 %v605, %v604
      %v627 = vpack.c.b16 %v607, %v606
      %v628 = vpack.c.b16 %v609, %v608
      %v629 = vpack.c.b16 %v611, %v610
      %v630 = vpack.c.b16 %v613, %v612
      %v631 = vpack.c.b16 %v615, %v614
      %v634 = vunpack.c.l.b16 %v215
      %v635 = vunpack.c.l.b16 %v216
      %v636 = vpack.c.b16 %v635, %v634
      %v638 = vsel %vm338, %v616, 0
      %v641 = vsel %vm338, %v617, 0
      %v644 = vsel %vm338, %v618, 0
      %v647 = vsel %vm338, %v619, 0
      %v650 = vsel %vm338, %v620, 0
      %v653 = vsel %vm338, %v621, 0
      %v656 = vsel %vm338, %v622, 0
      %v659 = vsel %vm338, %v623, 0
      %v662 = vsel %vm338, %v624, 0
      %v665 = vsel %vm338, %v625, 0
      %v668 = vsel %vm338, %v626, 0
      %v671 = vsel %vm338, %v627, 0
      %v674 = vsel %vm338, %v628, 0
      %v677 = vsel %vm338, %v629, 0
      %v680 = vsel %vm338, %v630, 0
      %v683 = vsel %vm338, %v631, 0
      %v686 = vsel %vm387, %v636, 0
      %688 = vmatprep.subr.bf16.mxu0 0
      %689 = vmatpush1.bf16.msra.mxu0 %v686
      %690 = vmatprep.subr.bf16.mxu0 0
      %691 = vmatpush1.bf16.msra.mxu0 0
      %692 = vmatprep.subr.bf16.mxu0 0
      %693 = vmatpush1.bf16.msra.mxu0 0
      %694 = vmatprep.subr.bf16.mxu0 0
      %695 = vmatpush1.bf16.msra.mxu0 0
      %696 = vmatprep.subr.bf16.mxu0 0
      %697 = vmatpush1.bf16.msra.mxu0 0
      %698 = vmatprep.subr.bf16.mxu0 0
      %699 = vmatpush1.bf16.msra.mxu0 0
      %700 = vmatprep.subr.bf16.mxu0 0
      %701 = vmatpush1.bf16.msra.mxu0 0
      %702 = vmatprep.subr.bf16.mxu0 0
      %703 = vmatpush1.bf16.msra.mxu0 0
      %704 = vmatprep.subr.bf16.mxu0 0
      %705 = vmatpush1.bf16.msra.mxu0 0
      %706 = vmatprep.subr.bf16.mxu0 0
      %707 = vmatpush1.bf16.msra.mxu0 0
      %708 = vmatprep.subr.bf16.mxu0 0
      %709 = vmatpush1.bf16.msra.mxu0 0
      %710 = vmatprep.subr.bf16.mxu0 0
      %711 = vmatpush1.bf16.msra.mxu0 0
      %712 = vmatprep.subr.bf16.mxu0 0
      %713 = vmatpush1.bf16.msra.mxu0 0
      %714 = vmatprep.subr.bf16.mxu0 0
      %715 = vmatpush1.bf16.msra.mxu0 0
      %716 = vmatprep.subr.bf16.mxu0 0
      %717 = vmatpush1.bf16.msra.mxu0 0
      %718 = vmatprep.subr.bf16.mxu0 0
      %719 = vmatpush1.bf16.msra.mxu0 0
      %720 = vmatprep.mubr.bf16.mxu0 0
      %721 = vmatmul.mubr.bf16.gmra.mrb[0].mxu0 %v638
      %v722 = vpop.f32.mrb[0].mxu0
      %v723 = vadd.f32 %v426, %v722
      %v724 = vpop.f32.mrb[0].mxu0
      %v725 = vpop.f32.mrb[0].mxu0
      %v726 = vadd.f32 %v429, %v725
      %v727 = vpop.f32.mrb[0].mxu0
      %728 = vmatprep.mubr.bf16.mxu0 0
      %729 = vmatmul.mubr.bf16.gmra.mrb[0].mxu0 %v641
      %v730 = vpop.f32.mrb[0].mxu0
      %v731 = vadd.f32 %v434, %v730
      %v732 = vpop.f32.mrb[0].mxu0
      %v733 = vpop.f32.mrb[0].mxu0
      %v734 = vadd.f32 %v437, %v733
      %v735 = vpop.f32.mrb[0].mxu0
      %736 = vmatprep.mubr.bf16.mxu0 0
      %737 = vmatmul.mubr.bf16.gmra.mrb[0].mxu0 %v644
      %v738 = vpop.f32.mrb[0].mxu0
      %v739 = vadd.f32 %v442, %v738
      %v740 = vpop.f32.mrb[0].mxu0
      %v741 = vpop.f32.mrb[0].mxu0
      %v742 = vadd.f32 %v445, %v741
      %v743 = vpop.f32.mrb[0].mxu0
      %744 = vmatprep.mubr.bf16.mxu0 0
      %745 = vmatmul.mubr.bf16.gmra.mrb[0].mxu0 %v647
      %v746 = vpop.f32.mrb[0].mxu0
      %v747 = vadd.f32 %v450, %v746
      %v748 = vpop.f32.mrb[0].mxu0
      %v749 = vpop.f32.mrb[0].mxu0
      %v750 = vadd.f32 %v453, %v749
      %v751 = vpop.f32.mrb[0].mxu0
      %752 = vmatprep.mubr.bf16.mxu0 0
      %753 = vmatmul.mubr.bf16.gmra.mrb[0].mxu0 %v650
      %v754 = vpop.f32.mrb[0].mxu0
      %v755 = vadd.f32 %v458, %v754
      %v756 = vpop.f32.mrb[0].mxu0
      %v757 = vpop.f32.mrb[0].mxu0
      %v758 = vadd.f32 %v461, %v757
      %v759 = vpop.f32.mrb[0].mxu0
      %760 = vmatprep.mubr.bf16.mxu0 0
      %761 = vmatmul.mubr.bf16.gmra.mrb[0].mxu0 %v653
      %v762 = vpop.f32.mrb[0].mxu0
      %v763 = vadd.f32 %v466, %v762
      %v764 = vpop.f32.mrb[0].mxu0
      %v765 = vpop.f32.mrb[0].mxu0
      %v766 = vadd.f32 %v469, %v765
      %v767 = vpop.f32.mrb[0].mxu0
      %768 = vmatprep.mubr.bf16.mxu0 0
      %769 = vmatmul.mubr.bf16.gmra.mrb[0].mxu0 %v656
      %v770 = vpop.f32.mrb[0].mxu0
      %v771 = vadd.f32 %v474, %v770
      %v772 = vpop.f32.mrb[0].mxu0
      %v773 = vpop.f32.mrb[0].mxu0
      %v774 = vadd.f32 %v477, %v773
      %v775 = vpop.f32.mrb[0].mxu0
      %776 = vmatprep.mubr.bf16.mxu0 0
      %777 = vmatmul.mubr.bf16.gmra.mrb[0].mxu0 %v659
      %v778 = vpop.f32.mrb[0].mxu0
      %v779 = vadd.f32 %v482, %v778
      %v780 = vpop.f32.mrb[0].mxu0
      %v781 = vpop.f32.mrb[0].mxu0
      %v782 = vadd.f32 %v485, %v781
      %v783 = vpop.f32.mrb[0].mxu0
      %784 = vmatprep.mubr.bf16.mxu0 0
      %785 = vmatmul.mubr.bf16.gmra.mrb[0].mxu0 %v662
      %v786 = vpop.f32.mrb[0].mxu0
      %v787 = vadd.f32 %v490, %v786
      %v788 = vpop.f32.mrb[0].mxu0
      %v789 = vpop.f32.mrb[0].mxu0
      %v790 = vadd.f32 %v493, %v789
      %v791 = vpop.f32.mrb[0].mxu0
      %792 = vmatprep.mubr.bf16.mxu0 0
      %793 = vmatmul.mubr.bf16.gmra.mrb[0].mxu0 %v665
      %v794 = vpop.f32.mrb[0].mxu0
      %v795 = vadd.f32 %v498, %v794
      %v796 = vpop.f32.mrb[0].mxu0
      %v797 = vpop.f32.mrb[0].mxu0
      %v798 = vadd.f32 %v501, %v797
      %v799 = vpop.f32.mrb[0].mxu0
      %800 = vmatprep.mubr.bf16.mxu0 0
      %801 = vmatmul.mubr.bf16.gmra.mrb[0].mxu0 %v668
      %v802 = vpop.f32.mrb[0].mxu0
      %v803 = vadd.f32 %v506, %v802
      %v804 = vpop.f32.mrb[0].mxu0
      %v805 = vpop.f32.mrb[0].mxu0
      %v806 = vadd.f32 %v509, %v805
      %v807 = vpop.f32.mrb[0].mxu0
      %808 = vmatprep.mubr.bf16.mxu0 0
      %809 = vmatmul.mubr.bf16.gmra.mrb[0].mxu0 %v671
      %v810 = vpop.f32.mrb[0].mxu0
      %v811 = vadd.f32 %v514, %v810
      %v812 = vpop.f32.mrb[0].mxu0
      %v813 = vpop.f32.mrb[0].mxu0
      %v814 = vadd.f32 %v517, %v813
      %v815 = vpop.f32.mrb[0].mxu0
      %816 = vmatprep.mubr.bf16.mxu0 0
      %817 = vmatmul.mubr.bf16.gmra.mrb[0].mxu0 %v674
      %v818 = vpop.f32.mrb[0].mxu0
      %v819 = vadd.f32 %v522, %v818
      %v820 = vpop.f32.mrb[0].mxu0
      %v821 = vpop.f32.mrb[0].mxu0
      %v822 = vadd.f32 %v525, %v821
      %v823 = vpop.f32.mrb[0].mxu0
      %824 = vmatprep.mubr.bf16.mxu0 0
      %825 = vmatmul.mubr.bf16.gmra.mrb[0].mxu0 %v677
      %v826 = vpop.f32.mrb[0].mxu0
      %v827 = vadd.f32 %v530, %v826
      %v828 = vpop.f32.mrb[0].mxu0
      %v829 = vpop.f32.mrb[0].mxu0
      %v830 = vadd.f32 %v533, %v829
      %v831 = vpop.f32.mrb[0].mxu0
      %832 = vmatprep.mubr.bf16.mxu0 0
      %833 = vmatmul.mubr.bf16.gmra.mrb[0].mxu0 %v680
      %v834 = vpop.f32.mrb[0].mxu0
      %v835 = vadd.f32 %v538, %v834
      %v836 = vpop.f32.mrb[0].mxu0
      %v837 = vpop.f32.mrb[0].mxu0
      %v838 = vadd.f32 %v541, %v837
      %v839 = vpop.f32.mrb[0].mxu0
      %840 = vmatprep.mubr.bf16.mxu0 0
      %841 = vmatmul.mubr.bf16.gmra.mrb[0].mxu0 %v683
      %v842 = vpop.f32.mrb[0].mxu0
      %v843 = vadd.f32 %v546, %v842
      %v844 = vpop.f32.mrb[0].mxu0
      %v845 = vpop.f32.mrb[0].mxu0
      %v846 = vadd.f32 %v549, %v845
      %v847 = vpop.f32.mrb[0].mxu0
      %848 = vdwg.mxu0
      %s849 = scalar_lea.vmem %s172, 16
      %v850 = vld [vmem:[%s849] sm:$0xf]
      %v851 = vld [vmem:[%s849 + $0x4] sm:$0xf]
      %v852 = vld [vmem:[%s849 + $0x8] sm:$0xf]
      %v853 = vld [vmem:[%s849 + $0xc] sm:$0xf]
      %v854 = vld [vmem:[%s849 + $0x10] sm:$0xf]
      %v855 = vld [vmem:[%s849 + $0x14] sm:$0xf]
      %v856 = vld [vmem:[%s849 + $0x18] sm:$0xf]
      %v857 = vld [vmem:[%s849 + $0x1c] sm:$0xf]
      %v858 = vld [vmem:[%s849 + $0x20] sm:$0xf]
      %v859 = vld [vmem:[%s849 + $0x24] sm:$0xf]
      %v860 = vld [vmem:[%s849 + $0x28] sm:$0xf]
      %v861 = vld [vmem:[%s849 + $0x2c] sm:$0xf]
      %v862 = vld [vmem:[%s849 + $0x30] sm:$0xf]
      %v863 = vld [vmem:[%s849 + $0x34] sm:$0xf]
      %v864 = vld [vmem:[%s849 + $0x38] sm:$0xf]
      %v865 = vld [vmem:[%s849 + $0x3c] sm:$0xf]
      %v866 = vld [vmem:[%s849 + $0x40] sm:$0xf]
      %v867 = vld [vmem:[%s849 + $0x44] sm:$0xf]
      %v868 = vld [vmem:[%s849 + $0x48] sm:$0xf]
      %v869 = vld [vmem:[%s849 + $0x4c] sm:$0xf]
      %v870 = vld [vmem:[%s849 + $0x50] sm:$0xf]
      %v871 = vld [vmem:[%s849 + $0x54] sm:$0xf]
      %v872 = vld [vmem:[%s849 + $0x58] sm:$0xf]
      %v873 = vld [vmem:[%s849 + $0x5c] sm:$0xf]
      %v874 = vld [vmem:[%s849 + $0x60] sm:$0xf]
      %v875 = vld [vmem:[%s849 + $0x64] sm:$0xf]
      %v876 = vld [vmem:[%s849 + $0x68] sm:$0xf]
      %v877 = vld [vmem:[%s849 + $0x6c] sm:$0xf]
      %v878 = vld [vmem:[%s849 + $0x70] sm:$0xf]
      %v879 = vld [vmem:[%s849 + $0x74] sm:$0xf]
      %v880 = vld [vmem:[%s849 + $0x78] sm:$0xf]
      %v881 = vld [vmem:[%s849 + $0x7c] sm:$0xf]
      %s882 = scalar_lea.vmem %s1, 16
      %v883 = vld [vmem:[%s882] sm:$0xf]
      %v884 = vld [vmem:[%s882 + $0x4] sm:$0x3]
      %v917 = vunpack.c.l.b16 %v850
      %v918 = vunpack.c.l.b16 %v851
      %v919 = vunpack.c.l.b16 %v852
      %v920 = vunpack.c.l.b16 %v853
      %v921 = vunpack.c.l.b16 %v854
      %v922 = vunpack.c.l.b16 %v855
      %v923 = vunpack.c.l.b16 %v856
      %v924 = vunpack.c.l.b16 %v857
      %v925 = vunpack.c.l.b16 %v858
      %v926 = vunpack.c.l.b16 %v859
      %v927 = vunpack.c.l.b16 %v860
      %v928 = vunpack.c.l.b16 %v861
      %v929 = vunpack.c.l.b16 %v862
      %v930 = vunpack.c.l.b16 %v863
      %v931 = vunpack.c.l.b16 %v864
      %v932 = vunpack.c.l.b16 %v865
      %v933 = vunpack.c.l.b16 %v866
      %v934 = vunpack.c.l.b16 %v867
      %v935 = vunpack.c.l.b16 %v868
      %v936 = vunpack.c.l.b16 %v869
      %v937 = vunpack.c.l.b16 %v870
      %v938 = vunpack.c.l.b16 %v871
      %v939 = vunpack.c.l.b16 %v872
      %v940 = vunpack.c.l.b16 %v873
      %v941 = vunpack.c.l.b16 %v874
      %v942 = vunpack.c.l.b16 %v875
      %v943 = vunpack.c.l.b16 %v876
      %v944 = vunpack.c.l.b16 %v877
      %v945 = vunpack.c.l.b16 %v878
      %v946 = vunpack.c.l.b16 %v879
      %v947 = vunpack.c.l.b16 %v880
      %v948 = vunpack.c.l.b16 %v881
      %v949 = vpack.c.b16 %v918, %v917
      %v950 = vpack.c.b16 %v920, %v919
      %v951 = vpack.c.b16 %v922, %v921
      %v952 = vpack.c.b16 %v924, %v923
      %v953 = vpack.c.b16 %v926, %v925
      %v954 = vpack.c.b16 %v928, %v927
      %v955 = vpack.c.b16 %v930, %v929
      %v956 = vpack.c.b16 %v932, %v931
      %v957 = vpack.c.b16 %v934, %v933
      %v958 = vpack.c.b16 %v936, %v935
      %v959 = vpack.c.b16 %v938, %v937
      %v960 = vpack.c.b16 %v940, %v939
      %v961 = vpack.c.b16 %v942, %v941
      %v962 = vpack.c.b16 %v944, %v943
      %v963 = vpack.c.b16 %v946, %v945
      %v964 = vpack.c.b16 %v948, %v947
      %v967 = vunpack.c.l.b16 %v883
      %v968 = vunpack.c.l.b16 %v884
      %v969 = vpack.c.b16 %v968, %v967
      %v971 = vsel %vm338, %v949, 0
      %v974 = vsel %vm338, %v950, 0
      %v977 = vsel %vm338, %v951, 0
      %v980 = vsel %vm338, %v952, 0
      %v983 = vsel %vm338, %v953, 0
      %v986 = vsel %vm338, %v954, 0
      %v989 = vsel %vm338, %v955, 0
      %v992 = vsel %vm338, %v956, 0
      %v995 = vsel %vm338, %v957, 0
      %v998 = vsel %vm338, %v958, 0
      %v1001 = vsel %vm338, %v959, 0
      %v1004 = vsel %vm338, %v960, 0
      %v1007 = vsel %vm338, %v961, 0
      %v1010 = vsel %vm338, %v962, 0
      %v1013 = vsel %vm338, %v963, 0
      %v1016 = vsel %vm338, %v964, 0
      %v1019 = vsel %vm387, %v969, 0
      %1021 = vmatprep.subr.bf16.mxu0 0
      %1022 = vmatpush1.bf16.msra.mxu0 %v1019
      %1023 = vmatprep.subr.bf16.mxu0 0
      %1024 = vmatpush1.bf16.msra.mxu0 0
      %1025 = vmatprep.subr.bf16.mxu0 0
      %1026 = vmatpush1.bf16.msra.mxu0 0
      %1027 = vmatprep.subr.bf16.mxu0 0
      %1028 = vmatpush1.bf16.msra.mxu0 0
      %1029 = vmatprep.subr.bf16.mxu0 0
      %1030 = vmatpush1.bf16.msra.mxu0 0
      %1031 = vmatprep.subr.bf16.mxu0 0
      %1032 = vmatpush1.bf16.msra.mxu0 0
      %1033 = vmatprep.subr.bf16.mxu0 0
      %1034 = vmatpush1.bf16.msra.mxu0 0
      %1035 = vmatprep.subr.bf16.mxu0 0
      %1036 = vmatpush1.bf16.msra.mxu0 0
      %1037 = vmatprep.subr.bf16.mxu0 0
      %1038 = vmatpush1.bf16.msra.mxu0 0
      %1039 = vmatprep.subr.bf16.mxu0 0
      %1040 = vmatpush1.bf16.msra.mxu0 0
      %1041 = vmatprep.subr.bf16.mxu0 0
      %1042 = vmatpush1.bf16.msra.mxu0 0
      %1043 = vmatprep.subr.bf16.mxu0 0
      %1044 = vmatpush1.bf16.msra.mxu0 0
      %1045 = vmatprep.subr.bf16.mxu0 0
      %1046 = vmatpush1.bf16.msra.mxu0 0
      %1047 = vmatprep.subr.bf16.mxu0 0
      %1048 = vmatpush1.bf16.msra.mxu0 0
      %1049 = vmatprep.subr.bf16.mxu0 0
      %1050 = vmatpush1.bf16.msra.mxu0 0
      %1051 = vmatprep.subr.bf16.mxu0 0
      %1052 = vmatpush1.bf16.msra.mxu0 0
      %1053 = vmatprep.mubr.bf16.mxu0 0
      %1054 = vmatmul.mubr.bf16.gmra.mrb[0].mxu0 %v971
      %v1055 = vpop.f32.mrb[0].mxu0
      %v1056 = vadd.f32 0.0, %v1055
      %v1057 = vpop.f32.mrb[0].mxu0
      %v1058 = vpop.f32.mrb[0].mxu0
      %v1059 = vadd.f32 0.0, %v1058
      %v1060 = vpop.f32.mrb[0].mxu0
      %1061 = vmatprep.mubr.bf16.mxu0 0
      %1062 = vmatmul.mubr.bf16.gmra.mrb[0].mxu0 %v974
      %v1063 = vpop.f32.mrb[0].mxu0
      %v1064 = vadd.f32 0.0, %v1063
      %v1065 = vpop.f32.mrb[0].mxu0
      %v1066 = vpop.f32.mrb[0].mxu0
      %v1067 = vadd.f32 0.0, %v1066
      %v1068 = vpop.f32.mrb[0].mxu0
      %1069 = vmatprep.mubr.bf16.mxu0 0
      %1070 = vmatmul.mubr.bf16.gmra.mrb[0].mxu0 %v977
      %v1071 = vpop.f32.mrb[0].mxu0
      %v1072 = vadd.f32 0.0, %v1071
      %v1073 = vpop.f32.mrb[0].mxu0
      %v1074 = vpop.f32.mrb[0].mxu0
      %v1075 = vadd.f32 0.0, %v1074
      %v1076 = vpop.f32.mrb[0].mxu0
      %1077 = vmatprep.mubr.bf16.mxu0 0
      %1078 = vmatmul.mubr.bf16.gmra.mrb[0].mxu0 %v980
      %v1079 = vpop.f32.mrb[0].mxu0
      %v1080 = vadd.f32 0.0, %v1079
      %v1081 = vpop.f32.mrb[0].mxu0
      %v1082 = vpop.f32.mrb[0].mxu0
      %v1083 = vadd.f32 0.0, %v1082
      %v1084 = vpop.f32.mrb[0].mxu0
      %1085 = vmatprep.mubr.bf16.mxu0 0
      %1086 = vmatmul.mubr.bf16.gmra.mrb[0].mxu0 %v983
      %v1087 = vpop.f32.mrb[0].mxu0
      %v1088 = vadd.f32 0.0, %v1087
      %v1089 = vpop.f32.mrb[0].mxu0
      %v1090 = vpop.f32.mrb[0].mxu0
      %v1091 = vadd.f32 0.0, %v1090
      %v1092 = vpop.f32.mrb[0].mxu0
      %1093 = vmatprep.mubr.bf16.mxu0 0
      %1094 = vmatmul.mubr.bf16.gmra.mrb[0].mxu0 %v986
      %v1095 = vpop.f32.mrb[0].mxu0
      %v1096 = vadd.f32 0.0, %v1095
      %v1097 = vpop.f32.mrb[0].mxu0
      %v1098 = vpop.f32.mrb[0].mxu0
      %v1099 = vadd.f32 0.0, %v1098
      %v1100 = vpop.f32.mrb[0].mxu0
      %1101 = vmatprep.mubr.bf16.mxu0 0
      %1102 = vmatmul.mubr.bf16.gmra.mrb[0].mxu0 %v989
      %v1103 = vpop.f32.mrb[0].mxu0
      %v1104 = vadd.f32 0.0, %v1103
      %v1105 = vpop.f32.mrb[0].mxu0
      %v1106 = vpop.f32.mrb[0].mxu0
      %v1107 = vadd.f32 0.0, %v1106
      %v1108 = vpop.f32.mrb[0].mxu0
      %1109 = vmatprep.mubr.bf16.mxu0 0
      %1110 = vmatmul.mubr.bf16.gmra.mrb[0].mxu0 %v992
      %v1111 = vpop.f32.mrb[0].mxu0
      %v1112 = vadd.f32 0.0, %v1111
      %v1113 = vpop.f32.mrb[0].mxu0
      %v1114 = vpop.f32.mrb[0].mxu0
      %v1115 = vadd.f32 0.0, %v1114
      %v1116 = vpop.f32.mrb[0].mxu0
      %1117 = vmatprep.mubr.bf16.mxu0 0
      %1118 = vmatmul.mubr.bf16.gmra.mrb[0].mxu0 %v995
      %v1119 = vpop.f32.mrb[0].mxu0
      %v1120 = vadd.f32 0.0, %v1119
      %v1121 = vpop.f32.mrb[0].mxu0
      %v1122 = vpop.f32.mrb[0].mxu0
      %v1123 = vadd.f32 0.0, %v1122
      %v1124 = vpop.f32.mrb[0].mxu0
      %1125 = vmatprep.mubr.bf16.mxu0 0
      %1126 = vmatmul.mubr.bf16.gmra.mrb[0].mxu0 %v998
      %v1127 = vpop.f32.mrb[0].mxu0
      %v1128 = vadd.f32 0.0, %v1127
      %v1129 = vpop.f32.mrb[0].mxu0
      %v1130 = vpop.f32.mrb[0].mxu0
      %v1131 = vadd.f32 0.0, %v1130
      %v1132 = vpop.f32.mrb[0].mxu0
      %1133 = vmatprep.mubr.bf16.mxu0 0
      %1134 = vmatmul.mubr.bf16.gmra.mrb[0].mxu0 %v1001
      %v1135 = vpop.f32.mrb[0].mxu0
      %v1136 = vadd.f32 0.0, %v1135
      %v1137 = vpop.f32.mrb[0].mxu0
      %v1138 = vpop.f32.mrb[0].mxu0
      %v1139 = vadd.f32 0.0, %v1138
      %v1140 = vpop.f32.mrb[0].mxu0
      %1141 = vmatprep.mubr.bf16.mxu0 0
      %1142 = vmatmul.mubr.bf16.gmra.mrb[0].mxu0 %v1004
      %v1143 = vpop.f32.mrb[0].mxu0
      %v1144 = vadd.f32 0.0, %v1143
      %v1145 = vpop.f32.mrb[0].mxu0
      %v1146 = vpop.f32.mrb[0].mxu0
      %v1147 = vadd.f32 0.0, %v1146
      %v1148 = vpop.f32.mrb[0].mxu0
      %1149 = vmatprep.mubr.bf16.mxu0 0
      %1150 = vmatmul.mubr.bf16.gmra.mrb[0].mxu0 %v1007
      %v1151 = vpop.f32.mrb[0].mxu0
      %v1152 = vadd.f32 0.0, %v1151
      %v1153 = vpop.f32.mrb[0].mxu0
      %v1154 = vpop.f32.mrb[0].mxu0
      %v1155 = vadd.f32 0.0, %v1154
      %v1156 = vpop.f32.mrb[0].mxu0
      %1157 = vmatprep.mubr.bf16.mxu0 0
      %1158 = vmatmul.mubr.bf16.gmra.mrb[0].mxu0 %v1010
      %v1159 = vpop.f32.mrb[0].mxu0
      %v1160 = vadd.f32 0.0, %v1159
      %v1161 = vpop.f32.mrb[0].mxu0
      %v1162 = vpop.f32.mrb[0].mxu0
      %v1163 = vadd.f32 0.0, %v1162
      %v1164 = vpop.f32.mrb[0].mxu0
      %1165 = vmatprep.mubr.bf16.mxu0 0
      %1166 = vmatmul.mubr.bf16.gmra.mrb[0].mxu0 %v1013
      %v1167 = vpop.f32.mrb[0].mxu0
      %v1168 = vadd.f32 0.0, %v1167
      %v1169 = vpop.f32.mrb[0].mxu0
      %v1170 = vpop.f32.mrb[0].mxu0
      %v1171 = vadd.f32 0.0, %v1170
      %v1172 = vpop.f32.mrb[0].mxu0
      %1173 = vmatprep.mubr.bf16.mxu0 0
      %1174 = vmatmul.mubr.bf16.gmra.mrb[0].mxu0 %v1016
      %v1175 = vpop.f32.mrb[0].mxu0
      %v1176 = vadd.f32 0.0, %v1175
      %v1177 = vpop.f32.mrb[0].mxu0
      %v1178 = vpop.f32.mrb[0].mxu0
      %v1179 = vadd.f32 0.0, %v1178
      %v1180 = vpop.f32.mrb[0].mxu0
      %1181 = vdwg.mxu0
      %v1182 = vadd.f32 %v723, %v1056
      %v1183 = vadd.f32 %v726, %v1059
      %v1184 = vadd.f32 %v731, %v1064
      %v1185 = vadd.f32 %v734, %v1067
      %v1186 = vadd.f32 %v739, %v1072
      %v1187 = vadd.f32 %v742, %v1075
      %v1188 = vadd.f32 %v747, %v1080
      %v1189 = vadd.f32 %v750, %v1083
      %v1190 = vadd.f32 %v755, %v1088
      %v1191 = vadd.f32 %v758, %v1091
      %v1192 = vadd.f32 %v763, %v1096
      %v1193 = vadd.f32 %v766, %v1099
      %v1194 = vadd.f32 %v771, %v1104
      %v1195 = vadd.f32 %v774, %v1107
      %v1196 = vadd.f32 %v779, %v1112
      %v1197 = vadd.f32 %v782, %v1115
      %v1198 = vadd.f32 %v787, %v1120
      %v1199 = vadd.f32 %v790, %v1123
      %v1200 = vadd.f32 %v795, %v1128
      %v1201 = vadd.f32 %v798, %v1131
      %v1202 = vadd.f32 %v803, %v1136
      %v1203 = vadd.f32 %v806, %v1139
      %v1204 = vadd.f32 %v811, %v1144
      %v1205 = vadd.f32 %v814, %v1147
      %v1206 = vadd.f32 %v819, %v1152
      %v1207 = vadd.f32 %v822, %v1155
      %v1208 = vadd.f32 %v827, %v1160
      %v1209 = vadd.f32 %v830, %v1163
      %v1210 = vadd.f32 %v835, %v1168
      %v1211 = vadd.f32 %v838, %v1171
      %v1212 = vadd.f32 %v843, %v1176
      %v1213 = vadd.f32 %v846, %v1179
      %vm1214 = vcmask 31744
      %1215 = vst.msk [vmem:[%s177] sm:$0xff] %vm1214, %v1182
      %1216 = vst.msk [vmem:[%s177 + $0x8] sm:$0xff] %vm1214, %v1183
      %1217 = vst.msk [vmem:[%s177 + $0x10] sm:$0xff] %vm1214, %v1184
      %1218 = vst.msk [vmem:[%s177 + $0x18] sm:$0xff] %vm1214, %v1185
      %1219 = vst.msk [vmem:[%s177 + $0x20] sm:$0xff] %vm1214, %v1186
      %1220 = vst.msk [vmem:[%s177 + $0x28] sm:$0xff] %vm1214, %v1187
      %1221 = vst.msk [vmem:[%s177 + $0x30] sm:$0xff] %vm1214, %v1188
      %1222 = vst.msk [vmem:[%s177 + $0x38] sm:$0xff] %vm1214, %v1189
      %1223 = vst.msk [vmem:[%s177 + $0x40] sm:$0xff] %vm1214, %v1190
      %1224 = vst.msk [vmem:[%s177 + $0x48] sm:$0xff] %vm1214, %v1191
      %1225 = vst.msk [vmem:[%s177 + $0x50] sm:$0xff] %vm1214, %v1192
      %1226 = vst.msk [vmem:[%s177 + $0x58] sm:$0xff] %vm1214, %v1193
      %1227 = vst.msk [vmem:[%s177 + $0x60] sm:$0xff] %vm1214, %v1194
      %1228 = vst.msk [vmem:[%s177 + $0x68] sm:$0xff] %vm1214, %v1195
      %1229 = vst.msk [vmem:[%s177 + $0x70] sm:$0xff] %vm1214, %v1196
      %1230 = vst.msk [vmem:[%s177 + $0x78] sm:$0xff] %vm1214, %v1197
      %1231 = vst.msk [vmem:[%s177 + $0x80] sm:$0xff] %vm1214, %v1198
      %1232 = vst.msk [vmem:[%s177 + $0x88] sm:$0xff] %vm1214, %v1199
      %1233 = vst.msk [vmem:[%s177 + $0x90] sm:$0xff] %vm1214, %v1200
      %1234 = vst.msk [vmem:[%s177 + $0x98] sm:$0xff] %vm1214, %v1201
      %1235 = vst.msk [vmem:[%s177 + $0xa0] sm:$0xff] %vm1214, %v1202
      %1236 = vst.msk [vmem:[%s177 + $0xa8] sm:$0xff] %vm1214, %v1203
      %1237 = vst.msk [vmem:[%s177 + $0xb0] sm:$0xff] %vm1214, %v1204
      %1238 = vst.msk [vmem:[%s177 + $0xb8] sm:$0xff] %vm1214, %v1205
      %1239 = vst.msk [vmem:[%s177 + $0xc0] sm:$0xff] %vm1214, %v1206
      %1240 = vst.msk [vmem:[%s177 + $0xc8] sm:$0xff] %vm1214, %v1207
      %1241 = vst.msk [vmem:[%s177 + $0xd0] sm:$0xff] %vm1214, %v1208
      %1242 = vst.msk [vmem:[%s177 + $0xd8] sm:$0xff] %vm1214, %v1209
      %1243 = vst.msk [vmem:[%s177 + $0xe0] sm:$0xff] %vm1214, %v1210
      %1244 = vst.msk [vmem:[%s177 + $0xe8] sm:$0xff] %vm1214, %v1211
      %1245 = vst.msk [vmem:[%s177 + $0xf0] sm:$0xff] %vm1214, %v1212
      %1246 = vst.msk [vmem:[%s177 + $0xf8] sm:$0xff] %vm1214, %v1213
      %v1247 = vsel %vm1214, %v1182, 0.0
      %v1248 = vsel %vm1214, %v1183, 0.0
      %v1249 = vadd.f32 %v1247, %v1248
      %v1250 = vsel %vm1214, %v1184, 0.0
      %v1251 = vadd.f32 %v1249, %v1250
      %v1252 = vsel %vm1214, %v1185, 0.0
      %v1253 = vadd.f32 %v1251, %v1252
      %v1254 = vsel %vm1214, %v1186, 0.0
      %v1255 = vadd.f32 %v1253, %v1254
      %v1256 = vsel %vm1214, %v1187, 0.0
      %v1257 = vadd.f32 %v1255, %v1256
      %v1258 = vsel %vm1214, %v1188, 0.0
      %v1259 = vadd.f32 %v1257, %v1258
      %v1260 = vsel %vm1214, %v1189, 0.0
      %v1261 = vadd.f32 %v1259, %v1260
      %v1262 = vsel %vm1214, %v1190, 0.0
      %v1263 = vadd.f32 %v1261, %v1262
      %v1264 = vsel %vm1214, %v1191, 0.0
      %v1265 = vadd.f32 %v1263, %v1264
      %v1266 = vsel %vm1214, %v1192, 0.0
      %v1267 = vadd.f32 %v1265, %v1266
      %v1268 = vsel %vm1214, %v1193, 0.0
      %v1269 = vadd.f32 %v1267, %v1268
      %v1270 = vsel %vm1214, %v1194, 0.0
      %v1271 = vadd.f32 %v1269, %v1270
      %v1272 = vsel %vm1214, %v1195, 0.0
      %v1273 = vadd.f32 %v1271, %v1272
      %v1274 = vsel %vm1214, %v1196, 0.0
      %v1275 = vadd.f32 %v1273, %v1274
      %v1276 = vsel %vm1214, %v1197, 0.0
      %v1277 = vadd.f32 %v1275, %v1276
      %v1278 = vsel %vm1214, %v1198, 0.0
      %v1279 = vadd.f32 %v1277, %v1278
      %v1280 = vsel %vm1214, %v1199, 0.0
      %v1281 = vadd.f32 %v1279, %v1280
      %v1282 = vsel %vm1214, %v1200, 0.0
      %v1283 = vadd.f32 %v1281, %v1282
      %v1284 = vsel %vm1214, %v1201, 0.0
      %v1285 = vadd.f32 %v1283, %v1284
      %v1286 = vsel %vm1214, %v1202, 0.0
      %v1287 = vadd.f32 %v1285, %v1286
      %v1288 = vsel %vm1214, %v1203, 0.0
      %v1289 = vadd.f32 %v1287, %v1288
      %v1290 = vsel %vm1214, %v1204, 0.0
      %v1291 = vadd.f32 %v1289, %v1290
      %v1292 = vsel %vm1214, %v1205, 0.0
      %v1293 = vadd.f32 %v1291, %v1292
      %v1294 = vsel %vm1214, %v1206, 0.0
      %v1295 = vadd.f32 %v1293, %v1294
      %v1296 = vsel %vm1214, %v1207, 0.0
      %v1297 = vadd.f32 %v1295, %v1296
      %v1298 = vsel %vm1214, %v1208, 0.0
      %v1299 = vadd.f32 %v1297, %v1298
      %v1300 = vsel %vm1214, %v1209, 0.0
      %v1301 = vadd.f32 %v1299, %v1300
      %v1302 = vsel %vm1214, %v1210, 0.0
      %v1303 = vadd.f32 %v1301, %v1302
      %v1304 = vsel %vm1214, %v1211, 0.0
      %v1305 = vadd.f32 %v1303, %v1304
      %v1306 = vsel %vm1214, %v1212, 0.0
      %v1307 = vadd.f32 %v1305, %v1306
      %v1308 = vsel %vm1214, %v1213, 0.0
      %v1309 = vadd.f32 %v1307, %v1308
      %v1310 = vrot.slane %v1309, 4
      %v1311 = vadd.f32 %v1309, %v1310
      %v1312 = vrot.slane %v1311, 2
      %v1313 = vadd.f32 %v1311, %v1312
      %v1314 = vrot.slane %v1313, 1
      %v1315 = vadd.f32 %v1313, %v1314
      %vm1316 = vcmask 24576
      %1317 = vst.msk [vmem:[%s181] sm:$0x1] %vm1316, %v1315
      %v1318 = vmul.f32 %v1182, %v1182
      %v1319 = vmul.f32 %v1183, %v1183
      %v1320 = vmul.f32 %v1184, %v1184
      %v1321 = vmul.f32 %v1185, %v1185
      %v1322 = vmul.f32 %v1186, %v1186
      %v1323 = vmul.f32 %v1187, %v1187
      %v1324 = vmul.f32 %v1188, %v1188
      %v1325 = vmul.f32 %v1189, %v1189
      %v1326 = vmul.f32 %v1190, %v1190
      %v1327 = vmul.f32 %v1191, %v1191
      %v1328 = vmul.f32 %v1192, %v1192
      %v1329 = vmul.f32 %v1193, %v1193
      %v1330 = vmul.f32 %v1194, %v1194
      %v1331 = vmul.f32 %v1195, %v1195
      %v1332 = vmul.f32 %v1196, %v1196
      %v1333 = vmul.f32 %v1197, %v1197
      %v1334 = vmul.f32 %v1198, %v1198
      %v1335 = vmul.f32 %v1199, %v1199
      %v1336 = vmul.f32 %v1200, %v1200
      %v1337 = vmul.f32 %v1201, %v1201
      %v1338 = vmul.f32 %v1202, %v1202
      %v1339 = vmul.f32 %v1203, %v1203
      %v1340 = vmul.f32 %v1204, %v1204
      %v1341 = vmul.f32 %v1205, %v1205
      %v1342 = vmul.f32 %v1206, %v1206
      %v1343 = vmul.f32 %v1207, %v1207
      %v1344 = vmul.f32 %v1208, %v1208
      %v1345 = vmul.f32 %v1209, %v1209
      %v1346 = vmul.f32 %v1210, %v1210
      %v1347 = vmul.f32 %v1211, %v1211
      %v1348 = vmul.f32 %v1212, %v1212
      %v1349 = vmul.f32 %v1213, %v1213
      %v1350 = vsel %vm1214, %v1318, 0.0
      %v1351 = vsel %vm1214, %v1319, 0.0
      %v1352 = vadd.f32 %v1350, %v1351
      %v1353 = vsel %vm1214, %v1320, 0.0
      %v1354 = vadd.f32 %v1352, %v1353
      %v1355 = vsel %vm1214, %v1321, 0.0
      %v1356 = vadd.f32 %v1354, %v1355
      %v1357 = vsel %vm1214, %v1322, 0.0
      %v1358 = vadd.f32 %v1356, %v1357
      %v1359 = vsel %vm1214, %v1323, 0.0
      %v1360 = vadd.f32 %v1358, %v1359
      %v1361 = vsel %vm1214, %v1324, 0.0
      %v1362 = vadd.f32 %v1360, %v1361
      %v1363 = vsel %vm1214, %v1325, 0.0
      %v1364 = vadd.f32 %v1362, %v1363
      %v1365 = vsel %vm1214, %v1326, 0.0
      %v1366 = vadd.f32 %v1364, %v1365
      %v1367 = vsel %vm1214, %v1327, 0.0
      %v1368 = vadd.f32 %v1366, %v1367
      %v1369 = vsel %vm1214, %v1328, 0.0
      %v1370 = vadd.f32 %v1368, %v1369
      %v1371 = vsel %vm1214, %v1329, 0.0
      %v1372 = vadd.f32 %v1370, %v1371
      %v1373 = vsel %vm1214, %v1330, 0.0
      %v1374 = vadd.f32 %v1372, %v1373
      %v1375 = vsel %vm1214, %v1331, 0.0
      %v1376 = vadd.f32 %v1374, %v1375
      %v1377 = vsel %vm1214, %v1332, 0.0
      %v1378 = vadd.f32 %v1376, %v1377
      %v1379 = vsel %vm1214, %v1333, 0.0
      %v1380 = vadd.f32 %v1378, %v1379
      %v1381 = vsel %vm1214, %v1334, 0.0
      %v1382 = vadd.f32 %v1380, %v1381
      %v1383 = vsel %vm1214, %v1335, 0.0
      %v1384 = vadd.f32 %v1382, %v1383
      %v1385 = vsel %vm1214, %v1336, 0.0
      %v1386 = vadd.f32 %v1384, %v1385
      %v1387 = vsel %vm1214, %v1337, 0.0
      %v1388 = vadd.f32 %v1386, %v1387
      %v1389 = vsel %vm1214, %v1338, 0.0
      %v1390 = vadd.f32 %v1388, %v1389
      %v1391 = vsel %vm1214, %v1339, 0.0
      %v1392 = vadd.f32 %v1390, %v1391
      %v1393 = vsel %vm1214, %v1340, 0.0
      %v1394 = vadd.f32 %v1392, %v1393
      %v1395 = vsel %vm1214, %v1341, 0.0
      %v1396 = vadd.f32 %v1394, %v1395
      %v1397 = vsel %vm1214, %v1342, 0.0
      %v1398 = vadd.f32 %v1396, %v1397
      %v1399 = vsel %vm1214, %v1343, 0.0
      %v1400 = vadd.f32 %v1398, %v1399
      %v1401 = vsel %vm1214, %v1344, 0.0
      %v1402 = vadd.f32 %v1400, %v1401
      %v1403 = vsel %vm1214, %v1345, 0.0
      %v1404 = vadd.f32 %v1402, %v1403
      %v1405 = vsel %vm1214, %v1346, 0.0
      %v1406 = vadd.f32 %v1404, %v1405
      %v1407 = vsel %vm1214, %v1347, 0.0
      %v1408 = vadd.f32 %v1406, %v1407
      %v1409 = vsel %vm1214, %v1348, 0.0
      %v1410 = vadd.f32 %v1408, %v1409
      %v1411 = vsel %vm1214, %v1349, 0.0
      %v1412 = vadd.f32 %v1410, %v1411
      %v1413 = vrot.slane %v1412, 4
      %v1414 = vadd.f32 %v1412, %v1413
      %v1415 = vrot.slane %v1414, 2
      %v1416 = vadd.f32 %v1414, %v1415
      %v1417 = vrot.slane %v1416, 1
      %v1418 = vadd.f32 %v1416, %v1417
      %1419 = vst.msk [vmem:[%s181 + $0x1] sm:$0x1] %vm1316, %v1418
      %p1420 = scmp.lt.s32.totalorder %s15, 1
      %s1421 = scalar_select %p1420, %s15, 1
      %s1422 = smul.addr %s1421, 32
      %s1423 = smul.addr %s1422, 8
      %s1424 = scalar_lea.vmem %s2, %s1423
      %p1425 = scmp.lt.s32.totalorder %s15, 1
      %s1426 = scalar_select %p1425, %s15, 1
      %s1427 = smul.addr %s1426, 2
      %s1428 = scalar_lea.vmem %s3, %s1427
      // Predicated region
      $region29: #{bottleneck_forward.8} parent=27 // pred_check
        %p1429 = pneg %p80
      $region30: #{bottleneck_forward.8} parent=27 // pred_check_branch
        %1431 = sbr.rel (%p1429) target = $region32
      $region31: #{bottleneck_forward.8} parent=27 // pred_region
        _
      $region32: #{bottleneck_forward.8} parent=27 // pred_fallthru
        _
      // Predicated region
      $region33: #{bottleneck_forward.8} parent=27 // pred_check
        %p1432 = pneg %p106
      $region34: #{bottleneck_forward.8} parent=27 // pred_check_branch
        %1434 = sbr.rel (%p1432) target = $region36
      $region35: #{bottleneck_forward.8} parent=27 // pred_region
        _
      $region36: #{bottleneck_forward.8} parent=27 // pred_fallthru
        _
    $region28: #{bottleneck_forward.8} parent=5 // pred_fallthru
      _
    %p1435 = scmp.le.s32.totalorder 2, %s10
    // Predicated region
    $region37: #{bottleneck_forward.8} parent=5 // pred_check
      %p1436 = pneg %p1435
    $region38: #{bottleneck_forward.8} parent=5 // pred_check_branch
      %1438 = sbr.rel (%p1436) target = $region40
    $region39: #{bottleneck_forward.8} parent=5 // pred_region
      %s1439 = ssub.s32 %s10, 2
      // Predicated region
      $region41: #{bottleneck_forward.8} parent=39 // pred_check
        %p1440 = pneg %p86
      $region42: #{bottleneck_forward.8} parent=39 // pred_check_branch
        %1442 = sbr.rel (%p1440) target = $region44
      $region43: #{bottleneck_forward.8} parent=39 // pred_region
        %p1443 = scmp.lt.s32.totalorder %s16, 1
        %s1444 = scalar_select %p1443, %s16, 1
        %s1445 = smul.addr %s1444, 32
        %s1446 = smul.addr %s1445, 8
        %s1447 = scalar_lea.vmem %s2, %s1446
      $region44: #{bottleneck_forward.8} parent=39 // pred_fallthru
        _
      // Predicated region
      $region45: #{bottleneck_forward.8} parent=39 // pred_check
        %p1448 = pneg %p112
      $region46: #{bottleneck_forward.8} parent=39 // pred_check_branch
        %1450 = sbr.rel (%p1448) target = $region48
      $region47: #{bottleneck_forward.8} parent=39 // pred_region
        %p1451 = scmp.lt.s32.totalorder %s16, 1
        %s1452 = scalar_select %p1451, %s16, 1
        %s1453 = smul.addr %s1452, 2
        %s1454 = scalar_lea.vmem %s3, %s1453
      $region48: #{bottleneck_forward.8} parent=39 // pred_fallthru
        _
    $region40: #{bottleneck_forward.8} parent=5 // pred_fallthru
      _
  $region6: #{bottleneck_forward.8} parent=0 // loop_footer
    %s14 = sadd.s32 1, %s10
  $region7: #{bottleneck_forward.8} parent=0 // loop_footer_branch
    %9 = sbr.rel target = $region3
  $region8: #{bottleneck_forward.8} parent=0 // loop_exit
    _

// kernel: bottleneck_forward.10
$region0: #{bottleneck_forward.10}
  #allocation0 [shape = 'u32[]', space=smem, size = 0x4, offset = 0x4, fixed_abs, tag = 'smem constant byte address 0x4 - core index']
  #allocation1 [shape = 'u32[144,128]{1,0:T(1,128)}', space=vmem, size = 0x12000, scoped, tag = 'internal scratch']
  %s0 = inlined_call_operand.vmem [shape: bf16[512,4], index: 0, kind: input, shape index: {}]
  %s1 = inlined_call_operand.vmem [shape: bf16[4,16], index: 1, kind: input, shape index: {}]
  %s2 = inlined_call_operand.vmem [shape: bf16[512,4], index: 2, kind: input, shape index: {}]
  %s3 = inlined_call_operand.vmem [shape: bf16[4,16], index: 3, kind: input, shape index: {}]
  %s4 = inlined_call_operand.vmem [shape: f32[512,16], index: 4, kind: output, shape index: {0}]
  %s5 = inlined_call_operand.vmem [shape: f32[2,2,16], index: 5, kind: output, shape index: {1}]
  %s6 = inlined_call_operand.vmem [shape: f32[512,16], index: 6, kind: output, shape index: {2}]
  %s7 = inlined_call_operand.vmem [shape: f32[2,2,16], index: 7, kind: output, shape index: {3}]
  %8 = xla_tuple %s4, %s5, %s6, %s7
  %s9 = sld [smem:[#allocation0]]
  $region73: #{bottleneck_forward.10} parent=0
    _
  %s11 = ssub.s32 1, %s9
  %s12 = scalar_select 0, %s11, %s9
  loop: start=0, step=1, limit=4
  $region2: #{bottleneck_forward.10} parent=0 // loop_pre_header
    _
  $region3: #{bottleneck_forward.10} parent=0 // loop_header
    %s14 = sphi 0, %s18
    %p15 = scmp.ge.s32.totalorder %s14, 4
    %s24 = sphi 0, %s26
    %s27 = sphi 0, %s24
    %s28 = sphi 0, %s27
    %s44 = sphi 0, %s28
    %s48 = sphi 0, %s48
    %s50 = sphi 0, %s48
    %s51 = sphi 0, %s50
    %s65 = sphi 0, %s51
    %s71 = sphi 0, %s73
    %s74 = sphi 0, %s71
    %s75 = sphi 0, %s74
    %s91 = sphi 0, %s75
    %s95 = sphi 0, %s95
    %s97 = sphi 0, %s95
    %s98 = sphi 0, %s97
    %s112 = sphi 0, %s98
    %s118 = sphi 0, %s120
    %s121 = sphi 0, %s118
    %s122 = sphi 0, %s121
    %s138 = sphi 0, %s122
    %s144 = sphi 0, %s146
    %s147 = sphi 0, %s144
    %s148 = sphi 0, %s147
    %s164 = sphi 0, %s148
    %s170 = sphi 0, %s172
    %s173 = sphi 0, %s170
    %s174 = sphi 0, %s173
    %s190 = sphi 0, %s174
    %s196 = sphi 0, %s198
    %s199 = sphi 0, %s196
    %s200 = sphi 0, %s199
    %s216 = sphi 0, %s200
  $region4: #{bottleneck_forward.10} parent=0 // loop_header_branch
    %17 = sbr.rel (%p15) target = $region8
  $region5: #{bottleneck_forward.10} parent=0 // loop_body
    %s19 = ssub.s32 %s14, 1
    %s20 = ssub.s32 %s14, 2
    %s21 = sadd.s32 %s14, 1
    %s22 = ssub.s32 %s14, %s21
    %p23 = scmp.eq.s32.totalorder %s22, 0
    %s25 = sadd.s32 %s24, 1
    %s26 = scalar_select %p23, %s24, %s25
    %p29 = pneg %p23
    %p30 = scmp.eq.s32.totalorder %s14, 1
    %p31 = por %p29, %p30
    %p32 = scmp.ne.s32.totalorder %s24, %s27
    %p33 = scmp.eq.s32.totalorder %s14, 0
    %p34 = por %p32, %p33
    %p35 = scmp.ne.s32.totalorder %s24, %s27
    %p36 = scmp.eq.s32.totalorder %s19, 1
    %p37 = por %p35, %p36
    %p38 = scmp.ne.s32.totalorder %s27, %s28
    %p39 = scmp.eq.s32.totalorder %s19, 0
    %p40 = por %p38, %p39
    %p41 = scmp.ne.s32.totalorder %s27, %s28
    %p42 = scmp.eq.s32.totalorder %s20, 1
    %p43 = por %p41, %p42
    %p45 = scmp.ne.s32.totalorder %s28, %s44
    %p46 = scmp.eq.s32.totalorder %s20, 0
    %p47 = por %p45, %p46
    %s49 = sadd.s32 %s48, 1
    %p52 = scmp.eq.s32.totalorder %s14, 1
    %p53 = scmp.ne.s32.totalorder %s48, %s50
    %p54 = scmp.eq.s32.totalorder %s14, 0
    %p55 = por %p53, %p54
    %p56 = scmp.ne.s32.totalorder %s48, %s50
    %p57 = scmp.eq.s32.totalorder %s19, 1
    %p58 = por %p56, %p57
    %p59 = scmp.ne.s32.totalorder %s50, %s51
    %p60 = scmp.eq.s32.totalorder %s19, 0
    %p61 = por %p59, %p60
    %p62 = scmp.ne.s32.totalorder %s50, %s51
    %p63 = scmp.eq.s32.totalorder %s20, 1
    %p64 = por %p62, %p63
    %p66 = scmp.ne.s32.totalorder %s51, %s65
    %p67 = scmp.eq.s32.totalorder %s20, 0
    %p68 = por %p66, %p67
    %s69 = ssub.s32 %s14, %s21
    %p70 = scmp.eq.s32.totalorder %s69, 0
    %s72 = sadd.s32 %s71, 1
    %s73 = scalar_select %p70, %s71, %s72
    %p76 = pneg %p70
    %p77 = scmp.eq.s32.totalorder %s14, 1
    %p78 = por %p76, %p77
    %p79 = scmp.ne.s32.totalorder %s71, %s74
    %p80 = scmp.eq.s32.totalorder %s14, 0
    %p81 = por %p79, %p80
    %p82 = scmp.ne.s32.totalorder %s71, %s74
    %p83 = scmp.eq.s32.totalorder %s19, 1
    %p84 = por %p82, %p83
    %p85 = scmp.ne.s32.totalorder %s74, %s75
    %p86 = scmp.eq.s32.totalorder %s19, 0
    %p87 = por %p85, %p86
    %p88 = scmp.ne.s32.totalorder %s74, %s75
    %p89 = scmp.eq.s32.totalorder %s20, 1
    %p90 = por %p88, %p89
    %p92 = scmp.ne.s32.totalorder %s75, %s91
    %p93 = scmp.eq.s32.totalorder %s20, 0
    %p94 = por %p92, %p93
    %s96 = sadd.s32 %s95, 1
    %p99 = scmp.eq.s32.totalorder %s14, 1
    %p100 = scmp.ne.s32.totalorder %s95, %s97
    %p101 = scmp.eq.s32.totalorder %s14, 0
    %p102 = por %p100, %p101
    %p103 = scmp.ne.s32.totalorder %s95, %s97
    %p104 = scmp.eq.s32.totalorder %s19, 1
    %p105 = por %p103, %p104
    %p106 = scmp.ne.s32.totalorder %s97, %s98
    %p107 = scmp.eq.s32.totalorder %s19, 0
    %p108 = por %p106, %p107
    %p109 = scmp.ne.s32.totalorder %s97, %s98
    %p110 = scmp.eq.s32.totalorder %s20, 1
    %p111 = por %p109, %p110
    %p113 = scmp.ne.s32.totalorder %s98, %s112
    %p114 = scmp.eq.s32.totalorder %s20, 0
    %p115 = por %p113, %p114
    %s116 = ssub.s32 %s14, %s21
    %p117 = scmp.eq.s32.totalorder %s116, 0
    %s119 = sadd.s32 %s118, 1
    %s120 = scalar_select %p117, %s118, %s119
    %p123 = pneg %p117
    %p124 = scmp.eq.s32.totalorder %s14, 1
    %p125 = por %p123, %p124
    %p126 = scmp.ne.s32.totalorder %s118, %s121
    %p127 = scmp.eq.s32.totalorder %s14, 0
    %p128 = por %p126, %p127
    %p129 = scmp.ne.s32.totalorder %s118, %s121
    %p130 = scmp.eq.s32.totalorder %s19, 1
    %p131 = por %p129, %p130
    %p132 = scmp.ne.s32.totalorder %s121, %s122
    %p133 = scmp.eq.s32.totalorder %s19, 0
    %p134 = por %p132, %p133
    %p135 = scmp.ne.s32.totalorder %s121, %s122
    %p136 = scmp.eq.s32.totalorder %s20, 1
    %p137 = por %p135, %p136
    %p139 = scmp.ne.s32.totalorder %s122, %s138
    %p140 = scmp.eq.s32.totalorder %s20, 0
    %p141 = por %p139, %p140
    %s142 = ssub.s32 %s14, %s21
    %p143 = scmp.eq.s32.totalorder %s142, 0
    %s145 = sadd.s32 %s144, 1
    %s146 = scalar_select %p143, %s144, %s145
    %p149 = pneg %p143
    %p150 = scmp.eq.s32.totalorder %s14, 1
    %p151 = por %p149, %p150
    %p152 = scmp.ne.s32.totalorder %s144, %s147
    %p153 = scmp.eq.s32.totalorder %s14, 0
    %p154 = por %p152, %p153
    %p155 = scmp.ne.s32.totalorder %s144, %s147
    %p156 = scmp.eq.s32.totalorder %s19, 1
    %p157 = por %p155, %p156
    %p158 = scmp.ne.s32.totalorder %s147, %s148
    %p159 = scmp.eq.s32.totalorder %s19, 0
    %p160 = por %p158, %p159
    %p161 = scmp.ne.s32.totalorder %s147, %s148
    %p162 = scmp.eq.s32.totalorder %s20, 1
    %p163 = por %p161, %p162
    %p165 = scmp.ne.s32.totalorder %s148, %s164
    %p166 = scmp.eq.s32.totalorder %s20, 0
    %p167 = por %p165, %p166
    %s168 = ssub.s32 %s14, %s21
    %p169 = scmp.eq.s32.totalorder %s168, 0
    %s171 = sadd.s32 %s170, 1
    %s172 = scalar_select %p169, %s170, %s171
    %p175 = pneg %p169
    %p176 = scmp.eq.s32.totalorder %s14, 1
    %p177 = por %p175, %p176
    %p178 = scmp.ne.s32.totalorder %s170, %s173
    %p179 = scmp.eq.s32.totalorder %s14, 0
    %p180 = por %p178, %p179
    %p181 = scmp.ne.s32.totalorder %s170, %s173
    %p182 = scmp.eq.s32.totalorder %s19, 1
    %p183 = por %p181, %p182
    %p184 = scmp.ne.s32.totalorder %s173, %s174
    %p185 = scmp.eq.s32.totalorder %s19, 0
    %p186 = por %p184, %p185
    %p187 = scmp.ne.s32.totalorder %s173, %s174
    %p188 = scmp.eq.s32.totalorder %s20, 1
    %p189 = por %p187, %p188
    %p191 = scmp.ne.s32.totalorder %s174, %s190
    %p192 = scmp.eq.s32.totalorder %s20, 0
    %p193 = por %p191, %p192
    %s194 = ssub.s32 %s14, %s21
    %p195 = scmp.eq.s32.totalorder %s194, 0
    %s197 = sadd.s32 %s196, 1
    %s198 = scalar_select %p195, %s196, %s197
    %p201 = pneg %p195
    %p202 = scmp.eq.s32.totalorder %s14, 1
    %p203 = por %p201, %p202
    %p204 = scmp.ne.s32.totalorder %s196, %s199
    %p205 = scmp.eq.s32.totalorder %s14, 0
    %p206 = por %p204, %p205
    %p207 = scmp.ne.s32.totalorder %s196, %s199
    %p208 = scmp.eq.s32.totalorder %s19, 1
    %p209 = por %p207, %p208
    %p210 = scmp.ne.s32.totalorder %s199, %s200
    %p211 = scmp.eq.s32.totalorder %s19, 0
    %p212 = por %p210, %p211
    %p213 = scmp.ne.s32.totalorder %s199, %s200
    %p214 = scmp.eq.s32.totalorder %s20, 1
    %p215 = por %p213, %p214
    %p217 = scmp.ne.s32.totalorder %s200, %s216
    %p218 = scmp.eq.s32.totalorder %s20, 0
    %p219 = por %p217, %p218
    %p220 = scmp.le.s32.totalorder 1, %s14
    %p221 = scmp.lt.s32.totalorder %s14, 3
    %p222 = pnand %p220, %p221
    %p223 = pneg %p222
    // Predicated region
    $region9: #{bottleneck_forward.10} parent=5 // pred_check
      _
    $region10: #{bottleneck_forward.10} parent=5 // pred_check_branch
      %225 = sbr.rel (%p222) target = $region12
    $region11: #{bottleneck_forward.10} parent=5 // pred_region
      %s226 = ssub.s32 %s14, 1
      // Predicated region
      $region13: #{bottleneck_forward.10} parent=11 // pred_check
        %p227 = pneg %p61
      $region14: #{bottleneck_forward.10} parent=11 // pred_check_branch
        %229 = sbr.rel (%p227) target = $region16
      $region15: #{bottleneck_forward.10} parent=11 // pred_region
        _
      $region16: #{bottleneck_forward.10} parent=11 // pred_fallthru
        _
      // Predicated region
      $region17: #{bottleneck_forward.10} parent=11 // pred_check
        %p230 = pneg %p108
      $region18: #{bottleneck_forward.10} parent=11 // pred_check_branch
        %232 = sbr.rel (%p230) target = $region20
      $region19: #{bottleneck_forward.10} parent=11 // pred_region
        _
      $region20: #{bottleneck_forward.10} parent=11 // pred_fallthru
        _
    $region12: #{bottleneck_forward.10} parent=5 // pred_fallthru
      _
    %p233 = scmp.lt.s32.totalorder %s14, 2
    // Predicated region
    $region21: #{bottleneck_forward.10} parent=5 // pred_check
      %p234 = pneg %p233
    $region22: #{bottleneck_forward.10} parent=5 // pred_check_branch
      %236 = sbr.rel (%p234) target = $region24
    $region23: #{bottleneck_forward.10} parent=5 // pred_region
      // Predicated region
      $region25: #{bottleneck_forward.10} parent=23 // pred_check
        %p237 = pneg %p34
      $region26: #{bottleneck_forward.10} parent=23 // pred_check_branch
        %239 = sbr.rel (%p237) target = $region28
      $region27: #{bottleneck_forward.10} parent=23 // pred_region
        %s240 = smul.u32 32, %s14
        %p241 = scmp.lt.s32.totalorder %s240, 63
        %s242 = scalar_select %p241, %s240, 63
        %s243 = smul.addr %s242, 4
        %s244 = scalar_lea.vmem %s0, %s243
        %s245 = smul.u32 32, %s14
      $region28: #{bottleneck_forward.10} parent=23 // pred_fallthru
        _
      // Predicated region
      $region29: #{bottleneck_forward.10} parent=23 // pred_check
        %p246 = pneg %p81
      $region30: #{bottleneck_forward.10} parent=23 // pred_check_branch
        %248 = sbr.rel (%p246) target = $region32
      $region31: #{bottleneck_forward.10} parent=23 // pred_region
        %s249 = smul.u32 32, %s14
        %p250 = scmp.lt.s32.totalorder %s249, 63
        %s251 = scalar_select %p250, %s249, 63
        %s252 = smul.addr %s251, 4
        %s253 = scalar_lea.vmem %s2, %s252
        %s254 = smul.u32 32, %s14
      $region32: #{bottleneck_forward.10} parent=23 // pred_fallthru
        _
    $region24: #{bottleneck_forward.10} parent=5 // pred_fallthru
      _
    %p255 = scmp.le.s32.totalorder 1, %s14
    %p256 = scmp.lt.s32.totalorder %s14, 3
    %p257 = pnand %p255, %p256
    %p258 = pneg %p257
    // Predicated region
    $region33: #{bottleneck_forward.10} parent=5 // pred_check
      _
    $region34: #{bottleneck_forward.10} parent=5 // pred_check_branch
      %260 = sbr.rel (%p257) target = $region36
    $region35: #{bottleneck_forward.10} parent=5 // pred_region
      %s261 = ssub.s32 %s14, 1
      %s262 = smul.u32 32, %s19
      %p263 = scmp.lt.s32.totalorder %s262, 63
      %s264 = scalar_select %p263, %s262, 63
      %s265 = smul.addr %s264, 4
      %s266 = scalar_lea.vmem %s0, %s265
      %p267 = pneg %p40
      %p268 = pneg %p37
      %p269 = pneg %p61
      %p270 = pneg %p58
      %s271 = smul.u32 32, %s19
      %p272 = scmp.lt.s32.totalorder %s271, 63
      %s273 = scalar_select %p272, %s271, 63
      %s274 = smul.addr %s273, 4
      %s275 = scalar_lea.vmem %s2, %s274
      %p276 = pneg %p87
      %p277 = pneg %p84
      %p278 = pneg %p108
      %p279 = pneg %p105
      %p280 = pneg %p134
      %p281 = pneg %p131
      %s282 = smul.u32 32, %s19
      %p283 = scmp.lt.s32.totalorder %s282, 63
      %s284 = scalar_select %p283, %s282, 63
      %s285 = smul.addr %s284, 8
      %s286 = scalar_lea.vmem %s4, %s285
      %p287 = pneg %p160
      %p288 = pneg %p157
      %p289 = scmp.lt.s32.totalorder %s19, 1
      %s290 = scalar_select %p289, %s19, 1
      %s291 = smul.addr %s290, 2
      %s292 = scalar_lea.vmem %s5, %s291
      %p293 = pneg %p186
      %p294 = pneg %p183
      %s295 = smul.u32 32, %s19
      %p296 = scmp.lt.s32.totalorder %s295, 63
      %s297 = scalar_select %p296, %s295, 63
      %s298 = smul.addr %s297, 8
      %s299 = scalar_lea.vmem %s6, %s298
      %p300 = pneg %p212
      %p301 = pneg %p209
      %p302 = scmp.lt.s32.totalorder %s19, 1
      %s303 = scalar_select %p302, %s19, 1
      %s304 = smul.addr %s303, 2
      %s305 = scalar_lea.vmem %s7, %s304
      %s306 = smul.u32 32, %s19
      %p307 = scmp.lt.s32.totalorder %s306, 63
      %s308 = scalar_select %p307, %s306, 63
      %s309 = smul.addr %s308, 4
      %s310 = scalar_lea.vmem %s0, %s309
      %s311 = smul.u32 32, %s19
      %s312 = smul.u32 32, %s19
      %p313 = scmp.lt.s32.totalorder %s312, 63
      %s314 = scalar_select %p313, %s312, 63
      %s315 = smul.addr %s314, 4
      %s316 = scalar_lea.vmem %s2, %s315
      %s317 = smul.u32 32, %s19
      %s318 = smul.u32 32, %s19
      %p319 = scmp.lt.s32.totalorder %s318, 63
      %s320 = scalar_select %p319, %s318, 63
      %s321 = smul.addr %s320, 8
      %s322 = scalar_lea.vmem %s4, %s321
      %s323 = smul.u32 32, %s19
      %p324 = scmp.lt.s32.totalorder %s19, 1
      %s325 = scalar_select %p324, %s19, 1
      %s326 = smul.addr %s325, 2
      %s327 = scalar_lea.vmem %s5, %s326
      %s328 = smul.u32 32, %s19
      %p329 = scmp.lt.s32.totalorder %s328, 63
      %s330 = scalar_select %p329, %s328, 63
      %s331 = smul.addr %s330, 8
      %s332 = scalar_lea.vmem %s6, %s331
      %s333 = smul.u32 32, %s19
      %p334 = scmp.lt.s32.totalorder %s19, 1
      %s335 = scalar_select %p334, %s19, 1
      %s336 = smul.addr %s335, 2
      %s337 = scalar_lea.vmem %s7, %s336
      %v339 = vld [vmem:[%s310] sm:$0xf]
      %v340 = vld [vmem:[%s310 + $0x4] sm:$0xf]
      %v341 = vld [vmem:[%s310 + $0x8] sm:$0xf]
      %v342 = vld [vmem:[%s310 + $0xc] sm:$0xf]
      %v343 = vld [vmem:[%s310 + $0x10] sm:$0xf]
      %v344 = vld [vmem:[%s310 + $0x14] sm:$0xf]
      %v345 = vld [vmem:[%s310 + $0x18] sm:$0xf]
      %v346 = vld [vmem:[%s310 + $0x1c] sm:$0xf]
      %v347 = vld [vmem:[%s310 + $0x20] sm:$0xf]
      %v348 = vld [vmem:[%s310 + $0x24] sm:$0xf]
      %v349 = vld [vmem:[%s310 + $0x28] sm:$0xf]
      %v350 = vld [vmem:[%s310 + $0x2c] sm:$0xf]
      %v351 = vld [vmem:[%s310 + $0x30] sm:$0xf]
      %v352 = vld [vmem:[%s310 + $0x34] sm:$0xf]
      %v353 = vld [vmem:[%s310 + $0x38] sm:$0xf]
      %v354 = vld [vmem:[%s310 + $0x3c] sm:$0xf]
      %v355 = vld [vmem:[%s310 + $0x40] sm:$0xf]
      %v356 = vld [vmem:[%s310 + $0x44] sm:$0xf]
      %v357 = vld [vmem:[%s310 + $0x48] sm:$0xf]
      %v358 = vld [vmem:[%s310 + $0x4c] sm:$0xf]
      %v359 = vld [vmem:[%s310 + $0x50] sm:$0xf]
      %v360 = vld [vmem:[%s310 + $0x54] sm:$0xf]
      %v361 = vld [vmem:[%s310 + $0x58] sm:$0xf]
      %v362 = vld [vmem:[%s310 + $0x5c] sm:$0xf]
      %v363 = vld [vmem:[%s310 + $0x60] sm:$0xf]
      %v364 = vld [vmem:[%s310 + $0x64] sm:$0xf]
      %v365 = vld [vmem:[%s310 + $0x68] sm:$0xf]
      %v366 = vld [vmem:[%s310 + $0x6c] sm:$0xf]
      %v367 = vld [vmem:[%s310 + $0x70] sm:$0xf]
      %v368 = vld [vmem:[%s310 + $0x74] sm:$0xf]
      %v369 = vld [vmem:[%s310 + $0x78] sm:$0xf]
      %v370 = vld [vmem:[%s310 + $0x7c] sm:$0xf]
      %v371 = vld [vmem:[%s1] sm:$0x3]
      %v404 = vunpack.c.l.b16 %v339
      %v405 = vunpack.c.l.b16 %v340
      %v406 = vunpack.c.l.b16 %v341
      %v407 = vunpack.c.l.b16 %v342
      %v408 = vunpack.c.l.b16 %v343
      %v409 = vunpack.c.l.b16 %v344
      %v410 = vunpack.c.l.b16 %v345
      %v411 = vunpack.c.l.b16 %v346
      %v412 = vunpack.c.l.b16 %v347
      %v413 = vunpack.c.l.b16 %v348
      %v414 = vunpack.c.l.b16 %v349
      %v415 = vunpack.c.l.b16 %v350
      %v416 = vunpack.c.l.b16 %v351
      %v417 = vunpack.c.l.b16 %v352
      %v418 = vunpack.c.l.b16 %v353
      %v419 = vunpack.c.l.b16 %v354
      %v420 = vunpack.c.l.b16 %v355
      %v421 = vunpack.c.l.b16 %v356
      %v422 = vunpack.c.l.b16 %v357
      %v423 = vunpack.c.l.b16 %v358
      %v424 = vunpack.c.l.b16 %v359
      %v425 = vunpack.c.l.b16 %v360
      %v426 = vunpack.c.l.b16 %v361
      %v427 = vunpack.c.l.b16 %v362
      %v428 = vunpack.c.l.b16 %v363
      %v429 = vunpack.c.l.b16 %v364
      %v430 = vunpack.c.l.b16 %v365
      %v431 = vunpack.c.l.b16 %v366
      %v432 = vunpack.c.l.b16 %v367
      %v433 = vunpack.c.l.b16 %v368
      %v434 = vunpack.c.l.b16 %v369
      %v435 = vunpack.c.l.b16 %v370
      %v436 = vpack.c.b16 %v405, %v404
      %v437 = vpack.c.b16 %v407, %v406
      %v438 = vpack.c.b16 %v409, %v408
      %v439 = vpack.c.b16 %v411, %v410
      %v440 = vpack.c.b16 %v413, %v412
      %v441 = vpack.c.b16 %v415, %v414
      %v442 = vpack.c.b16 %v417, %v416
      %v443 = vpack.c.b16 %v419, %v418
      %v444 = vpack.c.b16 %v421, %v420
      %v445 = vpack.c.b16 %v423, %v422
      %v446 = vpack.c.b16 %v425, %v424
      %v447 = vpack.c.b16 %v427, %v426
      %v448 = vpack.c.b16 %v429, %v428
      %v449 = vpack.c.b16 %v431, %v430
      %v450 = vpack.c.b16 %v433, %v432
      %v451 = vpack.c.b16 %v435, %v434
      %vm452 = vcmask 31744
      %v454 = vsel %vm452, %v436, 0
      %v457 = vsel %vm452, %v437, 0
      %v460 = vsel %vm452, %v438, 0
      %v463 = vsel %vm452, %v439, 0
      %v466 = vsel %vm452, %v440, 0
      %v469 = vsel %vm452, %v441, 0
      %v472 = vsel %vm452, %v442, 0
      %v475 = vsel %vm452, %v443, 0
      %v478 = vsel %vm452, %v444, 0
      %v481 = vsel %vm452, %v445, 0
      %v484 = vsel %vm452, %v446, 0
      %v487 = vsel %vm452, %v447, 0
      %v490 = vsel %vm452, %v448, 0
      %v493 = vsel %vm452, %v449, 0
      %v496 = vsel %vm452, %v450, 0
      %v499 = vsel %vm452, %v451, 0
      %vm501 = vcmask 1041408
      %v503 = vsel %vm501, %v371, 0
      %505 = vmatprep.subr.bf16.mxu0 0
      %506 = vmatpush1.bf16.msra.mxu0 %v503
      %507 = vmatprep.subr.bf16.mxu0 0
      %508 = vmatpush1.bf16.msra.mxu0 0
      %509 = vmatprep.subr.bf16.mxu0 0
      %510 = vmatpush1.bf16.msra.mxu0 0
      %511 = vmatprep.subr.bf16.mxu0 0
      %512 = vmatpush1.bf16.msra.mxu0 0
      %513 = vmatprep.subr.bf16.mxu0 0
      %514 = vmatpush1.bf16.msra.mxu0 0
      %515 = vmatprep.subr.bf16.mxu0 0
      %516 = vmatpush1.bf16.msra.mxu0 0
      %517 = vmatprep.subr.bf16.mxu0 0
      %518 = vmatpush1.bf16.msra.mxu0 0
      %519 = vmatprep.subr.bf16.mxu0 0
      %520 = vmatpush1.bf16.msra.mxu0 0
      %521 = vmatprep.subr.bf16.mxu0 0
      %522 = vmatpush1.bf16.msra.mxu0 0
      %523 = vmatprep.subr.bf16.mxu0 0
      %524 = vmatpush1.bf16.msra.mxu0 0
      %525 = vmatprep.subr.bf16.mxu0 0
      %526 = vmatpush1.bf16.msra.mxu0 0
      %527 = vmatprep.subr.bf16.mxu0 0
      %528 = vmatpush1.bf16.msra.mxu0 0
      %529 = vmatprep.subr.bf16.mxu0 0
      %530 = vmatpush1.bf16.msra.mxu0 0
      %531 = vmatprep.subr.bf16.mxu0 0
      %532 = vmatpush1.bf16.msra.mxu0 0
      %533 = vmatprep.subr.bf16.mxu0 0
      %534 = vmatpush1.bf16.msra.mxu0 0
      %535 = vmatprep.subr.bf16.mxu0 0
      %536 = vmatpush1.bf16.msra.mxu0 0
      %537 = vmatprep.mubr.bf16.mxu0 0
      %538 = vmatmul.mubr.bf16.gmra.mrb[0].mxu0 %v454
      %v539 = vpop.f32.mrb[0].mxu0
      %v540 = vadd.f32 0.0, %v539
      %v541 = vpop.f32.mrb[0].mxu0
      %v542 = vpop.f32.mrb[0].mxu0
      %v543 = vadd.f32 0.0, %v542
      %v544 = vpop.f32.mrb[0].mxu0
      %545 = vmatprep.mubr.bf16.mxu0 0
      %546 = vmatmul.mubr.bf16.gmra.mrb[0].mxu0 %v457
      %v547 = vpop.f32.mrb[0].mxu0
      %v548 = vadd.f32 0.0, %v547
      %v549 = vpop.f32.mrb[0].mxu0
      %v550 = vpop.f32.mrb[0].mxu0
      %v551 = vadd.f32 0.0, %v550
      %v552 = vpop.f32.mrb[0].mxu0
      %553 = vmatprep.mubr.bf16.mxu0 0
      %554 = vmatmul.mubr.bf16.gmra.mrb[0].mxu0 %v460
      %v555 = vpop.f32.mrb[0].mxu0
      %v556 = vadd.f32 0.0, %v555
      %v557 = vpop.f32.mrb[0].mxu0
      %v558 = vpop.f32.mrb[0].mxu0
      %v559 = vadd.f32 0.0, %v558
      %v560 = vpop.f32.mrb[0].mxu0
      %561 = vmatprep.mubr.bf16.mxu0 0
      %562 = vmatmul.mubr.bf16.gmra.mrb[0].mxu0 %v463
      %v563 = vpop.f32.mrb[0].mxu0
      %v564 = vadd.f32 0.0, %v563
      %v565 = vpop.f32.mrb[0].mxu0
      %v566 = vpop.f32.mrb[0].mxu0
      %v567 = vadd.f32 0.0, %v566
      %v568 = vpop.f32.mrb[0].mxu0
      %569 = vmatprep.mubr.bf16.mxu0 0
      %570 = vmatmul.mubr.bf16.gmra.mrb[0].mxu0 %v466
      %v571 = vpop.f32.mrb[0].mxu0
      %v572 = vadd.f32 0.0, %v571
      %v573 = vpop.f32.mrb[0].mxu0
      %v574 = vpop.f32.mrb[0].mxu0
      %v575 = vadd.f32 0.0, %v574
      %v576 = vpop.f32.mrb[0].mxu0
      %577 = vmatprep.mubr.bf16.mxu0 0
      %578 = vmatmul.mubr.bf16.gmra.mrb[0].mxu0 %v469
      %v579 = vpop.f32.mrb[0].mxu0
      %v580 = vadd.f32 0.0, %v579
      %v581 = vpop.f32.mrb[0].mxu0
      %v582 = vpop.f32.mrb[0].mxu0
      %v583 = vadd.f32 0.0, %v582
      %v584 = vpop.f32.mrb[0].mxu0
      %585 = vmatprep.mubr.bf16.mxu0 0
      %586 = vmatmul.mubr.bf16.gmra.mrb[0].mxu0 %v472
      %v587 = vpop.f32.mrb[0].mxu0
      %v588 = vadd.f32 0.0, %v587
      %v589 = vpop.f32.mrb[0].mxu0
      %v590 = vpop.f32.mrb[0].mxu0
      %v591 = vadd.f32 0.0, %v590
      %v592 = vpop.f32.mrb[0].mxu0
      %593 = vmatprep.mubr.bf16.mxu0 0
      %594 = vmatmul.mubr.bf16.gmra.mrb[0].mxu0 %v475
      %v595 = vpop.f32.mrb[0].mxu0
      %v596 = vadd.f32 0.0, %v595
      %v597 = vpop.f32.mrb[0].mxu0
      %v598 = vpop.f32.mrb[0].mxu0
      %v599 = vadd.f32 0.0, %v598
      %v600 = vpop.f32.mrb[0].mxu0
      %601 = vmatprep.mubr.bf16.mxu0 0
      %602 = vmatmul.mubr.bf16.gmra.mrb[0].mxu0 %v478
      %v603 = vpop.f32.mrb[0].mxu0
      %v604 = vadd.f32 0.0, %v603
      %v605 = vpop.f32.mrb[0].mxu0
      %v606 = vpop.f32.mrb[0].mxu0
      %v607 = vadd.f32 0.0, %v606
      %v608 = vpop.f32.mrb[0].mxu0
      %609 = vmatprep.mubr.bf16.mxu0 0
      %610 = vmatmul.mubr.bf16.gmra.mrb[0].mxu0 %v481
      %v611 = vpop.f32.mrb[0].mxu0
      %v612 = vadd.f32 0.0, %v611
      %v613 = vpop.f32.mrb[0].mxu0
      %v614 = vpop.f32.mrb[0].mxu0
      %v615 = vadd.f32 0.0, %v614
      %v616 = vpop.f32.mrb[0].mxu0
      %617 = vmatprep.mubr.bf16.mxu0 0
      %618 = vmatmul.mubr.bf16.gmra.mrb[0].mxu0 %v484
      %v619 = vpop.f32.mrb[0].mxu0
      %v620 = vadd.f32 0.0, %v619
      %v621 = vpop.f32.mrb[0].mxu0
      %v622 = vpop.f32.mrb[0].mxu0
      %v623 = vadd.f32 0.0, %v622
      %v624 = vpop.f32.mrb[0].mxu0
      %625 = vmatprep.mubr.bf16.mxu0 0
      %626 = vmatmul.mubr.bf16.gmra.mrb[0].mxu0 %v487
      %v627 = vpop.f32.mrb[0].mxu0
      %v628 = vadd.f32 0.0, %v627
      %v629 = vpop.f32.mrb[0].mxu0
      %v630 = vpop.f32.mrb[0].mxu0
      %v631 = vadd.f32 0.0, %v630
      %v632 = vpop.f32.mrb[0].mxu0
      %633 = vmatprep.mubr.bf16.mxu0 0
      %634 = vmatmul.mubr.bf16.gmra.mrb[0].mxu0 %v490
      %v635 = vpop.f32.mrb[0].mxu0
      %v636 = vadd.f32 0.0, %v635
      %v637 = vpop.f32.mrb[0].mxu0
      %v638 = vpop.f32.mrb[0].mxu0
      %v639 = vadd.f32 0.0, %v638
      %v640 = vpop.f32.mrb[0].mxu0
      %641 = vmatprep.mubr.bf16.mxu0 0
      %642 = vmatmul.mubr.bf16.gmra.mrb[0].mxu0 %v493
      %v643 = vpop.f32.mrb[0].mxu0
      %v644 = vadd.f32 0.0, %v643
      %v645 = vpop.f32.mrb[0].mxu0
      %v646 = vpop.f32.mrb[0].mxu0
      %v647 = vadd.f32 0.0, %v646
      %v648 = vpop.f32.mrb[0].mxu0
      %649 = vmatprep.mubr.bf16.mxu0 0
      %650 = vmatmul.mubr.bf16.gmra.mrb[0].mxu0 %v496
      %v651 = vpop.f32.mrb[0].mxu0
      %v652 = vadd.f32 0.0, %v651
      %v653 = vpop.f32.mrb[0].mxu0
      %v654 = vpop.f32.mrb[0].mxu0
      %v655 = vadd.f32 0.0, %v654
      %v656 = vpop.f32.mrb[0].mxu0
      %657 = vmatprep.mubr.bf16.mxu0 0
      %658 = vmatmul.mubr.bf16.gmra.mrb[0].mxu0 %v499
      %v659 = vpop.f32.mrb[0].mxu0
      %v660 = vadd.f32 0.0, %v659
      %v661 = vpop.f32.mrb[0].mxu0
      %v662 = vpop.f32.mrb[0].mxu0
      %v663 = vadd.f32 0.0, %v662
      %v664 = vpop.f32.mrb[0].mxu0
      %665 = vdwg.mxu0
      %vm666 = vcmask 130048
      %667 = vst.msk [vmem:[%s322] sm:$0xff] %vm666, %v540
      %668 = vst.msk [vmem:[%s322 + $0x8] sm:$0xff] %vm666, %v543
      %669 = vst.msk [vmem:[%s322 + $0x10] sm:$0xff] %vm666, %v548
      %670 = vst.msk [vmem:[%s322 + $0x18] sm:$0xff] %vm666, %v551
      %671 = vst.msk [vmem:[%s322 + $0x20] sm:$0xff] %vm666, %v556
      %672 = vst.msk [vmem:[%s322 + $0x28] sm:$0xff] %vm666, %v559
      %673 = vst.msk [vmem:[%s322 + $0x30] sm:$0xff] %vm666, %v564
      %674 = vst.msk [vmem:[%s322 + $0x38] sm:$0xff] %vm666, %v567
      %675 = vst.msk [vmem:[%s322 + $0x40] sm:$0xff] %vm666, %v572
      %676 = vst.msk [vmem:[%s322 + $0x48] sm:$0xff] %vm666, %v575
      %677 = vst.msk [vmem:[%s322 + $0x50] sm:$0xff] %vm666, %v580
      %678 = vst.msk [vmem:[%s322 + $0x58] sm:$0xff] %vm666, %v583
      %679 = vst.msk [vmem:[%s322 + $0x60] sm:$0xff] %vm666, %v588
      %680 = vst.msk [vmem:[%s322 + $0x68] sm:$0xff] %vm666, %v591
      %681 = vst.msk [vmem:[%s322 + $0x70] sm:$0xff] %vm666, %v596
      %682 = vst.msk [vmem:[%s322 + $0x78] sm:$0xff] %vm666, %v599
      %683 = vst.msk [vmem:[%s322 + $0x80] sm:$0xff] %vm666, %v604
      %684 = vst.msk [vmem:[%s322 + $0x88] sm:$0xff] %vm666, %v607
      %685 = vst.msk [vmem:[%s322 + $0x90] sm:$0xff] %vm666, %v612
      %686 = vst.msk [vmem:[%s322 + $0x98] sm:$0xff] %vm666, %v615
      %687 = vst.msk [vmem:[%s322 + $0xa0] sm:$0xff] %vm666, %v620
      %688 = vst.msk [vmem:[%s322 + $0xa8] sm:$0xff] %vm666, %v623
      %689 = vst.msk [vmem:[%s322 + $0xb0] sm:$0xff] %vm666, %v628
      %690 = vst.msk [vmem:[%s322 + $0xb8] sm:$0xff] %vm666, %v631
      %691 = vst.msk [vmem:[%s322 + $0xc0] sm:$0xff] %vm666, %v636
      %692 = vst.msk [vmem:[%s322 + $0xc8] sm:$0xff] %vm666, %v639
      %693 = vst.msk [vmem:[%s322 + $0xd0] sm:$0xff] %vm666, %v644
      %694 = vst.msk [vmem:[%s322 + $0xd8] sm:$0xff] %vm666, %v647
      %695 = vst.msk [vmem:[%s322 + $0xe0] sm:$0xff] %vm666, %v652
      %696 = vst.msk [vmem:[%s322 + $0xe8] sm:$0xff] %vm666, %v655
      %697 = vst.msk [vmem:[%s322 + $0xf0] sm:$0xff] %vm666, %v660
      %698 = vst.msk [vmem:[%s322 + $0xf8] sm:$0xff] %vm666, %v663
      %v699 = vsel %vm666, %v540, 0.0
      %v700 = vsel %vm666, %v543, 0.0
      %v701 = vadd.f32 %v699, %v700
      %v702 = vsel %vm666, %v548, 0.0
      %v703 = vadd.f32 %v701, %v702
      %v704 = vsel %vm666, %v551, 0.0
      %v705 = vadd.f32 %v703, %v704
      %v706 = vsel %vm666, %v556, 0.0
      %v707 = vadd.f32 %v705, %v706
      %v708 = vsel %vm666, %v559, 0.0
      %v709 = vadd.f32 %v707, %v708
      %v710 = vsel %vm666, %v564, 0.0
      %v711 = vadd.f32 %v709, %v710
      %v712 = vsel %vm666, %v567, 0.0
      %v713 = vadd.f32 %v711, %v712
      %v714 = vsel %vm666, %v572, 0.0
      %v715 = vadd.f32 %v713, %v714
      %v716 = vsel %vm666, %v575, 0.0
      %v717 = vadd.f32 %v715, %v716
      %v718 = vsel %vm666, %v580, 0.0
      %v719 = vadd.f32 %v717, %v718
      %v720 = vsel %vm666, %v583, 0.0
      %v721 = vadd.f32 %v719, %v720
      %v722 = vsel %vm666, %v588, 0.0
      %v723 = vadd.f32 %v721, %v722
      %v724 = vsel %vm666, %v591, 0.0
      %v725 = vadd.f32 %v723, %v724
      %v726 = vsel %vm666, %v596, 0.0
      %v727 = vadd.f32 %v725, %v726
      %v728 = vsel %vm666, %v599, 0.0
      %v729 = vadd.f32 %v727, %v728
      %v730 = vsel %vm666, %v604, 0.0
      %v731 = vadd.f32 %v729, %v730
      %v732 = vsel %vm666, %v607, 0.0
      %v733 = vadd.f32 %v731, %v732
      %v734 = vsel %vm666, %v612, 0.0
      %v735 = vadd.f32 %v733, %v734
      %v736 = vsel %vm666, %v615, 0.0
      %v737 = vadd.f32 %v735, %v736
      %v738 = vsel %vm666, %v620, 0.0
      %v739 = vadd.f32 %v737, %v738
      %v740 = vsel %vm666, %v623, 0.0
      %v741 = vadd.f32 %v739, %v740
      %v742 = vsel %vm666, %v628, 0.0
      %v743 = vadd.f32 %v741, %v742
      %v744 = vsel %vm666, %v631, 0.0
      %v745 = vadd.f32 %v743, %v744
      %v746 = vsel %vm666, %v636, 0.0
      %v747 = vadd.f32 %v745, %v746
      %v748 = vsel %vm666, %v639, 0.0
      %v749 = vadd.f32 %v747, %v748
      %v750 = vsel %vm666, %v644, 0.0
      %v751 = vadd.f32 %v749, %v750
      %v752 = vsel %vm666, %v647, 0.0
      %v753 = vadd.f32 %v751, %v752
      %v754 = vsel %vm666, %v652, 0.0
      %v755 = vadd.f32 %v753, %v754
      %v756 = vsel %vm666, %v655, 0.0
      %v757 = vadd.f32 %v755, %v756
      %v758 = vsel %vm666, %v660, 0.0
      %v759 = vadd.f32 %v757, %v758
      %v760 = vsel %vm666, %v663, 0.0
      %v761 = vadd.f32 %v759, %v760
      %v762 = vrot.slane %v761, 4
      %v763 = vadd.f32 %v761, %v762
      %v764 = vrot.slane %v763, 2
      %v765 = vadd.f32 %v763, %v764
      %v766 = vrot.slane %v765, 1
      %v767 = vadd.f32 %v765, %v766
      %vm768 = vcmask 122880
      %769 = vst.msk [vmem:[%s327] sm:$0x1] %vm768, %v767
      %v770 = vmul.f32 %v540, %v540
      %v771 = vmul.f32 %v543, %v543
      %v772 = vmul.f32 %v548, %v548
      %v773 = vmul.f32 %v551, %v551
      %v774 = vmul.f32 %v556, %v556
      %v775 = vmul.f32 %v559, %v559
      %v776 = vmul.f32 %v564, %v564
      %v777 = vmul.f32 %v567, %v567
      %v778 = vmul.f32 %v572, %v572
      %v779 = vmul.f32 %v575, %v575
      %v780 = vmul.f32 %v580, %v580
      %v781 = vmul.f32 %v583, %v583
      %v782 = vmul.f32 %v588, %v588
      %v783 = vmul.f32 %v591, %v591
      %v784 = vmul.f32 %v596, %v596
      %v785 = vmul.f32 %v599, %v599
      %v786 = vmul.f32 %v604, %v604
      %v787 = vmul.f32 %v607, %v607
      %v788 = vmul.f32 %v612, %v612
      %v789 = vmul.f32 %v615, %v615
      %v790 = vmul.f32 %v620, %v620
      %v791 = vmul.f32 %v623, %v623
      %v792 = vmul.f32 %v628, %v628
      %v793 = vmul.f32 %v631, %v631
      %v794 = vmul.f32 %v636, %v636
      %v795 = vmul.f32 %v639, %v639
      %v796 = vmul.f32 %v644, %v644
      %v797 = vmul.f32 %v647, %v647
      %v798 = vmul.f32 %v652, %v652
      %v799 = vmul.f32 %v655, %v655
      %v800 = vmul.f32 %v660, %v660
      %v801 = vmul.f32 %v663, %v663
      %v802 = vsel %vm666, %v770, 0.0
      %v803 = vsel %vm666, %v771, 0.0
      %v804 = vadd.f32 %v802, %v803
      %v805 = vsel %vm666, %v772, 0.0
      %v806 = vadd.f32 %v804, %v805
      %v807 = vsel %vm666, %v773, 0.0
      %v808 = vadd.f32 %v806, %v807
      %v809 = vsel %vm666, %v774, 0.0
      %v810 = vadd.f32 %v808, %v809
      %v811 = vsel %vm666, %v775, 0.0
      %v812 = vadd.f32 %v810, %v811
      %v813 = vsel %vm666, %v776, 0.0
      %v814 = vadd.f32 %v812, %v813
      %v815 = vsel %vm666, %v777, 0.0
      %v816 = vadd.f32 %v814, %v815
      %v817 = vsel %vm666, %v778, 0.0
      %v818 = vadd.f32 %v816, %v817
      %v819 = vsel %vm666, %v779, 0.0
      %v820 = vadd.f32 %v818, %v819
      %v821 = vsel %vm666, %v780, 0.0
      %v822 = vadd.f32 %v820, %v821
      %v823 = vsel %vm666, %v781, 0.0
      %v824 = vadd.f32 %v822, %v823
      %v825 = vsel %vm666, %v782, 0.0
      %v826 = vadd.f32 %v824, %v825
      %v827 = vsel %vm666, %v783, 0.0
      %v828 = vadd.f32 %v826, %v827
      %v829 = vsel %vm666, %v784, 0.0
      %v830 = vadd.f32 %v828, %v829
      %v831 = vsel %vm666, %v785, 0.0
      %v832 = vadd.f32 %v830, %v831
      %v833 = vsel %vm666, %v786, 0.0
      %v834 = vadd.f32 %v832, %v833
      %v835 = vsel %vm666, %v787, 0.0
      %v836 = vadd.f32 %v834, %v835
      %v837 = vsel %vm666, %v788, 0.0
      %v838 = vadd.f32 %v836, %v837
      %v839 = vsel %vm666, %v789, 0.0
      %v840 = vadd.f32 %v838, %v839
      %v841 = vsel %vm666, %v790, 0.0
      %v842 = vadd.f32 %v840, %v841
      %v843 = vsel %vm666, %v791, 0.0
      %v844 = vadd.f32 %v842, %v843
      %v845 = vsel %vm666, %v792, 0.0
      %v846 = vadd.f32 %v844, %v845
      %v847 = vsel %vm666, %v793, 0.0
      %v848 = vadd.f32 %v846, %v847
      %v849 = vsel %vm666, %v794, 0.0
      %v850 = vadd.f32 %v848, %v849
      %v851 = vsel %vm666, %v795, 0.0
      %v852 = vadd.f32 %v850, %v851
      %v853 = vsel %vm666, %v796, 0.0
      %v854 = vadd.f32 %v852, %v853
      %v855 = vsel %vm666, %v797, 0.0
      %v856 = vadd.f32 %v854, %v855
      %v857 = vsel %vm666, %v798, 0.0
      %v858 = vadd.f32 %v856, %v857
      %v859 = vsel %vm666, %v799, 0.0
      %v860 = vadd.f32 %v858, %v859
      %v861 = vsel %vm666, %v800, 0.0
      %v862 = vadd.f32 %v860, %v861
      %v863 = vsel %vm666, %v801, 0.0
      %v864 = vadd.f32 %v862, %v863
      %v865 = vrot.slane %v864, 4
      %v866 = vadd.f32 %v864, %v865
      %v867 = vrot.slane %v866, 2
      %v868 = vadd.f32 %v866, %v867
      %v869 = vrot.slane %v868, 1
      %v870 = vadd.f32 %v868, %v869
      %871 = vst.msk [vmem:[%s327 + $0x1] sm:$0x1] %vm768, %v870
      %v872 = vld [vmem:[%s316] sm:$0xf]
      %v873 = vld [vmem:[%s316 + $0x4] sm:$0xf]
      %v874 = vld [vmem:[%s316 + $0x8] sm:$0xf]
      %v875 = vld [vmem:[%s316 + $0xc] sm:$0xf]
      %v876 = vld [vmem:[%s316 + $0x10] sm:$0xf]
      %v877 = vld [vmem:[%s316 + $0x14] sm:$0xf]
      %v878 = vld [vmem:[%s316 + $0x18] sm:$0xf]
      %v879 = vld [vmem:[%s316 + $0x1c] sm:$0xf]
      %v880 = vld [vmem:[%s316 + $0x20] sm:$0xf]
      %v881 = vld [vmem:[%s316 + $0x24] sm:$0xf]
      %v882 = vld [vmem:[%s316 + $0x28] sm:$0xf]
      %v883 = vld [vmem:[%s316 + $0x2c] sm:$0xf]
      %v884 = vld [vmem:[%s316 + $0x30] sm:$0xf]
      %v885 = vld [vmem:[%s316 + $0x34] sm:$0xf]
      %v886 = vld [vmem:[%s316 + $0x38] sm:$0xf]
      %v887 = vld [vmem:[%s316 + $0x3c] sm:$0xf]
      %v888 = vld [vmem:[%s316 + $0x40] sm:$0xf]
      %v889 = vld [vmem:[%s316 + $0x44] sm:$0xf]
      %v890 = vld [vmem:[%s316 + $0x48] sm:$0xf]
      %v891 = vld [vmem:[%s316 + $0x4c] sm:$0xf]
      %v892 = vld [vmem:[%s316 + $0x50] sm:$0xf]
      %v893 = vld [vmem:[%s316 + $0x54] sm:$0xf]
      %v894 = vld [vmem:[%s316 + $0x58] sm:$0xf]
      %v895 = vld [vmem:[%s316 + $0x5c] sm:$0xf]
      %v896 = vld [vmem:[%s316 + $0x60] sm:$0xf]
      %v897 = vld [vmem:[%s316 + $0x64] sm:$0xf]
      %v898 = vld [vmem:[%s316 + $0x68] sm:$0xf]
      %v899 = vld [vmem:[%s316 + $0x6c] sm:$0xf]
      %v900 = vld [vmem:[%s316 + $0x70] sm:$0xf]
      %v901 = vld [vmem:[%s316 + $0x74] sm:$0xf]
      %v902 = vld [vmem:[%s316 + $0x78] sm:$0xf]
      %v903 = vld [vmem:[%s316 + $0x7c] sm:$0xf]
      %v904 = vld [vmem:[%s3] sm:$0x3]
      %v937 = vunpack.c.l.b16 %v872
      %v938 = vunpack.c.l.b16 %v873
      %v939 = vunpack.c.l.b16 %v874
      %v940 = vunpack.c.l.b16 %v875
      %v941 = vunpack.c.l.b16 %v876
      %v942 = vunpack.c.l.b16 %v877
      %v943 = vunpack.c.l.b16 %v878
      %v944 = vunpack.c.l.b16 %v879
      %v945 = vunpack.c.l.b16 %v880
      %v946 = vunpack.c.l.b16 %v881
      %v947 = vunpack.c.l.b16 %v882
      %v948 = vunpack.c.l.b16 %v883
      %v949 = vunpack.c.l.b16 %v884
      %v950 = vunpack.c.l.b16 %v885
      %v951 = vunpack.c.l.b16 %v886
      %v952 = vunpack.c.l.b16 %v887
      %v953 = vunpack.c.l.b16 %v888
      %v954 = vunpack.c.l.b16 %v889
      %v955 = vunpack.c.l.b16 %v890
      %v956 = vunpack.c.l.b16 %v891
      %v957 = vunpack.c.l.b16 %v892
      %v958 = vunpack.c.l.b16 %v893
      %v959 = vunpack.c.l.b16 %v894
      %v960 = vunpack.c.l.b16 %v895
      %v961 = vunpack.c.l.b16 %v896
      %v962 = vunpack.c.l.b16 %v897
      %v963 = vunpack.c.l.b16 %v898
      %v964 = vunpack.c.l.b16 %v899
      %v965 = vunpack.c.l.b16 %v900
      %v966 = vunpack.c.l.b16 %v901
      %v967 = vunpack.c.l.b16 %v902
      %v968 = vunpack.c.l.b16 %v903
      %v969 = vpack.c.b16 %v938, %v937
      %v970 = vpack.c.b16 %v940, %v939
      %v971 = vpack.c.b16 %v942, %v941
      %v972 = vpack.c.b16 %v944, %v943
      %v973 = vpack.c.b16 %v946, %v945
      %v974 = vpack.c.b16 %v948, %v947
      %v975 = vpack.c.b16 %v950, %v949
      %v976 = vpack.c.b16 %v952, %v951
      %v977 = vpack.c.b16 %v954, %v953
      %v978 = vpack.c.b16 %v956, %v955
      %v979 = vpack.c.b16 %v958, %v957
      %v980 = vpack.c.b16 %v960, %v959
      %v981 = vpack.c.b16 %v962, %v961
      %v982 = vpack.c.b16 %v964, %v963
      %v983 = vpack.c.b16 %v966, %v965
      %v984 = vpack.c.b16 %v968, %v967
      %v986 = vsel %vm452, %v969, 0
      %v989 = vsel %vm452, %v970, 0
      %v992 = vsel %vm452, %v971, 0
      %v995 = vsel %vm452, %v972, 0
      %v998 = vsel %vm452, %v973, 0
      %v1001 = vsel %vm452, %v974, 0
      %v1004 = vsel %vm452, %v975, 0
      %v1007 = vsel %vm452, %v976, 0
      %v1010 = vsel %vm452, %v977, 0
      %v1013 = vsel %vm452, %v978, 0
      %v1016 = vsel %vm452, %v979, 0
      %v1019 = vsel %vm452, %v980, 0
      %v1022 = vsel %vm452, %v981, 0
      %v1025 = vsel %vm452, %v982, 0
      %v1028 = vsel %vm452, %v983, 0
      %v1031 = vsel %vm452, %v984, 0
      %v1034 = vsel %vm501, %v904, 0
      %1036 = vmatprep.subr.bf16.mxu0 0
      %1037 = vmatpush1.bf16.msra.mxu0 %v1034
      %1038 = vmatprep.subr.bf16.mxu0 0
      %1039 = vmatpush1.bf16.msra.mxu0 0
      %1040 = vmatprep.subr.bf16.mxu0 0
      %1041 = vmatpush1.bf16.msra.mxu0 0
      %1042 = vmatprep.subr.bf16.mxu0 0
      %1043 = vmatpush1.bf16.msra.mxu0 0
      %1044 = vmatprep.subr.bf16.mxu0 0
      %1045 = vmatpush1.bf16.msra.mxu0 0
      %1046 = vmatprep.subr.bf16.mxu0 0
      %1047 = vmatpush1.bf16.msra.mxu0 0
      %1048 = vmatprep.subr.bf16.mxu0 0
      %1049 = vmatpush1.bf16.msra.mxu0 0
      %1050 = vmatprep.subr.bf16.mxu0 0
      %1051 = vmatpush1.bf16.msra.mxu0 0
      %1052 = vmatprep.subr.bf16.mxu0 0
      %1053 = vmatpush1.bf16.msra.mxu0 0
      %1054 = vmatprep.subr.bf16.mxu0 0
      %1055 = vmatpush1.bf16.msra.mxu0 0
      %1056 = vmatprep.subr.bf16.mxu0 0
      %1057 = vmatpush1.bf16.msra.mxu0 0
      %1058 = vmatprep.subr.bf16.mxu0 0
      %1059 = vmatpush1.bf16.msra.mxu0 0
      %1060 = vmatprep.subr.bf16.mxu0 0
      %1061 = vmatpush1.bf16.msra.mxu0 0
      %1062 = vmatprep.subr.bf16.mxu0 0
      %1063 = vmatpush1.bf16.msra.mxu0 0
      %1064 = vmatprep.subr.bf16.mxu0 0
      %1065 = vmatpush1.bf16.msra.mxu0 0
      %1066 = vmatprep.subr.bf16.mxu0 0
      %1067 = vmatpush1.bf16.msra.mxu0 0
      %1068 = vmatprep.mubr.bf16.mxu0 0
      %1069 = vmatmul.mubr.bf16.gmra.mrb[0].mxu0 %v986
      %v1070 = vpop.f32.mrb[0].mxu0
      %v1071 = vadd.f32 0.0, %v1070
      %v1072 = vpop.f32.mrb[0].mxu0
      %v1073 = vpop.f32.mrb[0].mxu0
      %v1074 = vadd.f32 0.0, %v1073
      %v1075 = vpop.f32.mrb[0].mxu0
      %1076 = vmatprep.mubr.bf16.mxu0 0
      %1077 = vmatmul.mubr.bf16.gmra.mrb[0].mxu0 %v989
      %v1078 = vpop.f32.mrb[0].mxu0
      %v1079 = vadd.f32 0.0, %v1078
      %v1080 = vpop.f32.mrb[0].mxu0
      %v1081 = vpop.f32.mrb[0].mxu0
      %v1082 = vadd.f32 0.0, %v1081
      %v1083 = vpop.f32.mrb[0].mxu0
      %1084 = vmatprep.mubr.bf16.mxu0 0
      %1085 = vmatmul.mubr.bf16.gmra.mrb[0].mxu0 %v992
      %v1086 = vpop.f32.mrb[0].mxu0
      %v1087 = vadd.f32 0.0, %v1086
      %v1088 = vpop.f32.mrb[0].mxu0
      %v1089 = vpop.f32.mrb[0].mxu0
      %v1090 = vadd.f32 0.0, %v1089
      %v1091 = vpop.f32.mrb[0].mxu0
      %1092 = vmatprep.mubr.bf16.mxu0 0
      %1093 = vmatmul.mubr.bf16.gmra.mrb[0].mxu0 %v995
      %v1094 = vpop.f32.mrb[0].mxu0
      %v1095 = vadd.f32 0.0, %v1094
      %v1096 = vpop.f32.mrb[0].mxu0
      %v1097 = vpop.f32.mrb[0].mxu0
      %v1098 = vadd.f32 0.0, %v1097
      %v1099 = vpop.f32.mrb[0].mxu0
      %1100 = vmatprep.mubr.bf16.mxu0 0
      %1101 = vmatmul.mubr.bf16.gmra.mrb[0].mxu0 %v998
      %v1102 = vpop.f32.mrb[0].mxu0
      %v1103 = vadd.f32 0.0, %v1102
      %v1104 = vpop.f32.mrb[0].mxu0
      %v1105 = vpop.f32.mrb[0].mxu0
      %v1106 = vadd.f32 0.0, %v1105
      %v1107 = vpop.f32.mrb[0].mxu0
      %1108 = vmatprep.mubr.bf16.mxu0 0
      %1109 = vmatmul.mubr.bf16.gmra.mrb[0].mxu0 %v1001
      %v1110 = vpop.f32.mrb[0].mxu0
      %v1111 = vadd.f32 0.0, %v1110
      %v1112 = vpop.f32.mrb[0].mxu0
      %v1113 = vpop.f32.mrb[0].mxu0
      %v1114 = vadd.f32 0.0, %v1113
      %v1115 = vpop.f32.mrb[0].mxu0
      %1116 = vmatprep.mubr.bf16.mxu0 0
      %1117 = vmatmul.mubr.bf16.gmra.mrb[0].mxu0 %v1004
      %v1118 = vpop.f32.mrb[0].mxu0
      %v1119 = vadd.f32 0.0, %v1118
      %v1120 = vpop.f32.mrb[0].mxu0
      %v1121 = vpop.f32.mrb[0].mxu0
      %v1122 = vadd.f32 0.0, %v1121
      %v1123 = vpop.f32.mrb[0].mxu0
      %1124 = vmatprep.mubr.bf16.mxu0 0
      %1125 = vmatmul.mubr.bf16.gmra.mrb[0].mxu0 %v1007
      %v1126 = vpop.f32.mrb[0].mxu0
      %v1127 = vadd.f32 0.0, %v1126
      %v1128 = vpop.f32.mrb[0].mxu0
      %v1129 = vpop.f32.mrb[0].mxu0
      %v1130 = vadd.f32 0.0, %v1129
      %v1131 = vpop.f32.mrb[0].mxu0
      %1132 = vmatprep.mubr.bf16.mxu0 0
      %1133 = vmatmul.mubr.bf16.gmra.mrb[0].mxu0 %v1010
      %v1134 = vpop.f32.mrb[0].mxu0
      %v1135 = vadd.f32 0.0, %v1134
      %v1136 = vpop.f32.mrb[0].mxu0
      %v1137 = vpop.f32.mrb[0].mxu0
      %v1138 = vadd.f32 0.0, %v1137
      %v1139 = vpop.f32.mrb[0].mxu0
      %1140 = vmatprep.mubr.bf16.mxu0 0
      %1141 = vmatmul.mubr.bf16.gmra.mrb[0].mxu0 %v1013
      %v1142 = vpop.f32.mrb[0].mxu0
      %v1143 = vadd.f32 0.0, %v1142
      %v1144 = vpop.f32.mrb[0].mxu0
      %v1145 = vpop.f32.mrb[0].mxu0
      %v1146 = vadd.f32 0.0, %v1145
      %v1147 = vpop.f32.mrb[0].mxu0
      %1148 = vmatprep.mubr.bf16.mxu0 0
      %1149 = vmatmul.mubr.bf16.gmra.mrb[0].mxu0 %v1016
      %v1150 = vpop.f32.mrb[0].mxu0
      %v1151 = vadd.f32 0.0, %v1150
      %v1152 = vpop.f32.mrb[0].mxu0
      %v1153 = vpop.f32.mrb[0].mxu0
      %v1154 = vadd.f32 0.0, %v1153
      %v1155 = vpop.f32.mrb[0].mxu0
      %1156 = vmatprep.mubr.bf16.mxu0 0
      %1157 = vmatmul.mubr.bf16.gmra.mrb[0].mxu0 %v1019
      %v1158 = vpop.f32.mrb[0].mxu0
      %v1159 = vadd.f32 0.0, %v1158
      %v1160 = vpop.f32.mrb[0].mxu0
      %v1161 = vpop.f32.mrb[0].mxu0
      %v1162 = vadd.f32 0.0, %v1161
      %v1163 = vpop.f32.mrb[0].mxu0
      %1164 = vmatprep.mubr.bf16.mxu0 0
      %1165 = vmatmul.mubr.bf16.gmra.mrb[0].mxu0 %v1022
      %v1166 = vpop.f32.mrb[0].mxu0
      %v1167 = vadd.f32 0.0, %v1166
      %v1168 = vpop.f32.mrb[0].mxu0
      %v1169 = vpop.f32.mrb[0].mxu0
      %v1170 = vadd.f32 0.0, %v1169
      %v1171 = vpop.f32.mrb[0].mxu0
      %1172 = vmatprep.mubr.bf16.mxu0 0
      %1173 = vmatmul.mubr.bf16.gmra.mrb[0].mxu0 %v1025
      %v1174 = vpop.f32.mrb[0].mxu0
      %v1175 = vadd.f32 0.0, %v1174
      %v1176 = vpop.f32.mrb[0].mxu0
      %v1177 = vpop.f32.mrb[0].mxu0
      %v1178 = vadd.f32 0.0, %v1177
      %v1179 = vpop.f32.mrb[0].mxu0
      %1180 = vmatprep.mubr.bf16.mxu0 0
      %1181 = vmatmul.mubr.bf16.gmra.mrb[0].mxu0 %v1028
      %v1182 = vpop.f32.mrb[0].mxu0
      %v1183 = vadd.f32 0.0, %v1182
      %v1184 = vpop.f32.mrb[0].mxu0
      %v1185 = vpop.f32.mrb[0].mxu0
      %v1186 = vadd.f32 0.0, %v1185
      %v1187 = vpop.f32.mrb[0].mxu0
      %1188 = vmatprep.mubr.bf16.mxu0 0
      %1189 = vmatmul.mubr.bf16.gmra.mrb[0].mxu0 %v1031
      %v1190 = vpop.f32.mrb[0].mxu0
      %v1191 = vadd.f32 0.0, %v1190
      %v1192 = vpop.f32.mrb[0].mxu0
      %v1193 = vpop.f32.mrb[0].mxu0
      %v1194 = vadd.f32 0.0, %v1193
      %v1195 = vpop.f32.mrb[0].mxu0
      %1196 = vdwg.mxu0
      %1197 = vst.msk [vmem:[%s332] sm:$0xff] %vm666, %v1071
      %1198 = vst.msk [vmem:[%s332 + $0x8] sm:$0xff] %vm666, %v1074
      %1199 = vst.msk [vmem:[%s332 + $0x10] sm:$0xff] %vm666, %v1079
      %1200 = vst.msk [vmem:[%s332 + $0x18] sm:$0xff] %vm666, %v1082
      %1201 = vst.msk [vmem:[%s332 + $0x20] sm:$0xff] %vm666, %v1087
      %1202 = vst.msk [vmem:[%s332 + $0x28] sm:$0xff] %vm666, %v1090
      %1203 = vst.msk [vmem:[%s332 + $0x30] sm:$0xff] %vm666, %v1095
      %1204 = vst.msk [vmem:[%s332 + $0x38] sm:$0xff] %vm666, %v1098
      %1205 = vst.msk [vmem:[%s332 + $0x40] sm:$0xff] %vm666, %v1103
      %1206 = vst.msk [vmem:[%s332 + $0x48] sm:$0xff] %vm666, %v1106
      %1207 = vst.msk [vmem:[%s332 + $0x50] sm:$0xff] %vm666, %v1111
      %1208 = vst.msk [vmem:[%s332 + $0x58] sm:$0xff] %vm666, %v1114
      %1209 = vst.msk [vmem:[%s332 + $0x60] sm:$0xff] %vm666, %v1119
      %1210 = vst.msk [vmem:[%s332 + $0x68] sm:$0xff] %vm666, %v1122
      %1211 = vst.msk [vmem:[%s332 + $0x70] sm:$0xff] %vm666, %v1127
      %1212 = vst.msk [vmem:[%s332 + $0x78] sm:$0xff] %vm666, %v1130
      %1213 = vst.msk [vmem:[%s332 + $0x80] sm:$0xff] %vm666, %v1135
      %1214 = vst.msk [vmem:[%s332 + $0x88] sm:$0xff] %vm666, %v1138
      %1215 = vst.msk [vmem:[%s332 + $0x90] sm:$0xff] %vm666, %v1143
      %1216 = vst.msk [vmem:[%s332 + $0x98] sm:$0xff] %vm666, %v1146
      %1217 = vst.msk [vmem:[%s332 + $0xa0] sm:$0xff] %vm666, %v1151
      %1218 = vst.msk [vmem:[%s332 + $0xa8] sm:$0xff] %vm666, %v1154
      %1219 = vst.msk [vmem:[%s332 + $0xb0] sm:$0xff] %vm666, %v1159
      %1220 = vst.msk [vmem:[%s332 + $0xb8] sm:$0xff] %vm666, %v1162
      %1221 = vst.msk [vmem:[%s332 + $0xc0] sm:$0xff] %vm666, %v1167
      %1222 = vst.msk [vmem:[%s332 + $0xc8] sm:$0xff] %vm666, %v1170
      %1223 = vst.msk [vmem:[%s332 + $0xd0] sm:$0xff] %vm666, %v1175
      %1224 = vst.msk [vmem:[%s332 + $0xd8] sm:$0xff] %vm666, %v1178
      %1225 = vst.msk [vmem:[%s332 + $0xe0] sm:$0xff] %vm666, %v1183
      %1226 = vst.msk [vmem:[%s332 + $0xe8] sm:$0xff] %vm666, %v1186
      %1227 = vst.msk [vmem:[%s332 + $0xf0] sm:$0xff] %vm666, %v1191
      %1228 = vst.msk [vmem:[%s332 + $0xf8] sm:$0xff] %vm666, %v1194
      %v1229 = vsel %vm666, %v1071, 0.0
      %v1230 = vsel %vm666, %v1074, 0.0
      %v1231 = vadd.f32 %v1229, %v1230
      %v1232 = vsel %vm666, %v1079, 0.0
      %v1233 = vadd.f32 %v1231, %v1232
      %v1234 = vsel %vm666, %v1082, 0.0
      %v1235 = vadd.f32 %v1233, %v1234
      %v1236 = vsel %vm666, %v1087, 0.0
      %v1237 = vadd.f32 %v1235, %v1236
      %v1238 = vsel %vm666, %v1090, 0.0
      %v1239 = vadd.f32 %v1237, %v1238
      %v1240 = vsel %vm666, %v1095, 0.0
      %v1241 = vadd.f32 %v1239, %v1240
      %v1242 = vsel %vm666, %v1098, 0.0
      %v1243 = vadd.f32 %v1241, %v1242
      %v1244 = vsel %vm666, %v1103, 0.0
      %v1245 = vadd.f32 %v1243, %v1244
      %v1246 = vsel %vm666, %v1106, 0.0
      %v1247 = vadd.f32 %v1245, %v1246
      %v1248 = vsel %vm666, %v1111, 0.0
      %v1249 = vadd.f32 %v1247, %v1248
      %v1250 = vsel %vm666, %v1114, 0.0
      %v1251 = vadd.f32 %v1249, %v1250
      %v1252 = vsel %vm666, %v1119, 0.0
      %v1253 = vadd.f32 %v1251, %v1252
      %v1254 = vsel %vm666, %v1122, 0.0
      %v1255 = vadd.f32 %v1253, %v1254
      %v1256 = vsel %vm666, %v1127, 0.0
      %v1257 = vadd.f32 %v1255, %v1256
      %v1258 = vsel %vm666, %v1130, 0.0
      %v1259 = vadd.f32 %v1257, %v1258
      %v1260 = vsel %vm666, %v1135, 0.0
      %v1261 = vadd.f32 %v1259, %v1260
      %v1262 = vsel %vm666, %v1138, 0.0
      %v1263 = vadd.f32 %v1261, %v1262
      %v1264 = vsel %vm666, %v1143, 0.0
      %v1265 = vadd.f32 %v1263, %v1264
      %v1266 = vsel %vm666, %v1146, 0.0
      %v1267 = vadd.f32 %v1265, %v1266
      %v1268 = vsel %vm666, %v1151, 0.0
      %v1269 = vadd.f32 %v1267, %v1268
      %v1270 = vsel %vm666, %v1154, 0.0
      %v1271 = vadd.f32 %v1269, %v1270
      %v1272 = vsel %vm666, %v1159, 0.0
      %v1273 = vadd.f32 %v1271, %v1272
      %v1274 = vsel %vm666, %v1162, 0.0
      %v1275 = vadd.f32 %v1273, %v1274
      %v1276 = vsel %vm666, %v1167, 0.0
      %v1277 = vadd.f32 %v1275, %v1276
      %v1278 = vsel %vm666, %v1170, 0.0
      %v1279 = vadd.f32 %v1277, %v1278
      %v1280 = vsel %vm666, %v1175, 0.0
      %v1281 = vadd.f32 %v1279, %v1280
      %v1282 = vsel %vm666, %v1178, 0.0
      %v1283 = vadd.f32 %v1281, %v1282
      %v1284 = vsel %vm666, %v1183, 0.0
      %v1285 = vadd.f32 %v1283, %v1284
      %v1286 = vsel %vm666, %v1186, 0.0
      %v1287 = vadd.f32 %v1285, %v1286
      %v1288 = vsel %vm666, %v1191, 0.0
      %v1289 = vadd.f32 %v1287, %v1288
      %v1290 = vsel %vm666, %v1194, 0.0
      %v1291 = vadd.f32 %v1289, %v1290
      %v1292 = vrot.slane %v1291, 4
      %v1293 = vadd.f32 %v1291, %v1292
      %v1294 = vrot.slane %v1293, 2
      %v1295 = vadd.f32 %v1293, %v1294
      %v1296 = vrot.slane %v1295, 1
      %v1297 = vadd.f32 %v1295, %v1296
      %1298 = vst.msk [vmem:[%s337] sm:$0x1] %vm768, %v1297
      %v1299 = vmul.f32 %v1071, %v1071
      %v1300 = vmul.f32 %v1074, %v1074
      %v1301 = vmul.f32 %v1079, %v1079
      %v1302 = vmul.f32 %v1082, %v1082
      %v1303 = vmul.f32 %v1087, %v1087
      %v1304 = vmul.f32 %v1090, %v1090
      %v1305 = vmul.f32 %v1095, %v1095
      %v1306 = vmul.f32 %v1098, %v1098
      %v1307 = vmul.f32 %v1103, %v1103
      %v1308 = vmul.f32 %v1106, %v1106
      %v1309 = vmul.f32 %v1111, %v1111
      %v1310 = vmul.f32 %v1114, %v1114
      %v1311 = vmul.f32 %v1119, %v1119
      %v1312 = vmul.f32 %v1122, %v1122
      %v1313 = vmul.f32 %v1127, %v1127
      %v1314 = vmul.f32 %v1130, %v1130
      %v1315 = vmul.f32 %v1135, %v1135
      %v1316 = vmul.f32 %v1138, %v1138
      %v1317 = vmul.f32 %v1143, %v1143
      %v1318 = vmul.f32 %v1146, %v1146
      %v1319 = vmul.f32 %v1151, %v1151
      %v1320 = vmul.f32 %v1154, %v1154
      %v1321 = vmul.f32 %v1159, %v1159
      %v1322 = vmul.f32 %v1162, %v1162
      %v1323 = vmul.f32 %v1167, %v1167
      %v1324 = vmul.f32 %v1170, %v1170
      %v1325 = vmul.f32 %v1175, %v1175
      %v1326 = vmul.f32 %v1178, %v1178
      %v1327 = vmul.f32 %v1183, %v1183
      %v1328 = vmul.f32 %v1186, %v1186
      %v1329 = vmul.f32 %v1191, %v1191
      %v1330 = vmul.f32 %v1194, %v1194
      %v1331 = vsel %vm666, %v1299, 0.0
      %v1332 = vsel %vm666, %v1300, 0.0
      %v1333 = vadd.f32 %v1331, %v1332
      %v1334 = vsel %vm666, %v1301, 0.0
      %v1335 = vadd.f32 %v1333, %v1334
      %v1336 = vsel %vm666, %v1302, 0.0
      %v1337 = vadd.f32 %v1335, %v1336
      %v1338 = vsel %vm666, %v1303, 0.0
      %v1339 = vadd.f32 %v1337, %v1338
      %v1340 = vsel %vm666, %v1304, 0.0
      %v1341 = vadd.f32 %v1339, %v1340
      %v1342 = vsel %vm666, %v1305, 0.0
      %v1343 = vadd.f32 %v1341, %v1342
      %v1344 = vsel %vm666, %v1306, 0.0
      %v1345 = vadd.f32 %v1343, %v1344
      %v1346 = vsel %vm666, %v1307, 0.0
      %v1347 = vadd.f32 %v1345, %v1346
      %v1348 = vsel %vm666, %v1308, 0.0
      %v1349 = vadd.f32 %v1347, %v1348
      %v1350 = vsel %vm666, %v1309, 0.0
      %v1351 = vadd.f32 %v1349, %v1350
      %v1352 = vsel %vm666, %v1310, 0.0
      %v1353 = vadd.f32 %v1351, %v1352
      %v1354 = vsel %vm666, %v1311, 0.0
      %v1355 = vadd.f32 %v1353, %v1354
      %v1356 = vsel %vm666, %v1312, 0.0
      %v1357 = vadd.f32 %v1355, %v1356
      %v1358 = vsel %vm666, %v1313, 0.0
      %v1359 = vadd.f32 %v1357, %v1358
      %v1360 = vsel %vm666, %v1314, 0.0
      %v1361 = vadd.f32 %v1359, %v1360
      %v1362 = vsel %vm666, %v1315, 0.0
      %v1363 = vadd.f32 %v1361, %v1362
      %v1364 = vsel %vm666, %v1316, 0.0
      %v1365 = vadd.f32 %v1363, %v1364
      %v1366 = vsel %vm666, %v1317, 0.0
      %v1367 = vadd.f32 %v1365, %v1366
      %v1368 = vsel %vm666, %v1318, 0.0
      %v1369 = vadd.f32 %v1367, %v1368
      %v1370 = vsel %vm666, %v1319, 0.0
      %v1371 = vadd.f32 %v1369, %v1370
      %v1372 = vsel %vm666, %v1320, 0.0
      %v1373 = vadd.f32 %v1371, %v1372
      %v1374 = vsel %vm666, %v1321, 0.0
      %v1375 = vadd.f32 %v1373, %v1374
      %v1376 = vsel %vm666, %v1322, 0.0
      %v1377 = vadd.f32 %v1375, %v1376
      %v1378 = vsel %vm666, %v1323, 0.0
      %v1379 = vadd.f32 %v1377, %v1378
      %v1380 = vsel %vm666, %v1324, 0.0
      %v1381 = vadd.f32 %v1379, %v1380
      %v1382 = vsel %vm666, %v1325, 0.0
      %v1383 = vadd.f32 %v1381, %v1382
      %v1384 = vsel %vm666, %v1326, 0.0
      %v1385 = vadd.f32 %v1383, %v1384
      %v1386 = vsel %vm666, %v1327, 0.0
      %v1387 = vadd.f32 %v1385, %v1386
      %v1388 = vsel %vm666, %v1328, 0.0
      %v1389 = vadd.f32 %v1387, %v1388
      %v1390 = vsel %vm666, %v1329, 0.0
      %v1391 = vadd.f32 %v1389, %v1390
      %v1392 = vsel %vm666, %v1330, 0.0
      %v1393 = vadd.f32 %v1391, %v1392
      %v1394 = vrot.slane %v1393, 4
      %v1395 = vadd.f32 %v1393, %v1394
      %v1396 = vrot.slane %v1395, 2
      %v1397 = vadd.f32 %v1395, %v1396
      %v1398 = vrot.slane %v1397, 1
      %v1399 = vadd.f32 %v1397, %v1398
      %1400 = vst.msk [vmem:[%s337 + $0x1] sm:$0x1] %vm768, %v1399
      %s1401 = smul.u32 32, %s19
      %p1402 = scmp.lt.s32.totalorder %s1401, 63
      %s1403 = scalar_select %p1402, %s1401, 63
      %s1404 = smul.addr %s1403, 8
      %s1405 = scalar_lea.vmem %s4, %s1404
      %p1406 = scmp.lt.s32.totalorder %s19, 1
      %s1407 = scalar_select %p1406, %s19, 1
      %s1408 = smul.addr %s1407, 2
      %s1409 = scalar_lea.vmem %s5, %s1408
      %s1410 = smul.u32 32, %s19
      %p1411 = scmp.lt.s32.totalorder %s1410, 63
      %s1412 = scalar_select %p1411, %s1410, 63
      %s1413 = smul.addr %s1412, 8
      %s1414 = scalar_lea.vmem %s6, %s1413
      %p1415 = scmp.lt.s32.totalorder %s19, 1
      %s1416 = scalar_select %p1415, %s19, 1
      %s1417 = smul.addr %s1416, 2
      %s1418 = scalar_lea.vmem %s7, %s1417
      // Predicated region
      $region37: #{bottleneck_forward.10} parent=35 // pred_check
        %p1419 = pneg %p131
      $region38: #{bottleneck_forward.10} parent=35 // pred_check_branch
        %1421 = sbr.rel (%p1419) target = $region40
      $region39: #{bottleneck_forward.10} parent=35 // pred_region
        %s1422 = smul.u32 32, %s19
      $region40: #{bottleneck_forward.10} parent=35 // pred_fallthru
        _
      // Predicated region
      $region41: #{bottleneck_forward.10} parent=35 // pred_check
        %p1423 = pneg %p157
      $region42: #{bottleneck_forward.10} parent=35 // pred_check_branch
        %1425 = sbr.rel (%p1423) target = $region44
      $region43: #{bottleneck_forward.10} parent=35 // pred_region
        _
      $region44: #{bottleneck_forward.10} parent=35 // pred_fallthru
        _
      // Predicated region
      $region45: #{bottleneck_forward.10} parent=35 // pred_check
        %p1426 = pneg %p183
      $region46: #{bottleneck_forward.10} parent=35 // pred_check_branch
        %1428 = sbr.rel (%p1426) target = $region48
      $region47: #{bottleneck_forward.10} parent=35 // pred_region
        %s1429 = smul.u32 32, %s19
      $region48: #{bottleneck_forward.10} parent=35 // pred_fallthru
        _
      // Predicated region
      $region49: #{bottleneck_forward.10} parent=35 // pred_check
        %p1430 = pneg %p209
      $region50: #{bottleneck_forward.10} parent=35 // pred_check_branch
        %1432 = sbr.rel (%p1430) target = $region52
      $region51: #{bottleneck_forward.10} parent=35 // pred_region
        _
      $region52: #{bottleneck_forward.10} parent=35 // pred_fallthru
        _
    $region36: #{bottleneck_forward.10} parent=5 // pred_fallthru
      _
    %p1433 = scmp.le.s32.totalorder 2, %s14
    // Predicated region
    $region53: #{bottleneck_forward.10} parent=5 // pred_check
      %p1434 = pneg %p1433
    $region54: #{bottleneck_forward.10} parent=5 // pred_check_branch
      %1436 = sbr.rel (%p1434) target = $region56
    $region55: #{bottleneck_forward.10} parent=5 // pred_region
      %s1437 = ssub.s32 %s14, 2
      // Predicated region
      $region57: #{bottleneck_forward.10} parent=55 // pred_check
        %p1438 = pneg %p137
      $region58: #{bottleneck_forward.10} parent=55 // pred_check_branch
        %1440 = sbr.rel (%p1438) target = $region60
      $region59: #{bottleneck_forward.10} parent=55 // pred_region
        %s1441 = smul.u32 32, %s20
        %p1442 = scmp.lt.s32.totalorder %s1441, 63
        %s1443 = scalar_select %p1442, %s1441, 63
        %s1444 = smul.addr %s1443, 8
        %s1445 = scalar_lea.vmem %s4, %s1444
      $region60: #{bottleneck_forward.10} parent=55 // pred_fallthru
        _
      // Predicated region
      $region61: #{bottleneck_forward.10} parent=55 // pred_check
        %p1446 = pneg %p163
      $region62: #{bottleneck_forward.10} parent=55 // pred_check_branch
        %1448 = sbr.rel (%p1446) target = $region64
      $region63: #{bottleneck_forward.10} parent=55 // pred_region
        %p1449 = scmp.lt.s32.totalorder %s20, 1
        %s1450 = scalar_select %p1449, %s20, 1
        %s1451 = smul.addr %s1450, 2
        %s1452 = scalar_lea.vmem %s5, %s1451
      $region64: #{bottleneck_forward.10} parent=55 // pred_fallthru
        _
      // Predicated region
      $region65: #{bottleneck_forward.10} parent=55 // pred_check
        %p1453 = pneg %p189
      $region66: #{bottleneck_forward.10} parent=55 // pred_check_branch
        %1455 = sbr.rel (%p1453) target = $region68
      $region67: #{bottleneck_forward.10} parent=55 // pred_region
        %s1456 = smul.u32 32, %s20
        %p1457 = scmp.lt.s32.totalorder %s1456, 63
        %s1458 = scalar_select %p1457, %s1456, 63
        %s1459 = smul.addr %s1458, 8
        %s1460 = scalar_lea.vmem %s6, %s1459
      $region68: #{bottleneck_forward.10} parent=55 // pred_fallthru
        _
      // Predicated region
      $region69: #{bottleneck_forward.10} parent=55 // pred_check
        %p1461 = pneg %p215
      $region70: #{bottleneck_forward.10} parent=55 // pred_check_branch
        %1463 = sbr.rel (%p1461) target = $region72
      $region71: #{bottleneck_forward.10} parent=55 // pred_region
        %p1464 = scmp.lt.s32.totalorder %s20, 1
        %s1465 = scalar_select %p1464, %s20, 1
        %s1466 = smul.addr %s1465, 2
        %s1467 = scalar_lea.vmem %s7, %s1466
      $region72: #{bottleneck_forward.10} parent=55 // pred_fallthru
        _
    $region56: #{bottleneck_forward.10} parent=5 // pred_fallthru
      _
  $region6: #{bottleneck_forward.10} parent=0 // loop_footer
    %s18 = sadd.s32 1, %s14
  $region7: #{bottleneck_forward.10} parent=0 // loop_footer_branch
    %13 = sbr.rel target = $region3
  $region8: #{bottleneck_forward.10} parent=0 // loop_exit
    _

</llo_original>
